<compile_context>
chip_gen: v7x
topology: tpu7x:2x2x1
jax: 0.10.0
libtpu: 0.0.40
codegen_flags: <defaults>
</compile_context>

<pallas_src>
import functools

import numpy as np
import jax
import jax.numpy as jnp
from jax.experimental import pallas as pl
from jax.experimental.pallas import tpu as pltpu


# -----------------------------------------------------------------------------
# Static model geometry (padded to 128 lanes everywhere)
# -----------------------------------------------------------------------------
C_PAD = 128          # padded channel / lane width
PATCH_LANES = 32     # stem im2col lanes (27 real taps*channels, padded to 32)
D_ATTN = 32          # logical transformer width
HW1 = 16             # spatial after stem (16x16)
HW2 = 8              # spatial after depthwise s2 conv (8x8)
T1 = HW1 * HW1       # 256 stem tokens
T2 = HW2 * HW2       # 64 transformer tokens


# -----------------------------------------------------------------------------
# Single fused Pallas kernel: one grid step == G images, end to end.
# -----------------------------------------------------------------------------
def _coatnet_kernel(p_ref, g_ref, m_ref, wqkv_ref, v_ref, o_ref):
    f32, bf16 = jnp.float32, jnp.bfloat16
    G = p_ref.shape[0]

    # --- packed per-channel vectors: ONE aligned load, sliced in-vreg --------
    vec = v_ref[...]                       # (24, 128) f32
    wdw    = vec[0:9, :]                   # depthwise 3x3 weights
    stem_b = vec[9:10, :]
    exp_b  = vec[10:11, :]
    dw_b   = vec[11:12, :]
    proj_b = vec[12:13, :]
    bo_f   = vec[13:14, :]                 # attn out bias (Wo / v-bias fold)
    b1_f   = vec[14:15, :]                 # MLP hidden bias (ln2 beta fold)
    b2     = vec[15:16, :]
    head_b = vec[16:17, :]
    cmask  = vec[17:18, :]                 # 1.0 on logical channels, 0.0 on pad

    inv_d = 1.0 / float(D_ATTN)
    scale = inv_d ** 0.5

    def layernorm(z):
        # mean/var over the LOGICAL channel dim only (padded lanes stay zero);
        # gamma/beta are folded into the following weights at init time.
        mu = jnp.sum(z, axis=-1, keepdims=True) * inv_d
        zc = (z - mu) * cmask
        var = jnp.sum(zc * zc, axis=-1, keepdims=True) * inv_d
        return zc * jax.lax.rsqrt(var + 1e-5)

    # --- stem: 3x3 s2 conv as (G*tokens, 32) @ W + GELU, all images at once --
    p = p_ref[...].reshape(G * T1, PATCH_LANES)
    stem = jnp.dot(p, m_ref[0:PATCH_LANES, :], preferred_element_type=f32) + stem_b
    stem = jax.nn.gelu(stem, approximate=True)                  # (G*256, 128)

    # --- MBConv expand 1x1 + GELU --------------------------------------------
    e = jnp.dot(stem.astype(bf16), m_ref[128:256, :],
                preferred_element_type=f32) + exp_b
    e16 = jax.nn.gelu(e, approximate=True).astype(bf16)         # (G*256, 128)

    gmat = g_ref[...]                                           # (576, 256) bf16

    feats = []
    for g in range(G):                                          # static, small
        e_g = e16[g * T1:(g + 1) * T1, :]                       # (256, 128)

        # --- depthwise 3x3 s2: ONE 576-row gather matmul, then scale+sum ----
        taps = jnp.dot(gmat, e_g, preferred_element_type=f32)   # (576, 128)
        dw = jnp.sum(taps.reshape(9, T2, C_PAD) * wdw[:, None, :], axis=0)
        dw = jax.nn.gelu(dw + dw_b, approximate=True)           # (64, 128)

        # --- 1x1 projection to transformer width ----------------------------
        x = jnp.dot(dw.astype(bf16), m_ref[256:384, :],
                    preferred_element_type=f32) + proj_b        # (64, 128)

        # --- pre-LN single-head self-attention + residual -------------------
        # (ln1 gamma and Wo are folded into wqkv at init; ln1 beta / qkv
        #  biases are zero in this synthetic init.)
        xn = layernorm(x)
        qkv = jnp.dot(xn.astype(bf16), wqkv_ref[...],
                      preferred_element_type=f32)               # (64, 384)
        q, k, v = qkv[:, 0:128], qkv[:, 128:256], qkv[:, 256:384]
        s = jax.lax.dot_general(q.astype(bf16), k.astype(bf16),
                                (((1,), (1,)), ((), ())),
                                preferred_element_type=f32) * scale
        s = s - jnp.max(s, axis=-1, keepdims=True)
        pr = jnp.exp(s)
        pr = pr * pl.reciprocal(jnp.sum(pr, axis=-1, keepdims=True), approx=True)
        attn = jnp.dot(pr.astype(bf16), v.astype(bf16),
                       preferred_element_type=f32) + bo_f
        x = x + attn

        # --- pre-LN MLP + residual (ln2 gamma folded into w1 at init) -------
        xn = layernorm(x)
        h = jax.nn.gelu(jnp.dot(xn.astype(bf16), m_ref[384:512, :],
                                preferred_element_type=f32) + b1_f,
                        approximate=True)
        x = x + jnp.dot(h.astype(bf16), m_ref[512:640, :],
                        preferred_element_type=f32) + b2

        # --- global average pool over tokens ---------------------------------
        feats.append(jnp.mean(x, axis=0, keepdims=True))        # (1, 128)

    feats = jnp.concatenate(feats, axis=0) if G > 1 else feats[0]   # (G, 128)

    # --- model.head.fc = Identity(); self.linear(x) ---------------------------
    logits = jnp.dot(feats.astype(bf16), m_ref[640:768, :],
                     preferred_element_type=f32) + head_b       # (G, 128)
    o_ref[...] = logits.reshape(G, 1, C_PAD)


# -----------------------------------------------------------------------------
# Layout glue (no compute): stem im2col + constant dw gather matrix
# -----------------------------------------------------------------------------
def extract_patches(x, ksize, stride, pad):
    """NHWC -> (B, Ho, Wo, ksize*ksize, C)."""
    x = jnp.pad(x, ((0, 0), (pad, pad), (pad, pad), (0, 0)))
    B, H, W, C = x.shape
    Ho = (H - ksize) // stride + 1
    Wo = (W - ksize) // stride + 1
    taps = []
    for i in range(ksize):
        for j in range(ksize):
            taps.append(x[:, i:i + Ho * stride:stride, j:j + Wo * stride:stride, :])
    return jnp.stack(taps, axis=3)


def build_dw_gather():
    """(9*64, 256) 0/1 matrix: tap t of the 3x3 s2 dw conv over a 16x16 map."""
    g = np.zeros((9 * T2, T1), np.float32)
    for t in range(9):
        ti, tj = t // 3, t % 3
        for ho in range(HW2):
            for wo in range(HW2):
                r = 2 * ho + ti - 1
                c = 2 * wo + tj - 1
                if 0 <= r < HW1 and 0 <= c < HW1:
                    g[t * T2 + ho * HW2 + wo, r * HW1 + c] = 1.0
    return jnp.asarray(g, jnp.bfloat16)


# -----------------------------------------------------------------------------
# Parameters (deterministic synthetic init; zero-padded, fused & packed at init)
# -----------------------------------------------------------------------------
def init_params(key, num_classes, c_stem=16, c_mb=32, d_attn=D_ATTN, mlp_hidden=128):
    ks = jax.random.split(key, 12)
    w = lambda k, shape, s=0.05: jax.random.normal(k, shape, jnp.float32) * s

    def pad2(a):
        return jnp.pad(a, ((0, C_PAD - a.shape[0]), (0, C_PAD - a.shape[1])))

    stem_w = pad2(w(ks[0], (27, c_stem)))            # 3x3x3 -> 16 (rows 0:32 used)
    exp_w  = pad2(w(ks[1], (c_stem, c_mb)))          # 1x1 expand
    proj_w = pad2(w(ks[3], (c_mb, d_attn)))          # 1x1 project

    # Attention: fold ln1 gamma into Wq/Wk/Wv and fold Wo into Wv (Wv' = Wv@Wo).
    # TODO(synk): ln1 beta / qkv biases are zero here; a nonzero ln1 beta would
    # also require a per-column score offset for Q that is not modeled.
    ln1_g = jnp.ones((d_attn,), jnp.float32)
    ln2_g = jnp.ones((d_attn,), jnp.float32)
    wq = w(ks[4], (d_attn, d_attn))
    wk = w(ks[5], (d_attn, d_attn))
    wv = w(ks[6], (d_attn, d_attn))
    wo = w(ks[7], (d_attn, d_attn))
    wqkv = jnp.concatenate([pad2(ln1_g[:, None] * wq),
                            pad2(ln1_g[:, None] * wk),
                            pad2(ln1_g[:, None] * (wv @ wo))],
                           axis=1).astype(jnp.bfloat16)          # (128, 384)

    w1 = ln2_g[:, None] * w(ks[8], (d_attn, mlp_hidden))         # ln2 gamma fold
    w2 = w(ks[9], (mlp_hidden, d_attn))
    head_w = pad2(w(ks[10], (d_attn, num_classes)))              # self.linear

    mats = jnp.concatenate([stem_w, exp_w, proj_w, pad2(w1), pad2(w2), head_w],
                           axis=0).astype(jnp.bfloat16)          # (768, 128)

    wdw = jnp.pad(w(ks[2], (9, c_mb)), ((0, 0), (0, C_PAD - c_mb)))  # (9, 128)
    zrow = jnp.zeros((1, C_PAD), jnp.float32)
    ones_d = jnp.pad(jnp.ones((1, d_attn), jnp.float32),
                     ((0, 0), (0, C_PAD - d_attn)))
    vecs = jnp.concatenate(
        [wdw,                      # rows 0:9   depthwise weights
         zrow, zrow, zrow, zrow,   # 9..12      stem_b, exp_b, dw_b, proj_b
         zrow,                     # 13         bo_f (attn out bias, folds = 0)
         zrow,                     # 14         b1_f (mlp hidden bias, folds = 0)
         zrow,                     # 15         b2
         zrow,                     # 16         head bias
         ones_d,                   # 17         channel mask (logical lanes)
         zrow, zrow, zrow,         # 18..20     padding
         zrow, zrow, zrow],        # 21..23     padding
        axis=0)                    # (24, 128) f32

    return {"mats": mats, "wqkv": wqkv, "vecs": vecs, "gather": build_dw_gather()}


# -----------------------------------------------------------------------------
# Forward pass: one fused pallas_call, grid over image groups (parallel)
# -----------------------------------------------------------------------------
def coatnet_forward(params, x_nchw, num_classes):
    x = jnp.transpose(x_nchw, (0, 2, 3, 1)).astype(jnp.float32)    # NCHW -> NHWC
    B = x.shape[0]

    # images per grid step: amortize per-step overhead, but keep >= 2 grid
    # steps so both v7x TensorCores receive work. B=2 -> G=1, grid=(2,).
    G = 1
    for cand in (8, 4, 2):
        if B % cand == 0 and B // cand >= 2:
            G = cand
            break
    n_steps = B // G

    # lane-compact stem im2col: (B, 256, 27) padded only to 32 lanes, bf16
    p = extract_patches(x, 3, 2, 1).reshape(B, T1, 27)
    p = jnp.pad(p, ((0, 0), (0, 0), (0, PATCH_LANES - 27))).astype(jnp.bfloat16)

    logits = pl.pallas_call(
        _coatnet_kernel,
        out_shape=jax.ShapeDtypeStruct((B, 1, C_PAD), jnp.float32),
        grid=(n_steps,),
        in_specs=[
            pl.BlockSpec((G, T1, PATCH_LANES), lambda b: (b, 0, 0)),  # stem patches
            pl.BlockSpec((9 * T2, T1), lambda b: (0, 0)),             # dw gather mat
            pl.BlockSpec((6 * C_PAD, C_PAD), lambda b: (0, 0)),       # packed matrices
            pl.BlockSpec((C_PAD, 3 * C_PAD), lambda b: (0, 0)),       # fused QKV weight
            pl.BlockSpec((24, C_PAD), lambda b: (0, 0)),              # packed vectors
        ],
        out_specs=pl.BlockSpec((G, 1, C_PAD), lambda b: (b, 0, 0)),
        compiler_params=pltpu.CompilerParams(dimension_semantics=("parallel",)),
    )(p, params["gather"], params["mats"], params["wqkv"], params["vecs"])

    return logits.reshape(B, C_PAD)[:, :num_classes]


# -----------------------------------------------------------------------------
# Main
# -----------------------------------------------------------------------------
if __name__ == "__main__":
    num_classes = 10
    key = jax.random.PRNGKey(0)
    k_x, k_p = jax.random.split(key)

    # small image batch, PyTorch NCHW convention
    x = jax.random.normal(k_x, (2, 3, 32, 32), jnp.float32)
    params = init_params(k_p, num_classes)

    fwd = jax.jit(functools.partial(coatnet_forward, num_classes=num_classes))
    out = fwd(params, x)
    out = jax.block_until_ready(out)
    assert out.shape == (2, num_classes), out.shape
    assert bool(jnp.all(jnp.isfinite(out)))
    print("KERNEL_OK")
</pallas_src>

<mosaic_0001>
module attributes {stable_mosaic.version = 11 : i64} {
  func.func @_coatnet_kernel(%arg0: i32, %arg1: memref<1x256x32xbf16, #tpu.memory_space<vmem>>, %arg2: memref<576x256xbf16, #tpu.memory_space<vmem>>, %arg3: memref<768x128xbf16, #tpu.memory_space<vmem>>, %arg4: memref<128x384xbf16, #tpu.memory_space<vmem>>, %arg5: memref<24x128xf32, #tpu.memory_space<vmem>>, %arg6: memref<1x1x128xf32, #tpu.memory_space<vmem>>) attributes {dimension_semantics = [#tpu.dimension_semantics<parallel>], iteration_bounds = array<i64: 2>, scalar_prefetch = 0 : i64, scratch_operands = 0 : i64, tpu.core_type = #tpu.core_type<tc>, window_params = [{transform_indices = @transform_0, window_bounds = array<i64: 1, 256, 32>}, {pipeline_mode = #tpu.pipeline_mode<synchronous>, transform_indices = @transform_1, window_bounds = array<i64: 576, 256>}, {pipeline_mode = #tpu.pipeline_mode<synchronous>, transform_indices = @transform_2, window_bounds = array<i64: 768, 128>}, {pipeline_mode = #tpu.pipeline_mode<synchronous>, transform_indices = @transform_3, window_bounds = array<i64: 128, 384>}, {pipeline_mode = #tpu.pipeline_mode<synchronous>, transform_indices = @transform_4, window_bounds = array<i64: 24, 128>}, {transform_indices = @transform_5, window_bounds = array<i64: 1, 1, 128>}]} {
    %c0 = arith.constant 0 : index
    %c0_0 = arith.constant 0 : index
    %0 = vector.load %arg5[%c0, %c0_0] : memref<24x128xf32, #tpu.memory_space<vmem>>, vector<24x128xf32>
    %1 = vector.extract_strided_slice %0 {offsets = [0, 0], sizes = [9, 128], strides = [1, 1]} : vector<24x128xf32> to vector<9x128xf32>
    %2 = vector.extract_strided_slice %0 {offsets = [9, 0], sizes = [1, 128], strides = [1, 1]} : vector<24x128xf32> to vector<1x128xf32>
    %3 = vector.extract_strided_slice %0 {offsets = [10, 0], sizes = [1, 128], strides = [1, 1]} : vector<24x128xf32> to vector<1x128xf32>
    %4 = vector.extract_strided_slice %0 {offsets = [11, 0], sizes = [1, 128], strides = [1, 1]} : vector<24x128xf32> to vector<1x128xf32>
    %5 = vector.extract_strided_slice %0 {offsets = [12, 0], sizes = [1, 128], strides = [1, 1]} : vector<24x128xf32> to vector<1x128xf32>
    %6 = vector.extract_strided_slice %0 {offsets = [13, 0], sizes = [1, 128], strides = [1, 1]} : vector<24x128xf32> to vector<1x128xf32>
    %7 = vector.extract_strided_slice %0 {offsets = [14, 0], sizes = [1, 128], strides = [1, 1]} : vector<24x128xf32> to vector<1x128xf32>
    %8 = vector.extract_strided_slice %0 {offsets = [15, 0], sizes = [1, 128], strides = [1, 1]} : vector<24x128xf32> to vector<1x128xf32>
    %9 = vector.extract_strided_slice %0 {offsets = [16, 0], sizes = [1, 128], strides = [1, 1]} : vector<24x128xf32> to vector<1x128xf32>
    %10 = vector.extract_strided_slice %0 {offsets = [17, 0], sizes = [1, 128], strides = [1, 1]} : vector<24x128xf32> to vector<1x128xf32>
    %c0_1 = arith.constant 0 : index
    %c0_2 = arith.constant 0 : index
    %c0_3 = arith.constant 0 : index
    %11 = vector.load %arg1[%c0_1, %c0_2, %c0_3] : memref<1x256x32xbf16, #tpu.memory_space<vmem>>, vector<1x256x32xbf16>
    %12 = vector.shape_cast %11 : vector<1x256x32xbf16> to vector<256x32xbf16>
    %c0_4 = arith.constant 0 : index
    %c0_5 = arith.constant 0 : index
    %13 = vector.load %arg3[%c0_4, %c0_5] : memref<768x128xbf16, #tpu.memory_space<vmem>>, vector<32x128xbf16>
    %cst = arith.constant dense<0.000000e+00> : vector<256x128xf32>
    %14 = tpu.matmul %12, %13, %cst {dimension_numbers = #tpu.dot_dimension_numbers<[1], [0], [0], [1], [0, 0, 1, 1], [], []>} : vector<256x32xbf16>, vector<32x128xbf16>, vector<256x128xf32> -> vector<256x128xf32>
    %15 = vector.broadcast %2 : vector<1x128xf32> to vector<256x128xf32>
    %16 = arith.addf %14, %15 : vector<256x128xf32>
    %17 = arith.mulf %16, %16 : vector<256x128xf32>
    %18 = arith.mulf %16, %17 : vector<256x128xf32>
    %cst_6 = arith.constant 4.471500e-02 : f32
    %19 = vector.broadcast %cst_6 : f32 to vector<256x128xf32>
    %20 = arith.mulf %19, %18 : vector<256x128xf32>
    %21 = arith.addf %16, %20 : vector<256x128xf32>
    %cst_7 = arith.constant 0.797884583 : f32
    %22 = vector.broadcast %cst_7 : f32 to vector<256x128xf32>
    %23 = arith.mulf %22, %21 : vector<256x128xf32>
    %24 = math.tanh %23 : vector<256x128xf32>
    %cst_8 = arith.constant 1.000000e+00 : f32
    %25 = vector.broadcast %cst_8 : f32 to vector<256x128xf32>
    %26 = arith.addf %25, %24 : vector<256x128xf32>
    %cst_9 = arith.constant 5.000000e-01 : f32
    %27 = vector.broadcast %cst_9 : f32 to vector<256x128xf32>
    %28 = arith.mulf %27, %26 : vector<256x128xf32>
    %29 = arith.mulf %16, %28 : vector<256x128xf32>
    %30 = arith.truncf %29 : vector<256x128xf32> to vector<256x128xbf16>
    %c128 = arith.constant 128 : index
    %c0_10 = arith.constant 0 : index
    %31 = vector.load %arg3[%c128, %c0_10] : memref<768x128xbf16, #tpu.memory_space<vmem>>, vector<128x128xbf16>
    %cst_11 = arith.constant dense<0.000000e+00> : vector<256x128xf32>
    %32 = tpu.matmul %30, %31, %cst_11 {dimension_numbers = #tpu.dot_dimension_numbers<[1], [0], [0], [1], [0, 0, 1, 1], [], []>} : vector<256x128xbf16>, vector<128x128xbf16>, vector<256x128xf32> -> vector<256x128xf32>
    %33 = vector.broadcast %3 : vector<1x128xf32> to vector<256x128xf32>
    %34 = arith.addf %32, %33 : vector<256x128xf32>
    %35 = arith.mulf %34, %34 : vector<256x128xf32>
    %36 = arith.mulf %34, %35 : vector<256x128xf32>
    %cst_12 = arith.constant 4.471500e-02 : f32
    %37 = vector.broadcast %cst_12 : f32 to vector<256x128xf32>
    %38 = arith.mulf %37, %36 : vector<256x128xf32>
    %39 = arith.addf %34, %38 : vector<256x128xf32>
    %cst_13 = arith.constant 0.797884583 : f32
    %40 = vector.broadcast %cst_13 : f32 to vector<256x128xf32>
    %41 = arith.mulf %40, %39 : vector<256x128xf32>
    %42 = math.tanh %41 : vector<256x128xf32>
    %cst_14 = arith.constant 1.000000e+00 : f32
    %43 = vector.broadcast %cst_14 : f32 to vector<256x128xf32>
    %44 = arith.addf %43, %42 : vector<256x128xf32>
    %cst_15 = arith.constant 5.000000e-01 : f32
    %45 = vector.broadcast %cst_15 : f32 to vector<256x128xf32>
    %46 = arith.mulf %45, %44 : vector<256x128xf32>
    %47 = arith.mulf %34, %46 : vector<256x128xf32>
    %48 = arith.truncf %47 : vector<256x128xf32> to vector<256x128xbf16>
    %c0_16 = arith.constant 0 : index
    %c0_17 = arith.constant 0 : index
    %49 = vector.load %arg2[%c0_16, %c0_17] : memref<576x256xbf16, #tpu.memory_space<vmem>>, vector<576x256xbf16>
    %cst_18 = arith.constant dense<0.000000e+00> : vector<576x128xf32>
    %50 = tpu.matmul %49, %48, %cst_18 {dimension_numbers = #tpu.dot_dimension_numbers<[1], [0], [0], [1], [0, 0, 1, 1], [], []>} : vector<576x256xbf16>, vector<256x128xbf16>, vector<576x128xf32> -> vector<576x128xf32>
    %51 = vector.shape_cast %50 : vector<576x128xf32> to vector<9x64x128xf32>
    %52 = vector.shape_cast %1 : vector<9x128xf32> to vector<9x1x128xf32>
    %53 = vector.broadcast %52 : vector<9x1x128xf32> to vector<9x64x128xf32>
    %54 = arith.mulf %51, %53 : vector<9x64x128xf32>
    %cst_19 = arith.constant dense<0.000000e+00> : vector<64x128xf32>
    %55 = vector.multi_reduction <add>, %54, %cst_19 [0] : vector<9x64x128xf32> to vector<64x128xf32>
    %56 = vector.broadcast %4 : vector<1x128xf32> to vector<64x128xf32>
    %57 = arith.addf %55, %56 : vector<64x128xf32>
    %58 = arith.mulf %57, %57 : vector<64x128xf32>
    %59 = arith.mulf %57, %58 : vector<64x128xf32>
    %cst_20 = arith.constant 4.471500e-02 : f32
    %60 = vector.broadcast %cst_20 : f32 to vector<64x128xf32>
    %61 = arith.mulf %60, %59 : vector<64x128xf32>
    %62 = arith.addf %57, %61 : vector<64x128xf32>
    %cst_21 = arith.constant 0.797884583 : f32
    %63 = vector.broadcast %cst_21 : f32 to vector<64x128xf32>
    %64 = arith.mulf %63, %62 : vector<64x128xf32>
    %65 = math.tanh %64 : vector<64x128xf32>
    %cst_22 = arith.constant 1.000000e+00 : f32
    %66 = vector.broadcast %cst_22 : f32 to vector<64x128xf32>
    %67 = arith.addf %66, %65 : vector<64x128xf32>
    %cst_23 = arith.constant 5.000000e-01 : f32
    %68 = vector.broadcast %cst_23 : f32 to vector<64x128xf32>
    %69 = arith.mulf %68, %67 : vector<64x128xf32>
    %70 = arith.mulf %57, %69 : vector<64x128xf32>
    %71 = arith.truncf %70 : vector<64x128xf32> to vector<64x128xbf16>
    %c256 = arith.constant 256 : index
    %c0_24 = arith.constant 0 : index
    %72 = vector.load %arg3[%c256, %c0_24] : memref<768x128xbf16, #tpu.memory_space<vmem>>, vector<128x128xbf16>
    %cst_25 = arith.constant dense<0.000000e+00> : vector<64x128xf32>
    %73 = tpu.matmul %71, %72, %cst_25 {dimension_numbers = #tpu.dot_dimension_numbers<[1], [0], [0], [1], [0, 0, 1, 1], [], []>} : vector<64x128xbf16>, vector<128x128xbf16>, vector<64x128xf32> -> vector<64x128xf32>
    %74 = vector.broadcast %5 : vector<1x128xf32> to vector<64x128xf32>
    %75 = arith.addf %73, %74 : vector<64x128xf32>
    %cst_26 = arith.constant dense<0.000000e+00> : vector<64xf32>
    %76 = vector.multi_reduction <add>, %75, %cst_26 [1] : vector<64x128xf32> to vector<64xf32>
    %77 = vector.shape_cast %76 : vector<64xf32> to vector<64x1xf32>
    %cst_27 = arith.constant 3.125000e-02 : f32
    %78 = vector.broadcast %cst_27 : f32 to vector<64x1xf32>
    %79 = arith.mulf %77, %78 : vector<64x1xf32>
    %80 = vector.broadcast %79 : vector<64x1xf32> to vector<64x128xf32>
    %81 = arith.subf %75, %80 : vector<64x128xf32>
    %82 = vector.broadcast %10 : vector<1x128xf32> to vector<64x128xf32>
    %83 = arith.mulf %81, %82 : vector<64x128xf32>
    %84 = arith.mulf %83, %83 : vector<64x128xf32>
    %cst_28 = arith.constant dense<0.000000e+00> : vector<64xf32>
    %85 = vector.multi_reduction <add>, %84, %cst_28 [1] : vector<64x128xf32> to vector<64xf32>
    %86 = vector.shape_cast %85 : vector<64xf32> to vector<64x1xf32>
    %cst_29 = arith.constant 3.125000e-02 : f32
    %87 = vector.broadcast %cst_29 : f32 to vector<64x1xf32>
    %88 = arith.mulf %86, %87 : vector<64x1xf32>
    %cst_30 = arith.constant 9.99999974E-6 : f32
    %89 = vector.broadcast %cst_30 : f32 to vector<64x1xf32>
    %90 = arith.addf %88, %89 : vector<64x1xf32>
    %91 = math.rsqrt %90 : vector<64x1xf32>
    %92 = vector.broadcast %91 : vector<64x1xf32> to vector<64x128xf32>
    %93 = arith.mulf %83, %92 : vector<64x128xf32>
    %94 = arith.truncf %93 : vector<64x128xf32> to vector<64x128xbf16>
    %c0_31 = arith.constant 0 : index
    %c0_32 = arith.constant 0 : index
    %95 = vector.load %arg4[%c0_31, %c0_32] : memref<128x384xbf16, #tpu.memory_space<vmem>>, vector<128x384xbf16>
    %cst_33 = arith.constant dense<0.000000e+00> : vector<64x384xf32>
    %96 = tpu.matmul %94, %95, %cst_33 {dimension_numbers = #tpu.dot_dimension_numbers<[1], [0], [0], [1], [0, 0, 1, 1], [], []>} : vector<64x128xbf16>, vector<128x384xbf16>, vector<64x384xf32> -> vector<64x384xf32>
    %97 = vector.extract_strided_slice %96 {offsets = [0, 0], sizes = [64, 128], strides = [1, 1]} : vector<64x384xf32> to vector<64x128xf32>
    %98 = vector.extract_strided_slice %96 {offsets = [0, 128], sizes = [64, 128], strides = [1, 1]} : vector<64x384xf32> to vector<64x128xf32>
    %99 = vector.extract_strided_slice %96 {offsets = [0, 256], sizes = [64, 128], strides = [1, 1]} : vector<64x384xf32> to vector<64x128xf32>
    %100 = arith.truncf %97 : vector<64x128xf32> to vector<64x128xbf16>
    %101 = arith.truncf %98 : vector<64x128xf32> to vector<64x128xbf16>
    %cst_34 = arith.constant dense<0.000000e+00> : vector<64x64xf32>
    %102 = tpu.matmul %100, %101, %cst_34 {dimension_numbers = #tpu.dot_dimension_numbers<[1], [1], [0], [0], [0, 0, 1, 0], [], []>} : vector<64x128xbf16>, vector<64x128xbf16>, vector<64x64xf32> -> vector<64x64xf32>
    %cst_35 = arith.constant 0.176776692 : f32
    %103 = vector.broadcast %cst_35 : f32 to vector<64x64xf32>
    %104 = arith.mulf %102, %103 : vector<64x64xf32>
    %cst_36 = arith.constant dense<0xFF800000> : vector<64xf32>
    %105 = vector.multi_reduction <maximumf>, %104, %cst_36 [1] : vector<64x64xf32> to vector<64xf32>
    %106 = vector.shape_cast %105 : vector<64xf32> to vector<64x1xf32>
    %107 = vector.broadcast %106 : vector<64x1xf32> to vector<64x64xf32>
    %108 = arith.subf %104, %107 : vector<64x64xf32>
    %109 = math.exp %108 : vector<64x64xf32>
    %cst_37 = arith.constant dense<0.000000e+00> : vector<64xf32>
    %110 = vector.multi_reduction <add>, %109, %cst_37 [1] : vector<64x64xf32> to vector<64xf32>
    %111 = vector.shape_cast %110 : vector<64xf32> to vector<64x1xf32>
    %112 = tpu.reciprocal %111 {approx = true} : vector<64x1xf32> -> vector<64x1xf32>
    %113 = vector.broadcast %112 : vector<64x1xf32> to vector<64x64xf32>
    %114 = arith.mulf %109, %113 : vector<64x64xf32>
    %115 = arith.truncf %114 : vector<64x64xf32> to vector<64x64xbf16>
    %116 = arith.truncf %99 : vector<64x128xf32> to vector<64x128xbf16>
    %cst_38 = arith.constant dense<0.000000e+00> : vector<64x128xf32>
    %117 = tpu.matmul %115, %116, %cst_38 {dimension_numbers = #tpu.dot_dimension_numbers<[1], [0], [0], [1], [0, 0, 1, 1], [], []>} : vector<64x64xbf16>, vector<64x128xbf16>, vector<64x128xf32> -> vector<64x128xf32>
    %118 = vector.broadcast %6 : vector<1x128xf32> to vector<64x128xf32>
    %119 = arith.addf %117, %118 : vector<64x128xf32>
    %120 = arith.addf %75, %119 : vector<64x128xf32>
    %cst_39 = arith.constant dense<0.000000e+00> : vector<64xf32>
    %121 = vector.multi_reduction <add>, %120, %cst_39 [1] : vector<64x128xf32> to vector<64xf32>
    %122 = vector.shape_cast %121 : vector<64xf32> to vector<64x1xf32>
    %cst_40 = arith.constant 3.125000e-02 : f32
    %123 = vector.broadcast %cst_40 : f32 to vector<64x1xf32>
    %124 = arith.mulf %122, %123 : vector<64x1xf32>
    %125 = vector.broadcast %124 : vector<64x1xf32> to vector<64x128xf32>
    %126 = arith.subf %120, %125 : vector<64x128xf32>
    %127 = vector.broadcast %10 : vector<1x128xf32> to vector<64x128xf32>
    %128 = arith.mulf %126, %127 : vector<64x128xf32>
    %129 = arith.mulf %128, %128 : vector<64x128xf32>
    %cst_41 = arith.constant dense<0.000000e+00> : vector<64xf32>
    %130 = vector.multi_reduction <add>, %129, %cst_41 [1] : vector<64x128xf32> to vector<64xf32>
    %131 = vector.shape_cast %130 : vector<64xf32> to vector<64x1xf32>
    %cst_42 = arith.constant 3.125000e-02 : f32
    %132 = vector.broadcast %cst_42 : f32 to vector<64x1xf32>
    %133 = arith.mulf %131, %132 : vector<64x1xf32>
    %cst_43 = arith.constant 9.99999974E-6 : f32
    %134 = vector.broadcast %cst_43 : f32 to vector<64x1xf32>
    %135 = arith.addf %133, %134 : vector<64x1xf32>
    %136 = math.rsqrt %135 : vector<64x1xf32>
    %137 = vector.broadcast %136 : vector<64x1xf32> to vector<64x128xf32>
    %138 = arith.mulf %128, %137 : vector<64x128xf32>
    %139 = arith.truncf %138 : vector<64x128xf32> to vector<64x128xbf16>
    %c384 = arith.constant 384 : index
    %c0_44 = arith.constant 0 : index
    %140 = vector.load %arg3[%c384, %c0_44] : memref<768x128xbf16, #tpu.memory_space<vmem>>, vector<128x128xbf16>
    %cst_45 = arith.constant dense<0.000000e+00> : vector<64x128xf32>
    %141 = tpu.matmul %139, %140, %cst_45 {dimension_numbers = #tpu.dot_dimension_numbers<[1], [0], [0], [1], [0, 0, 1, 1], [], []>} : vector<64x128xbf16>, vector<128x128xbf16>, vector<64x128xf32> -> vector<64x128xf32>
    %142 = vector.broadcast %7 : vector<1x128xf32> to vector<64x128xf32>
    %143 = arith.addf %141, %142 : vector<64x128xf32>
    %144 = arith.mulf %143, %143 : vector<64x128xf32>
    %145 = arith.mulf %143, %144 : vector<64x128xf32>
    %cst_46 = arith.constant 4.471500e-02 : f32
    %146 = vector.broadcast %cst_46 : f32 to vector<64x128xf32>
    %147 = arith.mulf %146, %145 : vector<64x128xf32>
    %148 = arith.addf %143, %147 : vector<64x128xf32>
    %cst_47 = arith.constant 0.797884583 : f32
    %149 = vector.broadcast %cst_47 : f32 to vector<64x128xf32>
    %150 = arith.mulf %149, %148 : vector<64x128xf32>
    %151 = math.tanh %150 : vector<64x128xf32>
    %cst_48 = arith.constant 1.000000e+00 : f32
    %152 = vector.broadcast %cst_48 : f32 to vector<64x128xf32>
    %153 = arith.addf %152, %151 : vector<64x128xf32>
    %cst_49 = arith.constant 5.000000e-01 : f32
    %154 = vector.broadcast %cst_49 : f32 to vector<64x128xf32>
    %155 = arith.mulf %154, %153 : vector<64x128xf32>
    %156 = arith.mulf %143, %155 : vector<64x128xf32>
    %157 = arith.truncf %156 : vector<64x128xf32> to vector<64x128xbf16>
    %c512 = arith.constant 512 : index
    %c0_50 = arith.constant 0 : index
    %158 = vector.load %arg3[%c512, %c0_50] : memref<768x128xbf16, #tpu.memory_space<vmem>>, vector<128x128xbf16>
    %cst_51 = arith.constant dense<0.000000e+00> : vector<64x128xf32>
    %159 = tpu.matmul %157, %158, %cst_51 {dimension_numbers = #tpu.dot_dimension_numbers<[1], [0], [0], [1], [0, 0, 1, 1], [], []>} : vector<64x128xbf16>, vector<128x128xbf16>, vector<64x128xf32> -> vector<64x128xf32>
    %160 = arith.addf %120, %159 : vector<64x128xf32>
    %161 = vector.broadcast %8 : vector<1x128xf32> to vector<64x128xf32>
    %162 = arith.addf %160, %161 : vector<64x128xf32>
    %cst_52 = arith.constant dense<0.000000e+00> : vector<128xf32>
    %163 = vector.multi_reduction <add>, %162, %cst_52 [0] : vector<64x128xf32> to vector<128xf32>
    %164 = vector.shape_cast %163 : vector<128xf32> to vector<1x128xf32>
    %cst_53 = arith.constant 6.400000e+01 : f32
    %165 = vector.broadcast %cst_53 : f32 to vector<1x128xf32>
    %166 = arith.divf %164, %165 : vector<1x128xf32>
    %167 = arith.truncf %166 : vector<1x128xf32> to vector<1x128xbf16>
    %c640 = arith.constant 640 : index
    %c0_54 = arith.constant 0 : index
    %168 = vector.load %arg3[%c640, %c0_54] : memref<768x128xbf16, #tpu.memory_space<vmem>>, vector<128x128xbf16>
    %cst_55 = arith.constant dense<0.000000e+00> : vector<1x128xf32>
    %169 = tpu.matmul %167, %168, %cst_55 {dimension_numbers = #tpu.dot_dimension_numbers<[1], [0], [0], [1], [0, 0, 1, 1], [], []>} : vector<1x128xbf16>, vector<128x128xbf16>, vector<1x128xf32> -> vector<1x128xf32>
    %170 = arith.addf %169, %9 : vector<1x128xf32>
    %171 = vector.shape_cast %170 : vector<1x128xf32> to vector<1x1x128xf32>
    %c0_56 = arith.constant 0 : index
    %c0_57 = arith.constant 0 : index
    %c0_58 = arith.constant 0 : index
    %172 = vector.load %arg6[%c0_56, %c0_57, %c0_58] : memref<1x1x128xf32, #tpu.memory_space<vmem>>, vector<1x1x128xf32>
    tpu.vector_store %arg6[%c0_56, %c0_57, %c0_58], %171 {strides = array<i32>} : memref<1x1x128xf32, #tpu.memory_space<vmem>>, vector<1x1x128xf32>,
    return
  }
  func.func @transform_0(%arg0: i32) -> (i32, i32, i32) {
    %c0_i32 = arith.constant 0 : i32
    %c0_i32_0 = arith.constant 0 : i32
    %c0_i32_1 = arith.constant 0 : i32
    return %arg0, %c0_i32, %c0_i32_0 : i32, i32, i32
  }
  func.func @transform_1(%arg0: i32) -> (i32, i32) {
    %c0_i32 = arith.constant 0 : i32
    %c0_i32_0 = arith.constant 0 : i32
    %c0_i32_1 = arith.constant 0 : i32
    return %c0_i32, %c0_i32_0 : i32, i32
  }
  func.func @transform_2(%arg0: i32) -> (i32, i32) {
    %c0_i32 = arith.constant 0 : i32
    %c0_i32_0 = arith.constant 0 : i32
    %c0_i32_1 = arith.constant 0 : i32
    return %c0_i32, %c0_i32_0 : i32, i32
  }
  func.func @transform_3(%arg0: i32) -> (i32, i32) {
    %c0_i32 = arith.constant 0 : i32
    %c0_i32_0 = arith.constant 0 : i32
    %c0_i32_1 = arith.constant 0 : i32
    return %c0_i32, %c0_i32_0 : i32, i32
  }
  func.func @transform_4(%arg0: i32) -> (i32, i32) {
    %c0_i32 = arith.constant 0 : i32
    %c0_i32_0 = arith.constant 0 : i32
    %c0_i32_1 = arith.constant 0 : i32
    return %c0_i32, %c0_i32_0 : i32, i32
  }
  func.func @transform_5(%arg0: i32) -> (i32, i32, i32) {
    %c0_i32 = arith.constant 0 : i32
    %c0_i32_0 = arith.constant 0 : i32
    %c0_i32_1 = arith.constant 0 : i32
    return %arg0, %c0_i32, %c0_i32_0 : i32, i32, i32
  }
}

</mosaic_0001>

<llo_original>
// kernel: coatnet_forward.1
$region0: #{coatnet_forward.1}
  #allocation0 [shape = 'u32[]', space=smem, size = 0x4, offset = 0x4, fixed_abs, tag = 'smem constant byte address 0x4 - core index']
  #allocation1 [shape = 'u32[144,128]{1,0:T(1,128)}', space=vmem, size = 0x12000, scoped, tag = 'internal scratch']
  %s0 = inlined_call_operand.vmem [shape: bf16[2,256,32], index: 0, kind: input, shape index: {}]
  %s1 = inlined_call_operand.vmem [shape: bf16[576,256], index: 1, kind: input, shape index: {}]
  %s2 = inlined_call_operand.vmem [shape: bf16[768,128], index: 2, kind: input, shape index: {}]
  %s3 = inlined_call_operand.vmem [shape: bf16[128,384], index: 3, kind: input, shape index: {}]
  %s4 = inlined_call_operand.vmem [shape: f32[24,128], index: 4, kind: input, shape index: {}]
  %s5 = inlined_call_operand.hbm [shape: f32[2,1,128], index: 5, kind: output, shape index: {}]
  %s6 = sld [smem:[#allocation0]]
  $region53: #{coatnet_forward.1} parent=0
    _
  %s8 = ssub.s32 1, %s6
  %s9 = scalar_select 0, %s8, %s6
  $region1: #{coatnet_forward.1} parent=0
    #allocation2 [shape = 'u8[1024]{0}', space=vmem, size = 0x400, scoped, tag = 'output window, operand 0']
    #allocation3 [shape = 's32[2]{0}', space=sflag, size = 0x8, scoped, tag = 'scoped memory for coatnet_forward.1']
    %10 = vsyncpa [#allocation3], 0
    %s11 = scalar_lea.sflag [#allocation3], 1
    %12 = vsyncpa %s11, 0
    loop: start=0, step=1, limit=4
    $region2: #{coatnet_forward.1} parent=1 // loop_pre_header
      _
    $region3: #{coatnet_forward.1} parent=1 // loop_header
      %s14 = sphi 0, %s18
      %p15 = scmp.ge.s32.totalorder %s14, 4
      %s24 = sphi 0, %s26
      %s27 = sphi 0, %s24
      %s28 = sphi 0, %s27
      %s44 = sphi 0, %s28
      %s48 = sphi 0, %s48
      %s50 = sphi 0, %s48
      %s51 = sphi 0, %s50
      %s65 = sphi 0, %s51
      %s69 = sphi 0, %s69
      %s71 = sphi 0, %s69
      %s72 = sphi 0, %s71
      %s86 = sphi 0, %s72
      %s90 = sphi 0, %s90
      %s92 = sphi 0, %s90
      %s93 = sphi 0, %s92
      %s107 = sphi 0, %s93
      %s111 = sphi 0, %s111
      %s113 = sphi 0, %s111
      %s114 = sphi 0, %s113
      %s128 = sphi 0, %s114
      %s134 = sphi 0, %s136
      %s137 = sphi 0, %s134
      %s138 = sphi 0, %s137
      %s154 = sphi 0, %s138
    $region4: #{coatnet_forward.1} parent=1 // loop_header_branch
      %17 = sbr.rel (%p15) target = $region8
    $region5: #{coatnet_forward.1} parent=1 // loop_body
      %s19 = ssub.s32 %s14, 1
      %s20 = ssub.s32 %s14, 2
      %s21 = sadd.s32 %s14, 1
      %s22 = ssub.s32 %s14, %s21
      %p23 = scmp.eq.s32.totalorder %s22, 0
      %s25 = sadd.s32 %s24, 1
      %s26 = scalar_select %p23, %s24, %s25
      %p29 = pneg %p23
      %p30 = scmp.eq.s32.totalorder %s14, 1
      %p31 = por %p29, %p30
      %p32 = scmp.ne.s32.totalorder %s24, %s27
      %p33 = scmp.eq.s32.totalorder %s14, 0
      %p34 = por %p32, %p33
      %p35 = scmp.ne.s32.totalorder %s24, %s27
      %p36 = scmp.eq.s32.totalorder %s19, 1
      %p37 = por %p35, %p36
      %p38 = scmp.ne.s32.totalorder %s27, %s28
      %p39 = scmp.eq.s32.totalorder %s19, 0
      %p40 = por %p38, %p39
      %p41 = scmp.ne.s32.totalorder %s27, %s28
      %p42 = scmp.eq.s32.totalorder %s20, 1
      %p43 = por %p41, %p42
      %p45 = scmp.ne.s32.totalorder %s28, %s44
      %p46 = scmp.eq.s32.totalorder %s20, 0
      %p47 = por %p45, %p46
      %s49 = sadd.s32 %s48, 1
      %p52 = scmp.eq.s32.totalorder %s14, 1
      %p53 = scmp.ne.s32.totalorder %s48, %s50
      %p54 = scmp.eq.s32.totalorder %s14, 0
      %p55 = por %p53, %p54
      %p56 = scmp.ne.s32.totalorder %s48, %s50
      %p57 = scmp.eq.s32.totalorder %s19, 1
      %p58 = por %p56, %p57
      %p59 = scmp.ne.s32.totalorder %s50, %s51
      %p60 = scmp.eq.s32.totalorder %s19, 0
      %p61 = por %p59, %p60
      %p62 = scmp.ne.s32.totalorder %s50, %s51
      %p63 = scmp.eq.s32.totalorder %s20, 1
      %p64 = por %p62, %p63
      %p66 = scmp.ne.s32.totalorder %s51, %s65
      %p67 = scmp.eq.s32.totalorder %s20, 0
      %p68 = por %p66, %p67
      %s70 = sadd.s32 %s69, 1
      %p73 = scmp.eq.s32.totalorder %s14, 1
      %p74 = scmp.ne.s32.totalorder %s69, %s71
      %p75 = scmp.eq.s32.totalorder %s14, 0
      %p76 = por %p74, %p75
      %p77 = scmp.ne.s32.totalorder %s69, %s71
      %p78 = scmp.eq.s32.totalorder %s19, 1
      %p79 = por %p77, %p78
      %p80 = scmp.ne.s32.totalorder %s71, %s72
      %p81 = scmp.eq.s32.totalorder %s19, 0
      %p82 = por %p80, %p81
      %p83 = scmp.ne.s32.totalorder %s71, %s72
      %p84 = scmp.eq.s32.totalorder %s20, 1
      %p85 = por %p83, %p84
      %p87 = scmp.ne.s32.totalorder %s72, %s86
      %p88 = scmp.eq.s32.totalorder %s20, 0
      %p89 = por %p87, %p88
      %s91 = sadd.s32 %s90, 1
      %p94 = scmp.eq.s32.totalorder %s14, 1
      %p95 = scmp.ne.s32.totalorder %s90, %s92
      %p96 = scmp.eq.s32.totalorder %s14, 0
      %p97 = por %p95, %p96
      %p98 = scmp.ne.s32.totalorder %s90, %s92
      %p99 = scmp.eq.s32.totalorder %s19, 1
      %p100 = por %p98, %p99
      %p101 = scmp.ne.s32.totalorder %s92, %s93
      %p102 = scmp.eq.s32.totalorder %s19, 0
      %p103 = por %p101, %p102
      %p104 = scmp.ne.s32.totalorder %s92, %s93
      %p105 = scmp.eq.s32.totalorder %s20, 1
      %p106 = por %p104, %p105
      %p108 = scmp.ne.s32.totalorder %s93, %s107
      %p109 = scmp.eq.s32.totalorder %s20, 0
      %p110 = por %p108, %p109
      %s112 = sadd.s32 %s111, 1
      %p115 = scmp.eq.s32.totalorder %s14, 1
      %p116 = scmp.ne.s32.totalorder %s111, %s113
      %p117 = scmp.eq.s32.totalorder %s14, 0
      %p118 = por %p116, %p117
      %p119 = scmp.ne.s32.totalorder %s111, %s113
      %p120 = scmp.eq.s32.totalorder %s19, 1
      %p121 = por %p119, %p120
      %p122 = scmp.ne.s32.totalorder %s113, %s114
      %p123 = scmp.eq.s32.totalorder %s19, 0
      %p124 = por %p122, %p123
      %p125 = scmp.ne.s32.totalorder %s113, %s114
      %p126 = scmp.eq.s32.totalorder %s20, 1
      %p127 = por %p125, %p126
      %p129 = scmp.ne.s32.totalorder %s114, %s128
      %p130 = scmp.eq.s32.totalorder %s20, 0
      %p131 = por %p129, %p130
      %s132 = ssub.s32 %s14, %s21
      %p133 = scmp.eq.s32.totalorder %s132, 0
      %s135 = sadd.s32 %s134, 1
      %s136 = scalar_select %p133, %s134, %s135
      %p139 = pneg %p133
      %p140 = scmp.eq.s32.totalorder %s14, 1
      %p141 = por %p139, %p140
      %p142 = scmp.ne.s32.totalorder %s134, %s137
      %p143 = scmp.eq.s32.totalorder %s14, 0
      %p144 = por %p142, %p143
      %p145 = scmp.ne.s32.totalorder %s134, %s137
      %p146 = scmp.eq.s32.totalorder %s19, 1
      %p147 = por %p145, %p146
      %p148 = scmp.ne.s32.totalorder %s137, %s138
      %p149 = scmp.eq.s32.totalorder %s19, 0
      %p150 = por %p148, %p149
      %p151 = scmp.ne.s32.totalorder %s137, %s138
      %p152 = scmp.eq.s32.totalorder %s20, 1
      %p153 = por %p151, %p152
      %p155 = scmp.ne.s32.totalorder %s138, %s154
      %p156 = scmp.eq.s32.totalorder %s20, 0
      %p157 = por %p155, %p156
      %p158 = scmp.le.s32.totalorder 1, %s14
      %p159 = scmp.lt.s32.totalorder %s14, 3
      %p160 = pnand %p158, %p159
      %p161 = pneg %p160
      // Predicated region
      $region9: #{coatnet_forward.1} parent=5 // pred_check
        _
      $region10: #{coatnet_forward.1} parent=5 // pred_check_branch
        %163 = sbr.rel (%p160) target = $region12
      $region11: #{coatnet_forward.1} parent=5 // pred_region
        %s164 = ssub.s32 %s14, 1
        // Predicated region
        $region13: #{coatnet_forward.1} parent=11 // pred_check
          %p165 = pneg %p61
        $region14: #{coatnet_forward.1} parent=11 // pred_check_branch
          %167 = sbr.rel (%p165) target = $region16
        $region15: #{coatnet_forward.1} parent=11 // pred_region
          _
        $region16: #{coatnet_forward.1} parent=11 // pred_fallthru
          _
        // Predicated region
        $region17: #{coatnet_forward.1} parent=11 // pred_check
          %p168 = pneg %p82
        $region18: #{coatnet_forward.1} parent=11 // pred_check_branch
          %170 = sbr.rel (%p168) target = $region20
        $region19: #{coatnet_forward.1} parent=11 // pred_region
          _
        $region20: #{coatnet_forward.1} parent=11 // pred_fallthru
          _
        // Predicated region
        $region21: #{coatnet_forward.1} parent=11 // pred_check
          %p171 = pneg %p103
        $region22: #{coatnet_forward.1} parent=11 // pred_check_branch
          %173 = sbr.rel (%p171) target = $region24
        $region23: #{coatnet_forward.1} parent=11 // pred_region
          _
        $region24: #{coatnet_forward.1} parent=11 // pred_fallthru
          _
        // Predicated region
        $region25: #{coatnet_forward.1} parent=11 // pred_check
          %p174 = pneg %p124
        $region26: #{coatnet_forward.1} parent=11 // pred_check_branch
          %176 = sbr.rel (%p174) target = $region28
        $region27: #{coatnet_forward.1} parent=11 // pred_region
          _
        $region28: #{coatnet_forward.1} parent=11 // pred_fallthru
          _
      $region12: #{coatnet_forward.1} parent=5 // pred_fallthru
        _
      %p177 = scmp.lt.s32.totalorder %s14, 2
      // Predicated region
      $region29: #{coatnet_forward.1} parent=5 // pred_check
        %p178 = pneg %p177
      $region30: #{coatnet_forward.1} parent=5 // pred_check_branch
        %180 = sbr.rel (%p178) target = $region32
      $region31: #{coatnet_forward.1} parent=5 // pred_region
        // Predicated region
        $region33: #{coatnet_forward.1} parent=31 // pred_check
          %p181 = pneg %p34
        $region34: #{coatnet_forward.1} parent=31 // pred_check_branch
          %183 = sbr.rel (%p181) target = $region36
        $region35: #{coatnet_forward.1} parent=31 // pred_region
          %p184 = scmp.lt.s32.totalorder %s14, 1
          %s185 = scalar_select %p184, %s14, 1
          %s186 = smul.addr %s185, 32
          %s187 = smul.addr %s186, 4
          %s188 = scalar_lea.vmem %s0, %s187
        $region36: #{coatnet_forward.1} parent=31 // pred_fallthru
          _
      $region32: #{coatnet_forward.1} parent=5 // pred_fallthru
        _
      %p189 = scmp.le.s32.totalorder 1, %s14
      %p190 = scmp.lt.s32.totalorder %s14, 3
      %p191 = pnand %p189, %p190
      %p192 = pneg %p191
      // Predicated region
      $region37: #{coatnet_forward.1} parent=5 // pred_check
        _
      $region38: #{coatnet_forward.1} parent=5 // pred_check_branch
        %194 = sbr.rel (%p191) target = $region40
      $region39: #{coatnet_forward.1} parent=5 // pred_region
        %s195 = ssub.s32 %s14, 1
        %p196 = scmp.lt.s32.totalorder %s19, 1
        %s197 = scalar_select %p196, %s19, 1
        %s198 = smul.addr %s197, 32
        %s199 = smul.addr %s198, 4
        %s200 = scalar_lea.vmem %s0, %s199
        %p201 = pneg %p40
        %p202 = pneg %p37
        %p203 = pneg %p61
        %p204 = pneg %p58
        %p205 = pneg %p82
        %p206 = pneg %p79
        %p207 = pneg %p103
        %p208 = pneg %p100
        %p209 = pneg %p124
        %p210 = pneg %p121
        %p211 = pneg %p150
        %p212 = pneg %p147
        %s213 = sand.u32 %s137, 1
        %s214 = scalar_lea.sflag [#allocation3], %s213
        %s215 = sand.u32 %s137, 1
        %s216 = scalar_lea.vmem [#allocation2], %s215
        %p217 = scmp.lt.s32.totalorder %s19, 1
        %s218 = scalar_select %p217, %s19, 1
        %s219 = smul.addr %s218, 32
        %s220 = smul.addr %s219, 4
        %s221 = scalar_lea.vmem %s0, %s220
        %v223 = vld [vmem:[%s4] sm:$0xff]
        %v224 = vld [vmem:[%s4 + $0x8] sm:$0xff]
        %v225 = vld [vmem:[%s4 + $0x10] sm:$0xff]
        %v226 = vld [vmem:[%s221] sm:$0xf]
        %v227 = vld [vmem:[%s221 + $0x4] sm:$0xf]
        %v228 = vld [vmem:[%s221 + $0x8] sm:$0xf]
        %v229 = vld [vmem:[%s221 + $0xc] sm:$0xf]
        %v230 = vld [vmem:[%s221 + $0x10] sm:$0xf]
        %v231 = vld [vmem:[%s221 + $0x14] sm:$0xf]
        %v232 = vld [vmem:[%s221 + $0x18] sm:$0xf]
        %v233 = vld [vmem:[%s221 + $0x1c] sm:$0xf]
        %v234 = vld [vmem:[%s221 + $0x20] sm:$0xf]
        %v235 = vld [vmem:[%s221 + $0x24] sm:$0xf]
        %v236 = vld [vmem:[%s221 + $0x28] sm:$0xf]
        %v237 = vld [vmem:[%s221 + $0x2c] sm:$0xf]
        %v238 = vld [vmem:[%s221 + $0x30] sm:$0xf]
        %v239 = vld [vmem:[%s221 + $0x34] sm:$0xf]
        %v240 = vld [vmem:[%s221 + $0x38] sm:$0xf]
        %v241 = vld [vmem:[%s221 + $0x3c] sm:$0xf]
        %v242 = vld [vmem:[%s221 + $0x40] sm:$0xf]
        %v243 = vld [vmem:[%s221 + $0x44] sm:$0xf]
        %v244 = vld [vmem:[%s221 + $0x48] sm:$0xf]
        %v245 = vld [vmem:[%s221 + $0x4c] sm:$0xf]
        %v246 = vld [vmem:[%s221 + $0x50] sm:$0xf]
        %v247 = vld [vmem:[%s221 + $0x54] sm:$0xf]
        %v248 = vld [vmem:[%s221 + $0x58] sm:$0xf]
        %v249 = vld [vmem:[%s221 + $0x5c] sm:$0xf]
        %v250 = vld [vmem:[%s221 + $0x60] sm:$0xf]
        %v251 = vld [vmem:[%s221 + $0x64] sm:$0xf]
        %v252 = vld [vmem:[%s221 + $0x68] sm:$0xf]
        %v253 = vld [vmem:[%s221 + $0x6c] sm:$0xf]
        %v254 = vld [vmem:[%s221 + $0x70] sm:$0xf]
        %v255 = vld [vmem:[%s221 + $0x74] sm:$0xf]
        %v256 = vld [vmem:[%s221 + $0x78] sm:$0xf]
        %v257 = vld [vmem:[%s221 + $0x7c] sm:$0xf]
        %v258 = vld [vmem:[%s2] sm:$0xf]
        %v259 = vld [vmem:[%s2 + $0x4] sm:$0xf]
        %v260 = vld [vmem:[%s2 + $0x8] sm:$0xf]
        %v261 = vld [vmem:[%s2 + $0xc] sm:$0xf]
        %v262 = vlaneseq
        %v263 = vshrl.u32 %v262, 7
        %v264 = vsub.s32 1, %v263
        %v265 = vrot.slane %v224, %v264
        %v298 = vunpack.c.l.b16 %v226
        %v299 = vunpack.c.l.b16 %v227
        %v300 = vunpack.c.l.b16 %v228
        %v301 = vunpack.c.l.b16 %v229
        %v302 = vunpack.c.l.b16 %v230
        %v303 = vunpack.c.l.b16 %v231
        %v304 = vunpack.c.l.b16 %v232
        %v305 = vunpack.c.l.b16 %v233
        %v306 = vunpack.c.l.b16 %v234
        %v307 = vunpack.c.l.b16 %v235
        %v308 = vunpack.c.l.b16 %v236
        %v309 = vunpack.c.l.b16 %v237
        %v310 = vunpack.c.l.b16 %v238
        %v311 = vunpack.c.l.b16 %v239
        %v312 = vunpack.c.l.b16 %v240
        %v313 = vunpack.c.l.b16 %v241
        %v314 = vunpack.c.l.b16 %v242
        %v315 = vunpack.c.l.b16 %v243
        %v316 = vunpack.c.l.b16 %v244
        %v317 = vunpack.c.l.b16 %v245
        %v318 = vunpack.c.l.b16 %v246
        %v319 = vunpack.c.l.b16 %v247
        %v320 = vunpack.c.l.b16 %v248
        %v321 = vunpack.c.l.b16 %v249
        %v322 = vunpack.c.l.b16 %v250
        %v323 = vunpack.c.l.b16 %v251
        %v324 = vunpack.c.l.b16 %v252
        %v325 = vunpack.c.l.b16 %v253
        %v326 = vunpack.c.l.b16 %v254
        %v327 = vunpack.c.l.b16 %v255
        %v328 = vunpack.c.l.b16 %v256
        %v329 = vunpack.c.l.b16 %v257
        %v330 = vpack.c.b16 %v299, %v298
        %v331 = vpack.c.b16 %v301, %v300
        %v332 = vpack.c.b16 %v303, %v302
        %v333 = vpack.c.b16 %v305, %v304
        %v334 = vpack.c.b16 %v307, %v306
        %v335 = vpack.c.b16 %v309, %v308
        %v336 = vpack.c.b16 %v311, %v310
        %v337 = vpack.c.b16 %v313, %v312
        %v338 = vpack.c.b16 %v315, %v314
        %v339 = vpack.c.b16 %v317, %v316
        %v340 = vpack.c.b16 %v319, %v318
        %v341 = vpack.c.b16 %v321, %v320
        %v342 = vpack.c.b16 %v323, %v322
        %v343 = vpack.c.b16 %v325, %v324
        %v344 = vpack.c.b16 %v327, %v326
        %v345 = vpack.c.b16 %v329, %v328
        %v350 = vunpack.c.l.b16 %v258
        %v351 = vunpack.c.l.b16 %v259
        %v352 = vunpack.c.l.b16 %v260
        %v353 = vunpack.c.l.b16 %v261
        %v354 = vpack.c.b16 %v351, %v350
        %v355 = vpack.c.b16 %v353, %v352
        %vm358 = vcmask 261120
        %v360 = vsel %vm358, %v330, 0
        %v363 = vsel %vm358, %v331, 0
        %v366 = vsel %vm358, %v332, 0
        %v369 = vsel %vm358, %v333, 0
        %v372 = vsel %vm358, %v334, 0
        %v375 = vsel %vm358, %v335, 0
        %v378 = vsel %vm358, %v336, 0
        %v381 = vsel %vm358, %v337, 0
        %v384 = vsel %vm358, %v338, 0
        %v387 = vsel %vm358, %v339, 0
        %v390 = vsel %vm358, %v340, 0
        %v393 = vsel %vm358, %v341, 0
        %v396 = vsel %vm358, %v342, 0
        %v399 = vsel %vm358, %v343, 0
        %v402 = vsel %vm358, %v344, 0
        %v405 = vsel %vm358, %v345, 0
        %407 = vmatprep.subr.bf16.mxu0 0
        %408 = vmatpush1.bf16.msra.mxu0 %v354
        %409 = vmatprep.subr.bf16.mxu0 0
        %410 = vmatpush1.bf16.msra.mxu0 %v355
        %411 = vmatprep.subr.bf16.mxu0 0
        %412 = vmatpush1.bf16.msra.mxu0 0
        %413 = vmatprep.subr.bf16.mxu0 0
        %414 = vmatpush1.bf16.msra.mxu0 0
        %415 = vmatprep.subr.bf16.mxu0 0
        %416 = vmatpush1.bf16.msra.mxu0 0
        %417 = vmatprep.subr.bf16.mxu0 0
        %418 = vmatpush1.bf16.msra.mxu0 0
        %419 = vmatprep.subr.bf16.mxu0 0
        %420 = vmatpush1.bf16.msra.mxu0 0
        %421 = vmatprep.subr.bf16.mxu0 0
        %422 = vmatpush1.bf16.msra.mxu0 0
        %423 = vmatprep.subr.bf16.mxu0 0
        %424 = vmatpush1.bf16.msra.mxu0 0
        %425 = vmatprep.subr.bf16.mxu0 0
        %426 = vmatpush1.bf16.msra.mxu0 0
        %427 = vmatprep.subr.bf16.mxu0 0
        %428 = vmatpush1.bf16.msra.mxu0 0
        %429 = vmatprep.subr.bf16.mxu0 0
        %430 = vmatpush1.bf16.msra.mxu0 0
        %431 = vmatprep.subr.bf16.mxu0 0
        %432 = vmatpush1.bf16.msra.mxu0 0
        %433 = vmatprep.subr.bf16.mxu0 0
        %434 = vmatpush1.bf16.msra.mxu0 0
        %435 = vmatprep.subr.bf16.mxu0 0
        %436 = vmatpush1.bf16.msra.mxu0 0
        %437 = vmatprep.subr.bf16.mxu0 0
        %438 = vmatpush1.bf16.msra.mxu0 0
        %439 = vmatprep.mubr.bf16.mxu0 0
        %440 = vmatmul.mubr.bf16.gmra.mrb[0].mxu0 %v360
        %v441 = vpop.f32.mrb[0].mxu0
        %v442 = vadd.f32 %v265, %v441
        %v443 = vpop.f32.mrb[0].mxu0
        %v444 = vpop.f32.mrb[0].mxu0
        %v445 = vadd.f32 %v265, %v444
        %v446 = vpop.f32.mrb[0].mxu0
        %447 = vmatprep.mubr.bf16.mxu0 0
        %448 = vmatmul.mubr.bf16.gmra.mrb[0].mxu0 %v363
        %v449 = vpop.f32.mrb[0].mxu0
        %v450 = vadd.f32 %v265, %v449
        %v451 = vpop.f32.mrb[0].mxu0
        %v452 = vpop.f32.mrb[0].mxu0
        %v453 = vadd.f32 %v265, %v452
        %v454 = vpop.f32.mrb[0].mxu0
        %455 = vmatprep.mubr.bf16.mxu0 0
        %456 = vmatmul.mubr.bf16.gmra.mrb[0].mxu0 %v366
        %v457 = vpop.f32.mrb[0].mxu0
        %v458 = vadd.f32 %v265, %v457
        %v459 = vpop.f32.mrb[0].mxu0
        %v460 = vpop.f32.mrb[0].mxu0
        %v461 = vadd.f32 %v265, %v460
        %v462 = vpop.f32.mrb[0].mxu0
        %463 = vmatprep.mubr.bf16.mxu0 0
        %464 = vmatmul.mubr.bf16.gmra.mrb[0].mxu0 %v369
        %v465 = vpop.f32.mrb[0].mxu0
        %v466 = vadd.f32 %v265, %v465
        %v467 = vpop.f32.mrb[0].mxu0
        %v468 = vpop.f32.mrb[0].mxu0
        %v469 = vadd.f32 %v265, %v468
        %v470 = vpop.f32.mrb[0].mxu0
        %471 = vmatprep.mubr.bf16.mxu0 0
        %472 = vmatmul.mubr.bf16.gmra.mrb[0].mxu0 %v372
        %v473 = vpop.f32.mrb[0].mxu0
        %v474 = vadd.f32 %v265, %v473
        %v475 = vpop.f32.mrb[0].mxu0
        %v476 = vpop.f32.mrb[0].mxu0
        %v477 = vadd.f32 %v265, %v476
        %v478 = vpop.f32.mrb[0].mxu0
        %479 = vmatprep.mubr.bf16.mxu0 0
        %480 = vmatmul.mubr.bf16.gmra.mrb[0].mxu0 %v375
        %v481 = vpop.f32.mrb[0].mxu0
        %v482 = vadd.f32 %v265, %v481
        %v483 = vpop.f32.mrb[0].mxu0
        %v484 = vpop.f32.mrb[0].mxu0
        %v485 = vadd.f32 %v265, %v484
        %v486 = vpop.f32.mrb[0].mxu0
        %487 = vmatprep.mubr.bf16.mxu0 0
        %488 = vmatmul.mubr.bf16.gmra.mrb[0].mxu0 %v378
        %v489 = vpop.f32.mrb[0].mxu0
        %v490 = vadd.f32 %v265, %v489
        %v491 = vpop.f32.mrb[0].mxu0
        %v492 = vpop.f32.mrb[0].mxu0
        %v493 = vadd.f32 %v265, %v492
        %v494 = vpop.f32.mrb[0].mxu0
        %495 = vmatprep.mubr.bf16.mxu0 0
        %496 = vmatmul.mubr.bf16.gmra.mrb[0].mxu0 %v381
        %v497 = vpop.f32.mrb[0].mxu0
        %v498 = vadd.f32 %v265, %v497
        %v499 = vpop.f32.mrb[0].mxu0
        %v500 = vpop.f32.mrb[0].mxu0
        %v501 = vadd.f32 %v265, %v500
        %v502 = vpop.f32.mrb[0].mxu0
        %503 = vmatprep.mubr.bf16.mxu0 0
        %504 = vmatmul.mubr.bf16.gmra.mrb[0].mxu0 %v384
        %v505 = vpop.f32.mrb[0].mxu0
        %v506 = vadd.f32 %v265, %v505
        %v507 = vpop.f32.mrb[0].mxu0
        %v508 = vpop.f32.mrb[0].mxu0
        %v509 = vadd.f32 %v265, %v508
        %v510 = vpop.f32.mrb[0].mxu0
        %511 = vmatprep.mubr.bf16.mxu0 0
        %512 = vmatmul.mubr.bf16.gmra.mrb[0].mxu0 %v387
        %v513 = vpop.f32.mrb[0].mxu0
        %v514 = vadd.f32 %v265, %v513
        %v515 = vpop.f32.mrb[0].mxu0
        %v516 = vpop.f32.mrb[0].mxu0
        %v517 = vadd.f32 %v265, %v516
        %v518 = vpop.f32.mrb[0].mxu0
        %519 = vmatprep.mubr.bf16.mxu0 0
        %520 = vmatmul.mubr.bf16.gmra.mrb[0].mxu0 %v390
        %v521 = vpop.f32.mrb[0].mxu0
        %v522 = vadd.f32 %v265, %v521
        %v523 = vpop.f32.mrb[0].mxu0
        %v524 = vpop.f32.mrb[0].mxu0
        %v525 = vadd.f32 %v265, %v524
        %v526 = vpop.f32.mrb[0].mxu0
        %527 = vmatprep.mubr.bf16.mxu0 0
        %528 = vmatmul.mubr.bf16.gmra.mrb[0].mxu0 %v393
        %v529 = vpop.f32.mrb[0].mxu0
        %v530 = vadd.f32 %v265, %v529
        %v531 = vpop.f32.mrb[0].mxu0
        %v532 = vpop.f32.mrb[0].mxu0
        %v533 = vadd.f32 %v265, %v532
        %v534 = vpop.f32.mrb[0].mxu0
        %535 = vmatprep.mubr.bf16.mxu0 0
        %536 = vmatmul.mubr.bf16.gmra.mrb[0].mxu0 %v396
        %v537 = vpop.f32.mrb[0].mxu0
        %v538 = vadd.f32 %v265, %v537
        %v539 = vpop.f32.mrb[0].mxu0
        %v540 = vpop.f32.mrb[0].mxu0
        %v541 = vadd.f32 %v265, %v540
        %v542 = vpop.f32.mrb[0].mxu0
        %543 = vmatprep.mubr.bf16.mxu0 0
        %544 = vmatmul.mubr.bf16.gmra.mrb[0].mxu0 %v399
        %v545 = vpop.f32.mrb[0].mxu0
        %v546 = vadd.f32 %v265, %v545
        %v547 = vpop.f32.mrb[0].mxu0
        %v548 = vpop.f32.mrb[0].mxu0
        %v549 = vadd.f32 %v265, %v548
        %v550 = vpop.f32.mrb[0].mxu0
        %551 = vmatprep.mubr.bf16.mxu0 0
        %552 = vmatmul.mubr.bf16.gmra.mrb[0].mxu0 %v402
        %v553 = vpop.f32.mrb[0].mxu0
        %v554 = vadd.f32 %v265, %v553
        %v555 = vpop.f32.mrb[0].mxu0
        %v556 = vpop.f32.mrb[0].mxu0
        %v557 = vadd.f32 %v265, %v556
        %v558 = vpop.f32.mrb[0].mxu0
        %559 = vmatprep.mubr.bf16.mxu0 0
        %560 = vmatmul.mubr.bf16.gmra.mrb[0].mxu0 %v405
        %v561 = vpop.f32.mrb[0].mxu0
        %v562 = vadd.f32 %v265, %v561
        %v563 = vpop.f32.mrb[0].mxu0
        %v564 = vpop.f32.mrb[0].mxu0
        %v565 = vadd.f32 %v265, %v564
        %v566 = vpop.f32.mrb[0].mxu0
        %567 = vdwg.mxu0
        %v568 = vmul.f32 %v442, %v442
        %v569 = vmul.f32 %v445, %v445
        %v570 = vmul.f32 %v450, %v450
        %v571 = vmul.f32 %v453, %v453
        %v572 = vmul.f32 %v458, %v458
        %v573 = vmul.f32 %v461, %v461
        %v574 = vmul.f32 %v466, %v466
        %v575 = vmul.f32 %v469, %v469
        %v576 = vmul.f32 %v474, %v474
        %v577 = vmul.f32 %v477, %v477
        %v578 = vmul.f32 %v482, %v482
        %v579 = vmul.f32 %v485, %v485
        %v580 = vmul.f32 %v490, %v490
        %v581 = vmul.f32 %v493, %v493
        %v582 = vmul.f32 %v498, %v498
        %v583 = vmul.f32 %v501, %v501
        %v584 = vmul.f32 %v506, %v506
        %v585 = vmul.f32 %v509, %v509
        %v586 = vmul.f32 %v514, %v514
        %v587 = vmul.f32 %v517, %v517
        %v588 = vmul.f32 %v522, %v522
        %v589 = vmul.f32 %v525, %v525
        %v590 = vmul.f32 %v530, %v530
        %v591 = vmul.f32 %v533, %v533
        %v592 = vmul.f32 %v538, %v538
        %v593 = vmul.f32 %v541, %v541
        %v594 = vmul.f32 %v546, %v546
        %v595 = vmul.f32 %v549, %v549
        %v596 = vmul.f32 %v554, %v554
        %v597 = vmul.f32 %v557, %v557
        %v598 = vmul.f32 %v562, %v562
        %v599 = vmul.f32 %v565, %v565
        %v600 = vmul.f32 %v442, %v568
        %v601 = vmul.f32 %v445, %v569
        %v602 = vmul.f32 %v450, %v570
        %v603 = vmul.f32 %v453, %v571
        %v604 = vmul.f32 %v458, %v572
        %v605 = vmul.f32 %v461, %v573
        %v606 = vmul.f32 %v466, %v574
        %v607 = vmul.f32 %v469, %v575
        %v608 = vmul.f32 %v474, %v576
        %v609 = vmul.f32 %v477, %v577
        %v610 = vmul.f32 %v482, %v578
        %v611 = vmul.f32 %v485, %v579
        %v612 = vmul.f32 %v490, %v580
        %v613 = vmul.f32 %v493, %v581
        %v614 = vmul.f32 %v498, %v582
        %v615 = vmul.f32 %v501, %v583
        %v616 = vmul.f32 %v506, %v584
        %v617 = vmul.f32 %v509, %v585
        %v618 = vmul.f32 %v514, %v586
        %v619 = vmul.f32 %v517, %v587
        %v620 = vmul.f32 %v522, %v588
        %v621 = vmul.f32 %v525, %v589
        %v622 = vmul.f32 %v530, %v590
        %v623 = vmul.f32 %v533, %v591
        %v624 = vmul.f32 %v538, %v592
        %v625 = vmul.f32 %v541, %v593
        %v626 = vmul.f32 %v546, %v594
        %v627 = vmul.f32 %v549, %v595
        %v628 = vmul.f32 %v554, %v596
        %v629 = vmul.f32 %v557, %v597
        %v630 = vmul.f32 %v562, %v598
        %v631 = vmul.f32 %v565, %v599
        %v632 = vmul.f32 %v600, 0.044715
        %v633 = vmul.f32 %v601, 0.044715
        %v634 = vmul.f32 %v602, 0.044715
        %v635 = vmul.f32 %v603, 0.044715
        %v636 = vmul.f32 %v604, 0.044715
        %v637 = vmul.f32 %v605, 0.044715
        %v638 = vmul.f32 %v606, 0.044715
        %v639 = vmul.f32 %v607, 0.044715
        %v640 = vmul.f32 %v608, 0.044715
        %v641 = vmul.f32 %v609, 0.044715
        %v642 = vmul.f32 %v610, 0.044715
        %v643 = vmul.f32 %v611, 0.044715
        %v644 = vmul.f32 %v612, 0.044715
        %v645 = vmul.f32 %v613, 0.044715
        %v646 = vmul.f32 %v614, 0.044715
        %v647 = vmul.f32 %v615, 0.044715
        %v648 = vmul.f32 %v616, 0.044715
        %v649 = vmul.f32 %v617, 0.044715
        %v650 = vmul.f32 %v618, 0.044715
        %v651 = vmul.f32 %v619, 0.044715
        %v652 = vmul.f32 %v620, 0.044715
        %v653 = vmul.f32 %v621, 0.044715
        %v654 = vmul.f32 %v622, 0.044715
        %v655 = vmul.f32 %v623, 0.044715
        %v656 = vmul.f32 %v624, 0.044715
        %v657 = vmul.f32 %v625, 0.044715
        %v658 = vmul.f32 %v626, 0.044715
        %v659 = vmul.f32 %v627, 0.044715
        %v660 = vmul.f32 %v628, 0.044715
        %v661 = vmul.f32 %v629, 0.044715
        %v662 = vmul.f32 %v630, 0.044715
        %v663 = vmul.f32 %v631, 0.044715
        %v664 = vadd.f32 %v442, %v632
        %v665 = vadd.f32 %v445, %v633
        %v666 = vadd.f32 %v450, %v634
        %v667 = vadd.f32 %v453, %v635
        %v668 = vadd.f32 %v458, %v636
        %v669 = vadd.f32 %v461, %v637
        %v670 = vadd.f32 %v466, %v638
        %v671 = vadd.f32 %v469, %v639
        %v672 = vadd.f32 %v474, %v640
        %v673 = vadd.f32 %v477, %v641
        %v674 = vadd.f32 %v482, %v642
        %v675 = vadd.f32 %v485, %v643
        %v676 = vadd.f32 %v490, %v644
        %v677 = vadd.f32 %v493, %v645
        %v678 = vadd.f32 %v498, %v646
        %v679 = vadd.f32 %v501, %v647
        %v680 = vadd.f32 %v506, %v648
        %v681 = vadd.f32 %v509, %v649
        %v682 = vadd.f32 %v514, %v650
        %v683 = vadd.f32 %v517, %v651
        %v684 = vadd.f32 %v522, %v652
        %v685 = vadd.f32 %v525, %v653
        %v686 = vadd.f32 %v530, %v654
        %v687 = vadd.f32 %v533, %v655
        %v688 = vadd.f32 %v538, %v656
        %v689 = vadd.f32 %v541, %v657
        %v690 = vadd.f32 %v546, %v658
        %v691 = vadd.f32 %v549, %v659
        %v692 = vadd.f32 %v554, %v660
        %v693 = vadd.f32 %v557, %v661
        %v694 = vadd.f32 %v562, %v662
        %v695 = vadd.f32 %v565, %v663
        %v696 = vmul.f32 %v664, 0.7978846
        %v697 = vmul.f32 %v665, 0.7978846
        %v698 = vmul.f32 %v666, 0.7978846
        %v699 = vmul.f32 %v667, 0.7978846
        %v700 = vmul.f32 %v668, 0.7978846
        %v701 = vmul.f32 %v669, 0.7978846
        %v702 = vmul.f32 %v670, 0.7978846
        %v703 = vmul.f32 %v671, 0.7978846
        %v704 = vmul.f32 %v672, 0.7978846
        %v705 = vmul.f32 %v673, 0.7978846
        %v706 = vmul.f32 %v674, 0.7978846
        %v707 = vmul.f32 %v675, 0.7978846
        %v708 = vmul.f32 %v676, 0.7978846
        %v709 = vmul.f32 %v677, 0.7978846
        %v710 = vmul.f32 %v678, 0.7978846
        %v711 = vmul.f32 %v679, 0.7978846
        %v712 = vmul.f32 %v680, 0.7978846
        %v713 = vmul.f32 %v681, 0.7978846
        %v714 = vmul.f32 %v682, 0.7978846
        %v715 = vmul.f32 %v683, 0.7978846
        %v716 = vmul.f32 %v684, 0.7978846
        %v717 = vmul.f32 %v685, 0.7978846
        %v718 = vmul.f32 %v686, 0.7978846
        %v719 = vmul.f32 %v687, 0.7978846
        %v720 = vmul.f32 %v688, 0.7978846
        %v721 = vmul.f32 %v689, 0.7978846
        %v722 = vmul.f32 %v690, 0.7978846
        %v723 = vmul.f32 %v691, 0.7978846
        %v724 = vmul.f32 %v692, 0.7978846
        %v725 = vmul.f32 %v693, 0.7978846
        %v726 = vmul.f32 %v694, 0.7978846
        %v727 = vmul.f32 %v695, 0.7978846
        %v728 = vtanh.pop %v696
        %v729 = vtanh.pop %v697
        %v730 = vtanh.pop %v698
        %v731 = vtanh.pop %v699
        %v732 = vtanh.pop %v700
        %v733 = vtanh.pop %v701
        %v734 = vtanh.pop %v702
        %v735 = vtanh.pop %v703
        %v736 = vtanh.pop %v704
        %v737 = vtanh.pop %v705
        %v738 = vtanh.pop %v706
        %v739 = vtanh.pop %v707
        %v740 = vtanh.pop %v708
        %v741 = vtanh.pop %v709
        %v742 = vtanh.pop %v710
        %v743 = vtanh.pop %v711
        %v744 = vtanh.pop %v712
        %v745 = vtanh.pop %v713
        %v746 = vtanh.pop %v714
        %v747 = vtanh.pop %v715
        %v748 = vtanh.pop %v716
        %v749 = vtanh.pop %v717
        %v750 = vtanh.pop %v718
        %v751 = vtanh.pop %v719
        %v752 = vtanh.pop %v720
        %v753 = vtanh.pop %v721
        %v754 = vtanh.pop %v722
        %v755 = vtanh.pop %v723
        %v756 = vtanh.pop %v724
        %v757 = vtanh.pop %v725
        %v758 = vtanh.pop %v726
        %v759 = vtanh.pop %v727
        %v760 = vadd.f32 %v728, 1.0
        %v761 = vadd.f32 %v729, 1.0
        %v762 = vadd.f32 %v730, 1.0
        %v763 = vadd.f32 %v731, 1.0
        %v764 = vadd.f32 %v732, 1.0
        %v765 = vadd.f32 %v733, 1.0
        %v766 = vadd.f32 %v734, 1.0
        %v767 = vadd.f32 %v735, 1.0
        %v768 = vadd.f32 %v736, 1.0
        %v769 = vadd.f32 %v737, 1.0
        %v770 = vadd.f32 %v738, 1.0
        %v771 = vadd.f32 %v739, 1.0
        %v772 = vadd.f32 %v740, 1.0
        %v773 = vadd.f32 %v741, 1.0
        %v774 = vadd.f32 %v742, 1.0
        %v775 = vadd.f32 %v743, 1.0
        %v776 = vadd.f32 %v744, 1.0
        %v777 = vadd.f32 %v745, 1.0
        %v778 = vadd.f32 %v746, 1.0
        %v779 = vadd.f32 %v747, 1.0
        %v780 = vadd.f32 %v748, 1.0
        %v781 = vadd.f32 %v749, 1.0
        %v782 = vadd.f32 %v750, 1.0
        %v783 = vadd.f32 %v751, 1.0
        %v784 = vadd.f32 %v752, 1.0
        %v785 = vadd.f32 %v753, 1.0
        %v786 = vadd.f32 %v754, 1.0
        %v787 = vadd.f32 %v755, 1.0
        %v788 = vadd.f32 %v756, 1.0
        %v789 = vadd.f32 %v757, 1.0
        %v790 = vadd.f32 %v758, 1.0
        %v791 = vadd.f32 %v759, 1.0
        %v792 = vmul.f32 %v760, 0.5
        %v793 = vmul.f32 %v761, 0.5
        %v794 = vmul.f32 %v762, 0.5
        %v795 = vmul.f32 %v763, 0.5
        %v796 = vmul.f32 %v764, 0.5
        %v797 = vmul.f32 %v765, 0.5
        %v798 = vmul.f32 %v766, 0.5
        %v799 = vmul.f32 %v767, 0.5
        %v800 = vmul.f32 %v768, 0.5
        %v801 = vmul.f32 %v769, 0.5
        %v802 = vmul.f32 %v770, 0.5
        %v803 = vmul.f32 %v771, 0.5
        %v804 = vmul.f32 %v772, 0.5
        %v805 = vmul.f32 %v773, 0.5
        %v806 = vmul.f32 %v774, 0.5
        %v807 = vmul.f32 %v775, 0.5
        %v808 = vmul.f32 %v776, 0.5
        %v809 = vmul.f32 %v777, 0.5
        %v810 = vmul.f32 %v778, 0.5
        %v811 = vmul.f32 %v779, 0.5
        %v812 = vmul.f32 %v780, 0.5
        %v813 = vmul.f32 %v781, 0.5
        %v814 = vmul.f32 %v782, 0.5
        %v815 = vmul.f32 %v783, 0.5
        %v816 = vmul.f32 %v784, 0.5
        %v817 = vmul.f32 %v785, 0.5
        %v818 = vmul.f32 %v786, 0.5
        %v819 = vmul.f32 %v787, 0.5
        %v820 = vmul.f32 %v788, 0.5
        %v821 = vmul.f32 %v789, 0.5
        %v822 = vmul.f32 %v790, 0.5
        %v823 = vmul.f32 %v791, 0.5
        %v824 = vmul.f32 %v442, %v792
        %v825 = vmul.f32 %v445, %v793
        %v826 = vmul.f32 %v450, %v794
        %v827 = vmul.f32 %v453, %v795
        %v828 = vmul.f32 %v458, %v796
        %v829 = vmul.f32 %v461, %v797
        %v830 = vmul.f32 %v466, %v798
        %v831 = vmul.f32 %v469, %v799
        %v832 = vmul.f32 %v474, %v800
        %v833 = vmul.f32 %v477, %v801
        %v834 = vmul.f32 %v482, %v802
        %v835 = vmul.f32 %v485, %v803
        %v836 = vmul.f32 %v490, %v804
        %v837 = vmul.f32 %v493, %v805
        %v838 = vmul.f32 %v498, %v806
        %v839 = vmul.f32 %v501, %v807
        %v840 = vmul.f32 %v506, %v808
        %v841 = vmul.f32 %v509, %v809
        %v842 = vmul.f32 %v514, %v810
        %v843 = vmul.f32 %v517, %v811
        %v844 = vmul.f32 %v522, %v812
        %v845 = vmul.f32 %v525, %v813
        %v846 = vmul.f32 %v530, %v814
        %v847 = vmul.f32 %v533, %v815
        %v848 = vmul.f32 %v538, %v816
        %v849 = vmul.f32 %v541, %v817
        %v850 = vmul.f32 %v546, %v818
        %v851 = vmul.f32 %v549, %v819
        %v852 = vmul.f32 %v554, %v820
        %v853 = vmul.f32 %v557, %v821
        %v854 = vmul.f32 %v562, %v822
        %v855 = vmul.f32 %v565, %v823
        %v856 = vpack.c.bf16 %v825, %v824
        %v857 = vpack.c.bf16 %v827, %v826
        %v858 = vpack.c.bf16 %v829, %v828
        %v859 = vpack.c.bf16 %v831, %v830
        %v860 = vpack.c.bf16 %v833, %v832
        %v861 = vpack.c.bf16 %v835, %v834
        %v862 = vpack.c.bf16 %v837, %v836
        %v863 = vpack.c.bf16 %v839, %v838
        %v864 = vpack.c.bf16 %v841, %v840
        %v865 = vpack.c.bf16 %v843, %v842
        %v866 = vpack.c.bf16 %v845, %v844
        %v867 = vpack.c.bf16 %v847, %v846
        %v868 = vpack.c.bf16 %v849, %v848
        %v869 = vpack.c.bf16 %v851, %v850
        %v870 = vpack.c.bf16 %v853, %v852
        %v871 = vpack.c.bf16 %v855, %v854
        %v872 = vld [vmem:[%s2 + $0x40] sm:$0xf]
        %v873 = vld [vmem:[%s2 + $0x44] sm:$0xf]
        %v874 = vld [vmem:[%s2 + $0x48] sm:$0xf]
        %v875 = vld [vmem:[%s2 + $0x4c] sm:$0xf]
        %v876 = vld [vmem:[%s2 + $0x50] sm:$0xf]
        %v877 = vld [vmem:[%s2 + $0x54] sm:$0xf]
        %v878 = vld [vmem:[%s2 + $0x58] sm:$0xf]
        %v879 = vld [vmem:[%s2 + $0x5c] sm:$0xf]
        %v880 = vld [vmem:[%s2 + $0x60] sm:$0xf]
        %v881 = vld [vmem:[%s2 + $0x64] sm:$0xf]
        %v882 = vld [vmem:[%s2 + $0x68] sm:$0xf]
        %v883 = vld [vmem:[%s2 + $0x6c] sm:$0xf]
        %v884 = vld [vmem:[%s2 + $0x70] sm:$0xf]
        %v885 = vld [vmem:[%s2 + $0x74] sm:$0xf]
        %v886 = vld [vmem:[%s2 + $0x78] sm:$0xf]
        %v887 = vld [vmem:[%s2 + $0x7c] sm:$0xf]
        %v888 = vlaneseq
        %v889 = vshrl.u32 %v888, 7
        %v890 = vsub.s32 2, %v889
        %v891 = vrot.slane %v224, %v890
        %v908 = vunpack.c.l.b16 %v872
        %v909 = vunpack.c.l.b16 %v873
        %v910 = vunpack.c.l.b16 %v874
        %v911 = vunpack.c.l.b16 %v875
        %v912 = vunpack.c.l.b16 %v876
        %v913 = vunpack.c.l.b16 %v877
        %v914 = vunpack.c.l.b16 %v878
        %v915 = vunpack.c.l.b16 %v879
        %v916 = vunpack.c.l.b16 %v880
        %v917 = vunpack.c.l.b16 %v881
        %v918 = vunpack.c.l.b16 %v882
        %v919 = vunpack.c.l.b16 %v883
        %v920 = vunpack.c.l.b16 %v884
        %v921 = vunpack.c.l.b16 %v885
        %v922 = vunpack.c.l.b16 %v886
        %v923 = vunpack.c.l.b16 %v887
        %v924 = vpack.c.b16 %v909, %v908
        %v925 = vpack.c.b16 %v911, %v910
        %v926 = vpack.c.b16 %v913, %v912
        %v927 = vpack.c.b16 %v915, %v914
        %v928 = vpack.c.b16 %v917, %v916
        %v929 = vpack.c.b16 %v919, %v918
        %v930 = vpack.c.b16 %v921, %v920
        %v931 = vpack.c.b16 %v923, %v922
        %940 = vmatprep.subr.bf16.mxu0 0
        %941 = vmatpush1.bf16.msra.mxu0 %v924
        %942 = vmatprep.subr.bf16.mxu0 0
        %943 = vmatpush1.bf16.msra.mxu0 %v925
        %944 = vmatprep.subr.bf16.mxu0 0
        %945 = vmatpush1.bf16.msra.mxu0 %v926
        %946 = vmatprep.subr.bf16.mxu0 0
        %947 = vmatpush1.bf16.msra.mxu0 %v927
        %948 = vmatprep.subr.bf16.mxu0 0
        %949 = vmatpush1.bf16.msra.mxu0 %v928
        %950 = vmatprep.subr.bf16.mxu0 0
        %951 = vmatpush1.bf16.msra.mxu0 %v929
        %952 = vmatprep.subr.bf16.mxu0 0
        %953 = vmatpush1.bf16.msra.mxu0 %v930
        %954 = vmatprep.subr.bf16.mxu0 0
        %955 = vmatpush1.bf16.msra.mxu0 %v931
        %956 = vmatprep.subr.bf16.mxu0 0
        %957 = vmatpush1.bf16.msra.mxu0 0
        %958 = vmatprep.subr.bf16.mxu0 0
        %959 = vmatpush1.bf16.msra.mxu0 0
        %960 = vmatprep.subr.bf16.mxu0 0
        %961 = vmatpush1.bf16.msra.mxu0 0
        %962 = vmatprep.subr.bf16.mxu0 0
        %963 = vmatpush1.bf16.msra.mxu0 0
        %964 = vmatprep.subr.bf16.mxu0 0
        %965 = vmatpush1.bf16.msra.mxu0 0
        %966 = vmatprep.subr.bf16.mxu0 0
        %967 = vmatpush1.bf16.msra.mxu0 0
        %968 = vmatprep.subr.bf16.mxu0 0
        %969 = vmatpush1.bf16.msra.mxu0 0
        %970 = vmatprep.subr.bf16.mxu0 0
        %971 = vmatpush1.bf16.msra.mxu0 0
        %972 = vmatprep.mubr.bf16.mxu0 0
        %973 = vmatmul.mubr.bf16.gmra.mrb[0].mxu0 %v856
        %v974 = vpop.f32.mrb[0].mxu0
        %v975 = vadd.f32 %v891, %v974
        %v976 = vpop.f32.mrb[0].mxu0
        %v977 = vpop.f32.mrb[0].mxu0
        %v978 = vadd.f32 %v891, %v977
        %v979 = vpop.f32.mrb[0].mxu0
        %980 = vmatprep.mubr.bf16.mxu0 0
        %981 = vmatmul.mubr.bf16.gmra.mrb[0].mxu0 %v857
        %v982 = vpop.f32.mrb[0].mxu0
        %v983 = vadd.f32 %v891, %v982
        %v984 = vpop.f32.mrb[0].mxu0
        %v985 = vpop.f32.mrb[0].mxu0
        %v986 = vadd.f32 %v891, %v985
        %v987 = vpop.f32.mrb[0].mxu0
        %988 = vmatprep.mubr.bf16.mxu0 0
        %989 = vmatmul.mubr.bf16.gmra.mrb[0].mxu0 %v858
        %v990 = vpop.f32.mrb[0].mxu0
        %v991 = vadd.f32 %v891, %v990
        %v992 = vpop.f32.mrb[0].mxu0
        %v993 = vpop.f32.mrb[0].mxu0
        %v994 = vadd.f32 %v891, %v993
        %v995 = vpop.f32.mrb[0].mxu0
        %996 = vmatprep.mubr.bf16.mxu0 0
        %997 = vmatmul.mubr.bf16.gmra.mrb[0].mxu0 %v859
        %v998 = vpop.f32.mrb[0].mxu0
        %v999 = vadd.f32 %v891, %v998
        %v1000 = vpop.f32.mrb[0].mxu0
        %v1001 = vpop.f32.mrb[0].mxu0
        %v1002 = vadd.f32 %v891, %v1001
        %v1003 = vpop.f32.mrb[0].mxu0
        %1004 = vmatprep.mubr.bf16.mxu0 0
        %1005 = vmatmul.mubr.bf16.gmra.mrb[0].mxu0 %v860
        %v1006 = vpop.f32.mrb[0].mxu0
        %v1007 = vadd.f32 %v891, %v1006
        %v1008 = vpop.f32.mrb[0].mxu0
        %v1009 = vpop.f32.mrb[0].mxu0
        %v1010 = vadd.f32 %v891, %v1009
        %v1011 = vpop.f32.mrb[0].mxu0
        %1012 = vmatprep.mubr.bf16.mxu0 0
        %1013 = vmatmul.mubr.bf16.gmra.mrb[0].mxu0 %v861
        %v1014 = vpop.f32.mrb[0].mxu0
        %v1015 = vadd.f32 %v891, %v1014
        %v1016 = vpop.f32.mrb[0].mxu0
        %v1017 = vpop.f32.mrb[0].mxu0
        %v1018 = vadd.f32 %v891, %v1017
        %v1019 = vpop.f32.mrb[0].mxu0
        %1020 = vmatprep.mubr.bf16.mxu0 0
        %1021 = vmatmul.mubr.bf16.gmra.mrb[0].mxu0 %v862
        %v1022 = vpop.f32.mrb[0].mxu0
        %v1023 = vadd.f32 %v891, %v1022
        %v1024 = vpop.f32.mrb[0].mxu0
        %v1025 = vpop.f32.mrb[0].mxu0
        %v1026 = vadd.f32 %v891, %v1025
        %v1027 = vpop.f32.mrb[0].mxu0
        %1028 = vmatprep.mubr.bf16.mxu0 0
        %1029 = vmatmul.mubr.bf16.gmra.mrb[0].mxu0 %v863
        %v1030 = vpop.f32.mrb[0].mxu0
        %v1031 = vadd.f32 %v891, %v1030
        %v1032 = vpop.f32.mrb[0].mxu0
        %v1033 = vpop.f32.mrb[0].mxu0
        %v1034 = vadd.f32 %v891, %v1033
        %v1035 = vpop.f32.mrb[0].mxu0
        %1036 = vmatprep.mubr.bf16.mxu0 0
        %1037 = vmatmul.mubr.bf16.gmra.mrb[0].mxu0 %v864
        %v1038 = vpop.f32.mrb[0].mxu0
        %v1039 = vadd.f32 %v891, %v1038
        %v1040 = vpop.f32.mrb[0].mxu0
        %v1041 = vpop.f32.mrb[0].mxu0
        %v1042 = vadd.f32 %v891, %v1041
        %v1043 = vpop.f32.mrb[0].mxu0
        %1044 = vmatprep.mubr.bf16.mxu0 0
        %1045 = vmatmul.mubr.bf16.gmra.mrb[0].mxu0 %v865
        %v1046 = vpop.f32.mrb[0].mxu0
        %v1047 = vadd.f32 %v891, %v1046
        %v1048 = vpop.f32.mrb[0].mxu0
        %v1049 = vpop.f32.mrb[0].mxu0
        %v1050 = vadd.f32 %v891, %v1049
        %v1051 = vpop.f32.mrb[0].mxu0
        %1052 = vmatprep.mubr.bf16.mxu0 0
        %1053 = vmatmul.mubr.bf16.gmra.mrb[0].mxu0 %v866
        %v1054 = vpop.f32.mrb[0].mxu0
        %v1055 = vadd.f32 %v891, %v1054
        %v1056 = vpop.f32.mrb[0].mxu0
        %v1057 = vpop.f32.mrb[0].mxu0
        %v1058 = vadd.f32 %v891, %v1057
        %v1059 = vpop.f32.mrb[0].mxu0
        %1060 = vmatprep.mubr.bf16.mxu0 0
        %1061 = vmatmul.mubr.bf16.gmra.mrb[0].mxu0 %v867
        %v1062 = vpop.f32.mrb[0].mxu0
        %v1063 = vadd.f32 %v891, %v1062
        %v1064 = vpop.f32.mrb[0].mxu0
        %v1065 = vpop.f32.mrb[0].mxu0
        %v1066 = vadd.f32 %v891, %v1065
        %v1067 = vpop.f32.mrb[0].mxu0
        %1068 = vmatprep.mubr.bf16.mxu0 0
        %1069 = vmatmul.mubr.bf16.gmra.mrb[0].mxu0 %v868
        %v1070 = vpop.f32.mrb[0].mxu0
        %v1071 = vadd.f32 %v891, %v1070
        %v1072 = vpop.f32.mrb[0].mxu0
        %v1073 = vpop.f32.mrb[0].mxu0
        %v1074 = vadd.f32 %v891, %v1073
        %v1075 = vpop.f32.mrb[0].mxu0
        %1076 = vmatprep.mubr.bf16.mxu0 0
        %1077 = vmatmul.mubr.bf16.gmra.mrb[0].mxu0 %v869
        %v1078 = vpop.f32.mrb[0].mxu0
        %v1079 = vadd.f32 %v891, %v1078
        %v1080 = vpop.f32.mrb[0].mxu0
        %v1081 = vpop.f32.mrb[0].mxu0
        %v1082 = vadd.f32 %v891, %v1081
        %v1083 = vpop.f32.mrb[0].mxu0
        %1084 = vmatprep.mubr.bf16.mxu0 0
        %1085 = vmatmul.mubr.bf16.gmra.mrb[0].mxu0 %v870
        %v1086 = vpop.f32.mrb[0].mxu0
        %v1087 = vadd.f32 %v891, %v1086
        %v1088 = vpop.f32.mrb[0].mxu0
        %v1089 = vpop.f32.mrb[0].mxu0
        %v1090 = vadd.f32 %v891, %v1089
        %v1091 = vpop.f32.mrb[0].mxu0
        %1092 = vmatprep.mubr.bf16.mxu0 0
        %1093 = vmatmul.mubr.bf16.gmra.mrb[0].mxu0 %v871
        %v1094 = vpop.f32.mrb[0].mxu0
        %v1095 = vadd.f32 %v891, %v1094
        %v1096 = vpop.f32.mrb[0].mxu0
        %v1097 = vpop.f32.mrb[0].mxu0
        %v1098 = vadd.f32 %v891, %v1097
        %v1099 = vpop.f32.mrb[0].mxu0
        %1100 = vdwg.mxu0
        %v1101 = vmul.f32 %v975, %v975
        %v1102 = vmul.f32 %v978, %v978
        %v1103 = vmul.f32 %v983, %v983
        %v1104 = vmul.f32 %v986, %v986
        %v1105 = vmul.f32 %v991, %v991
        %v1106 = vmul.f32 %v994, %v994
        %v1107 = vmul.f32 %v999, %v999
        %v1108 = vmul.f32 %v1002, %v1002
        %v1109 = vmul.f32 %v1007, %v1007
        %v1110 = vmul.f32 %v1010, %v1010
        %v1111 = vmul.f32 %v1015, %v1015
        %v1112 = vmul.f32 %v1018, %v1018
        %v1113 = vmul.f32 %v1023, %v1023
        %v1114 = vmul.f32 %v1026, %v1026
        %v1115 = vmul.f32 %v1031, %v1031
        %v1116 = vmul.f32 %v1034, %v1034
        %v1117 = vmul.f32 %v1039, %v1039
        %v1118 = vmul.f32 %v1042, %v1042
        %v1119 = vmul.f32 %v1047, %v1047
        %v1120 = vmul.f32 %v1050, %v1050
        %v1121 = vmul.f32 %v1055, %v1055
        %v1122 = vmul.f32 %v1058, %v1058
        %v1123 = vmul.f32 %v1063, %v1063
        %v1124 = vmul.f32 %v1066, %v1066
        %v1125 = vmul.f32 %v1071, %v1071
        %v1126 = vmul.f32 %v1074, %v1074
        %v1127 = vmul.f32 %v1079, %v1079
        %v1128 = vmul.f32 %v1082, %v1082
        %v1129 = vmul.f32 %v1087, %v1087
        %v1130 = vmul.f32 %v1090, %v1090
        %v1131 = vmul.f32 %v1095, %v1095
        %v1132 = vmul.f32 %v1098, %v1098
        %v1133 = vmul.f32 %v975, %v1101
        %v1134 = vmul.f32 %v978, %v1102
        %v1135 = vmul.f32 %v983, %v1103
        %v1136 = vmul.f32 %v986, %v1104
        %v1137 = vmul.f32 %v991, %v1105
        %v1138 = vmul.f32 %v994, %v1106
        %v1139 = vmul.f32 %v999, %v1107
        %v1140 = vmul.f32 %v1002, %v1108
        %v1141 = vmul.f32 %v1007, %v1109
        %v1142 = vmul.f32 %v1010, %v1110
        %v1143 = vmul.f32 %v1015, %v1111
        %v1144 = vmul.f32 %v1018, %v1112
        %v1145 = vmul.f32 %v1023, %v1113
        %v1146 = vmul.f32 %v1026, %v1114
        %v1147 = vmul.f32 %v1031, %v1115
        %v1148 = vmul.f32 %v1034, %v1116
        %v1149 = vmul.f32 %v1039, %v1117
        %v1150 = vmul.f32 %v1042, %v1118
        %v1151 = vmul.f32 %v1047, %v1119
        %v1152 = vmul.f32 %v1050, %v1120
        %v1153 = vmul.f32 %v1055, %v1121
        %v1154 = vmul.f32 %v1058, %v1122
        %v1155 = vmul.f32 %v1063, %v1123
        %v1156 = vmul.f32 %v1066, %v1124
        %v1157 = vmul.f32 %v1071, %v1125
        %v1158 = vmul.f32 %v1074, %v1126
        %v1159 = vmul.f32 %v1079, %v1127
        %v1160 = vmul.f32 %v1082, %v1128
        %v1161 = vmul.f32 %v1087, %v1129
        %v1162 = vmul.f32 %v1090, %v1130
        %v1163 = vmul.f32 %v1095, %v1131
        %v1164 = vmul.f32 %v1098, %v1132
        %v1165 = vmul.f32 %v1133, 0.044715
        %v1166 = vmul.f32 %v1134, 0.044715
        %v1167 = vmul.f32 %v1135, 0.044715
        %v1168 = vmul.f32 %v1136, 0.044715
        %v1169 = vmul.f32 %v1137, 0.044715
        %v1170 = vmul.f32 %v1138, 0.044715
        %v1171 = vmul.f32 %v1139, 0.044715
        %v1172 = vmul.f32 %v1140, 0.044715
        %v1173 = vmul.f32 %v1141, 0.044715
        %v1174 = vmul.f32 %v1142, 0.044715
        %v1175 = vmul.f32 %v1143, 0.044715
        %v1176 = vmul.f32 %v1144, 0.044715
        %v1177 = vmul.f32 %v1145, 0.044715
        %v1178 = vmul.f32 %v1146, 0.044715
        %v1179 = vmul.f32 %v1147, 0.044715
        %v1180 = vmul.f32 %v1148, 0.044715
        %v1181 = vmul.f32 %v1149, 0.044715
        %v1182 = vmul.f32 %v1150, 0.044715
        %v1183 = vmul.f32 %v1151, 0.044715
        %v1184 = vmul.f32 %v1152, 0.044715
        %v1185 = vmul.f32 %v1153, 0.044715
        %v1186 = vmul.f32 %v1154, 0.044715
        %v1187 = vmul.f32 %v1155, 0.044715
        %v1188 = vmul.f32 %v1156, 0.044715
        %v1189 = vmul.f32 %v1157, 0.044715
        %v1190 = vmul.f32 %v1158, 0.044715
        %v1191 = vmul.f32 %v1159, 0.044715
        %v1192 = vmul.f32 %v1160, 0.044715
        %v1193 = vmul.f32 %v1161, 0.044715
        %v1194 = vmul.f32 %v1162, 0.044715
        %v1195 = vmul.f32 %v1163, 0.044715
        %v1196 = vmul.f32 %v1164, 0.044715
        %v1197 = vadd.f32 %v975, %v1165
        %v1198 = vadd.f32 %v978, %v1166
        %v1199 = vadd.f32 %v983, %v1167
        %v1200 = vadd.f32 %v986, %v1168
        %v1201 = vadd.f32 %v991, %v1169
        %v1202 = vadd.f32 %v994, %v1170
        %v1203 = vadd.f32 %v999, %v1171
        %v1204 = vadd.f32 %v1002, %v1172
        %v1205 = vadd.f32 %v1007, %v1173
        %v1206 = vadd.f32 %v1010, %v1174
        %v1207 = vadd.f32 %v1015, %v1175
        %v1208 = vadd.f32 %v1018, %v1176
        %v1209 = vadd.f32 %v1023, %v1177
        %v1210 = vadd.f32 %v1026, %v1178
        %v1211 = vadd.f32 %v1031, %v1179
        %v1212 = vadd.f32 %v1034, %v1180
        %v1213 = vadd.f32 %v1039, %v1181
        %v1214 = vadd.f32 %v1042, %v1182
        %v1215 = vadd.f32 %v1047, %v1183
        %v1216 = vadd.f32 %v1050, %v1184
        %v1217 = vadd.f32 %v1055, %v1185
        %v1218 = vadd.f32 %v1058, %v1186
        %v1219 = vadd.f32 %v1063, %v1187
        %v1220 = vadd.f32 %v1066, %v1188
        %v1221 = vadd.f32 %v1071, %v1189
        %v1222 = vadd.f32 %v1074, %v1190
        %v1223 = vadd.f32 %v1079, %v1191
        %v1224 = vadd.f32 %v1082, %v1192
        %v1225 = vadd.f32 %v1087, %v1193
        %v1226 = vadd.f32 %v1090, %v1194
        %v1227 = vadd.f32 %v1095, %v1195
        %v1228 = vadd.f32 %v1098, %v1196
        %v1229 = vmul.f32 %v1197, 0.7978846
        %v1230 = vmul.f32 %v1198, 0.7978846
        %v1231 = vmul.f32 %v1199, 0.7978846
        %v1232 = vmul.f32 %v1200, 0.7978846
        %v1233 = vmul.f32 %v1201, 0.7978846
        %v1234 = vmul.f32 %v1202, 0.7978846
        %v1235 = vmul.f32 %v1203, 0.7978846
        %v1236 = vmul.f32 %v1204, 0.7978846
        %v1237 = vmul.f32 %v1205, 0.7978846
        %v1238 = vmul.f32 %v1206, 0.7978846
        %v1239 = vmul.f32 %v1207, 0.7978846
        %v1240 = vmul.f32 %v1208, 0.7978846
        %v1241 = vmul.f32 %v1209, 0.7978846
        %v1242 = vmul.f32 %v1210, 0.7978846
        %v1243 = vmul.f32 %v1211, 0.7978846
        %v1244 = vmul.f32 %v1212, 0.7978846
        %v1245 = vmul.f32 %v1213, 0.7978846
        %v1246 = vmul.f32 %v1214, 0.7978846
        %v1247 = vmul.f32 %v1215, 0.7978846
        %v1248 = vmul.f32 %v1216, 0.7978846
        %v1249 = vmul.f32 %v1217, 0.7978846
        %v1250 = vmul.f32 %v1218, 0.7978846
        %v1251 = vmul.f32 %v1219, 0.7978846
        %v1252 = vmul.f32 %v1220, 0.7978846
        %v1253 = vmul.f32 %v1221, 0.7978846
        %v1254 = vmul.f32 %v1222, 0.7978846
        %v1255 = vmul.f32 %v1223, 0.7978846
        %v1256 = vmul.f32 %v1224, 0.7978846
        %v1257 = vmul.f32 %v1225, 0.7978846
        %v1258 = vmul.f32 %v1226, 0.7978846
        %v1259 = vmul.f32 %v1227, 0.7978846
        %v1260 = vmul.f32 %v1228, 0.7978846
        %v1261 = vtanh.pop %v1229
        %v1262 = vtanh.pop %v1230
        %v1263 = vtanh.pop %v1231
        %v1264 = vtanh.pop %v1232
        %v1265 = vtanh.pop %v1233
        %v1266 = vtanh.pop %v1234
        %v1267 = vtanh.pop %v1235
        %v1268 = vtanh.pop %v1236
        %v1269 = vtanh.pop %v1237
        %v1270 = vtanh.pop %v1238
        %v1271 = vtanh.pop %v1239
        %v1272 = vtanh.pop %v1240
        %v1273 = vtanh.pop %v1241
        %v1274 = vtanh.pop %v1242
        %v1275 = vtanh.pop %v1243
        %v1276 = vtanh.pop %v1244
        %v1277 = vtanh.pop %v1245
        %v1278 = vtanh.pop %v1246
        %v1279 = vtanh.pop %v1247
        %v1280 = vtanh.pop %v1248
        %v1281 = vtanh.pop %v1249
        %v1282 = vtanh.pop %v1250
        %v1283 = vtanh.pop %v1251
        %v1284 = vtanh.pop %v1252
        %v1285 = vtanh.pop %v1253
        %v1286 = vtanh.pop %v1254
        %v1287 = vtanh.pop %v1255
        %v1288 = vtanh.pop %v1256
        %v1289 = vtanh.pop %v1257
        %v1290 = vtanh.pop %v1258
        %v1291 = vtanh.pop %v1259
        %v1292 = vtanh.pop %v1260
        %v1293 = vadd.f32 %v1261, 1.0
        %v1294 = vadd.f32 %v1262, 1.0
        %v1295 = vadd.f32 %v1263, 1.0
        %v1296 = vadd.f32 %v1264, 1.0
        %v1297 = vadd.f32 %v1265, 1.0
        %v1298 = vadd.f32 %v1266, 1.0
        %v1299 = vadd.f32 %v1267, 1.0
        %v1300 = vadd.f32 %v1268, 1.0
        %v1301 = vadd.f32 %v1269, 1.0
        %v1302 = vadd.f32 %v1270, 1.0
        %v1303 = vadd.f32 %v1271, 1.0
        %v1304 = vadd.f32 %v1272, 1.0
        %v1305 = vadd.f32 %v1273, 1.0
        %v1306 = vadd.f32 %v1274, 1.0
        %v1307 = vadd.f32 %v1275, 1.0
        %v1308 = vadd.f32 %v1276, 1.0
        %v1309 = vadd.f32 %v1277, 1.0
        %v1310 = vadd.f32 %v1278, 1.0
        %v1311 = vadd.f32 %v1279, 1.0
        %v1312 = vadd.f32 %v1280, 1.0
        %v1313 = vadd.f32 %v1281, 1.0
        %v1314 = vadd.f32 %v1282, 1.0
        %v1315 = vadd.f32 %v1283, 1.0
        %v1316 = vadd.f32 %v1284, 1.0
        %v1317 = vadd.f32 %v1285, 1.0
        %v1318 = vadd.f32 %v1286, 1.0
        %v1319 = vadd.f32 %v1287, 1.0
        %v1320 = vadd.f32 %v1288, 1.0
        %v1321 = vadd.f32 %v1289, 1.0
        %v1322 = vadd.f32 %v1290, 1.0
        %v1323 = vadd.f32 %v1291, 1.0
        %v1324 = vadd.f32 %v1292, 1.0
        %v1325 = vmul.f32 %v1293, 0.5
        %v1326 = vmul.f32 %v1294, 0.5
        %v1327 = vmul.f32 %v1295, 0.5
        %v1328 = vmul.f32 %v1296, 0.5
        %v1329 = vmul.f32 %v1297, 0.5
        %v1330 = vmul.f32 %v1298, 0.5
        %v1331 = vmul.f32 %v1299, 0.5
        %v1332 = vmul.f32 %v1300, 0.5
        %v1333 = vmul.f32 %v1301, 0.5
        %v1334 = vmul.f32 %v1302, 0.5
        %v1335 = vmul.f32 %v1303, 0.5
        %v1336 = vmul.f32 %v1304, 0.5
        %v1337 = vmul.f32 %v1305, 0.5
        %v1338 = vmul.f32 %v1306, 0.5
        %v1339 = vmul.f32 %v1307, 0.5
        %v1340 = vmul.f32 %v1308, 0.5
        %v1341 = vmul.f32 %v1309, 0.5
        %v1342 = vmul.f32 %v1310, 0.5
        %v1343 = vmul.f32 %v1311, 0.5
        %v1344 = vmul.f32 %v1312, 0.5
        %v1345 = vmul.f32 %v1313, 0.5
        %v1346 = vmul.f32 %v1314, 0.5
        %v1347 = vmul.f32 %v1315, 0.5
        %v1348 = vmul.f32 %v1316, 0.5
        %v1349 = vmul.f32 %v1317, 0.5
        %v1350 = vmul.f32 %v1318, 0.5
        %v1351 = vmul.f32 %v1319, 0.5
        %v1352 = vmul.f32 %v1320, 0.5
        %v1353 = vmul.f32 %v1321, 0.5
        %v1354 = vmul.f32 %v1322, 0.5
        %v1355 = vmul.f32 %v1323, 0.5
        %v1356 = vmul.f32 %v1324, 0.5
        %v1357 = vmul.f32 %v975, %v1325
        %v1358 = vmul.f32 %v978, %v1326
        %v1359 = vmul.f32 %v983, %v1327
        %v1360 = vmul.f32 %v986, %v1328
        %v1361 = vmul.f32 %v991, %v1329
        %v1362 = vmul.f32 %v994, %v1330
        %v1363 = vmul.f32 %v999, %v1331
        %v1364 = vmul.f32 %v1002, %v1332
        %v1365 = vmul.f32 %v1007, %v1333
        %v1366 = vmul.f32 %v1010, %v1334
        %v1367 = vmul.f32 %v1015, %v1335
        %v1368 = vmul.f32 %v1018, %v1336
        %v1369 = vmul.f32 %v1023, %v1337
        %v1370 = vmul.f32 %v1026, %v1338
        %v1371 = vmul.f32 %v1031, %v1339
        %v1372 = vmul.f32 %v1034, %v1340
        %v1373 = vmul.f32 %v1039, %v1341
        %v1374 = vmul.f32 %v1042, %v1342
        %v1375 = vmul.f32 %v1047, %v1343
        %v1376 = vmul.f32 %v1050, %v1344
        %v1377 = vmul.f32 %v1055, %v1345
        %v1378 = vmul.f32 %v1058, %v1346
        %v1379 = vmul.f32 %v1063, %v1347
        %v1380 = vmul.f32 %v1066, %v1348
        %v1381 = vmul.f32 %v1071, %v1349
        %v1382 = vmul.f32 %v1074, %v1350
        %v1383 = vmul.f32 %v1079, %v1351
        %v1384 = vmul.f32 %v1082, %v1352
        %v1385 = vmul.f32 %v1087, %v1353
        %v1386 = vmul.f32 %v1090, %v1354
        %v1387 = vmul.f32 %v1095, %v1355
        %v1388 = vmul.f32 %v1098, %v1356
        %v1389 = vpack.c.bf16 %v1358, %v1357
        %v1390 = vpack.c.bf16 %v1360, %v1359
        %v1391 = vpack.c.bf16 %v1362, %v1361
        %v1392 = vpack.c.bf16 %v1364, %v1363
        %v1393 = vpack.c.bf16 %v1366, %v1365
        %v1394 = vpack.c.bf16 %v1368, %v1367
        %v1395 = vpack.c.bf16 %v1370, %v1369
        %v1396 = vpack.c.bf16 %v1372, %v1371
        %v1397 = vpack.c.bf16 %v1374, %v1373
        %v1398 = vpack.c.bf16 %v1376, %v1375
        %v1399 = vpack.c.bf16 %v1378, %v1377
        %v1400 = vpack.c.bf16 %v1380, %v1379
        %v1401 = vpack.c.bf16 %v1382, %v1381
        %v1402 = vpack.c.bf16 %v1384, %v1383
        %v1403 = vpack.c.bf16 %v1386, %v1385
        %v1404 = vpack.c.bf16 %v1388, %v1387
        %v1405 = vld [vmem:[%s1] sm:$0xff]
        %v1406 = vld [vmem:[%s1 + $0x8] sm:$0xff]
        %v1407 = vld [vmem:[%s1 + $0x10] sm:$0xff]
        %v1408 = vld [vmem:[%s1 + $0x18] sm:$0xff]
        %v1409 = vld [vmem:[%s1 + $0x20] sm:$0xff]
        %v1410 = vld [vmem:[%s1 + $0x28] sm:$0xff]
        %v1411 = vld [vmem:[%s1 + $0x30] sm:$0xff]
        %v1412 = vld [vmem:[%s1 + $0x38] sm:$0xff]
        %v1413 = vld [vmem:[%s1 + $0x40] sm:$0xff]
        %v1414 = vld [vmem:[%s1 + $0x48] sm:$0xff]
        %v1415 = vld [vmem:[%s1 + $0x50] sm:$0xff]
        %v1416 = vld [vmem:[%s1 + $0x58] sm:$0xff]
        %v1417 = vld [vmem:[%s1 + $0x60] sm:$0xff]
        %v1418 = vld [vmem:[%s1 + $0x68] sm:$0xff]
        %v1419 = vld [vmem:[%s1 + $0x70] sm:$0xff]
        %v1420 = vld [vmem:[%s1 + $0x78] sm:$0xff]
        %v1421 = vld [vmem:[%s1 + $0x80] sm:$0xff]
        %v1422 = vld [vmem:[%s1 + $0x88] sm:$0xff]
        %v1423 = vld [vmem:[%s1 + $0x90] sm:$0xff]
        %v1424 = vld [vmem:[%s1 + $0x98] sm:$0xff]
        %v1425 = vld [vmem:[%s1 + $0xa0] sm:$0xff]
        %v1426 = vld [vmem:[%s1 + $0xa8] sm:$0xff]
        %v1427 = vld [vmem:[%s1 + $0xb0] sm:$0xff]
        %v1428 = vld [vmem:[%s1 + $0xb8] sm:$0xff]
        %v1429 = vld [vmem:[%s1 + $0xc0] sm:$0xff]
        %v1430 = vld [vmem:[%s1 + $0xc8] sm:$0xff]
        %v1431 = vld [vmem:[%s1 + $0xd0] sm:$0xff]
        %v1432 = vld [vmem:[%s1 + $0xd8] sm:$0xff]
        %v1433 = vld [vmem:[%s1 + $0xe0] sm:$0xff]
        %v1434 = vld [vmem:[%s1 + $0xe8] sm:$0xff]
        %v1435 = vld [vmem:[%s1 + $0xf0] sm:$0xff]
        %v1436 = vld [vmem:[%s1 + $0xf8] sm:$0xff]
        %v1437 = vld [vmem:[%s1 + $0x100] sm:$0xff]
        %v1438 = vld [vmem:[%s1 + $0x108] sm:$0xff]
        %v1439 = vld [vmem:[%s1 + $0x110] sm:$0xff]
        %v1440 = vld [vmem:[%s1 + $0x118] sm:$0xff]
        %v1441 = vld [vmem:[%s1 + $0x120] sm:$0xff]
        %v1442 = vld [vmem:[%s1 + $0x128] sm:$0xff]
        %v1443 = vld [vmem:[%s1 + $0x130] sm:$0xff]
        %v1444 = vld [vmem:[%s1 + $0x138] sm:$0xff]
        %v1445 = vld [vmem:[%s1 + $0x140] sm:$0xff]
        %v1446 = vld [vmem:[%s1 + $0x148] sm:$0xff]
        %v1447 = vld [vmem:[%s1 + $0x150] sm:$0xff]
        %v1448 = vld [vmem:[%s1 + $0x158] sm:$0xff]
        %v1449 = vld [vmem:[%s1 + $0x160] sm:$0xff]
        %v1450 = vld [vmem:[%s1 + $0x168] sm:$0xff]
        %v1451 = vld [vmem:[%s1 + $0x170] sm:$0xff]
        %v1452 = vld [vmem:[%s1 + $0x178] sm:$0xff]
        %v1453 = vld [vmem:[%s1 + $0x180] sm:$0xff]
        %v1454 = vld [vmem:[%s1 + $0x188] sm:$0xff]
        %v1455 = vld [vmem:[%s1 + $0x190] sm:$0xff]
        %v1456 = vld [vmem:[%s1 + $0x198] sm:$0xff]
        %v1457 = vld [vmem:[%s1 + $0x1a0] sm:$0xff]
        %v1458 = vld [vmem:[%s1 + $0x1a8] sm:$0xff]
        %v1459 = vld [vmem:[%s1 + $0x1b0] sm:$0xff]
        %v1460 = vld [vmem:[%s1 + $0x1b8] sm:$0xff]
        %v1461 = vld [vmem:[%s1 + $0x1c0] sm:$0xff]
        %v1462 = vld [vmem:[%s1 + $0x1c8] sm:$0xff]
        %v1463 = vld [vmem:[%s1 + $0x1d0] sm:$0xff]
        %v1464 = vld [vmem:[%s1 + $0x1d8] sm:$0xff]
        %v1465 = vld [vmem:[%s1 + $0x1e0] sm:$0xff]
        %v1466 = vld [vmem:[%s1 + $0x1e8] sm:$0xff]
        %v1467 = vld [vmem:[%s1 + $0x1f0] sm:$0xff]
        %v1468 = vld [vmem:[%s1 + $0x1f8] sm:$0xff]
        %v1469 = vld [vmem:[%s1 + $0x200] sm:$0xff]
        %v1470 = vld [vmem:[%s1 + $0x208] sm:$0xff]
        %v1471 = vld [vmem:[%s1 + $0x210] sm:$0xff]
        %v1472 = vld [vmem:[%s1 + $0x218] sm:$0xff]
        %v1473 = vld [vmem:[%s1 + $0x220] sm:$0xff]
        %v1474 = vld [vmem:[%s1 + $0x228] sm:$0xff]
        %v1475 = vld [vmem:[%s1 + $0x230] sm:$0xff]
        %v1476 = vld [vmem:[%s1 + $0x238] sm:$0xff]
        %v1549 = vunpack.c.l.b16 %v1405
        %v1550 = vunpack.c.h.b16 %v1405
        %v1551 = vunpack.c.l.b16 %v1406
        %v1552 = vunpack.c.h.b16 %v1406
        %v1553 = vunpack.c.l.b16 %v1407
        %v1554 = vunpack.c.h.b16 %v1407
        %v1555 = vunpack.c.l.b16 %v1408
        %v1556 = vunpack.c.h.b16 %v1408
        %v1557 = vunpack.c.l.b16 %v1409
        %v1558 = vunpack.c.h.b16 %v1409
        %v1559 = vunpack.c.l.b16 %v1410
        %v1560 = vunpack.c.h.b16 %v1410
        %v1561 = vunpack.c.l.b16 %v1411
        %v1562 = vunpack.c.h.b16 %v1411
        %v1563 = vunpack.c.l.b16 %v1412
        %v1564 = vunpack.c.h.b16 %v1412
        %v1565 = vunpack.c.l.b16 %v1413
        %v1566 = vunpack.c.h.b16 %v1413
        %v1567 = vunpack.c.l.b16 %v1414
        %v1568 = vunpack.c.h.b16 %v1414
        %v1569 = vunpack.c.l.b16 %v1415
        %v1570 = vunpack.c.h.b16 %v1415
        %v1571 = vunpack.c.l.b16 %v1416
        %v1572 = vunpack.c.h.b16 %v1416
        %v1573 = vunpack.c.l.b16 %v1417
        %v1574 = vunpack.c.h.b16 %v1417
        %v1575 = vunpack.c.l.b16 %v1418
        %v1576 = vunpack.c.h.b16 %v1418
        %v1577 = vunpack.c.l.b16 %v1419
        %v1578 = vunpack.c.h.b16 %v1419
        %v1579 = vunpack.c.l.b16 %v1420
        %v1580 = vunpack.c.h.b16 %v1420
        %v1581 = vunpack.c.l.b16 %v1421
        %v1582 = vunpack.c.h.b16 %v1421
        %v1583 = vunpack.c.l.b16 %v1422
        %v1584 = vunpack.c.h.b16 %v1422
        %v1585 = vunpack.c.l.b16 %v1423
        %v1586 = vunpack.c.h.b16 %v1423
        %v1587 = vunpack.c.l.b16 %v1424
        %v1588 = vunpack.c.h.b16 %v1424
        %v1589 = vunpack.c.l.b16 %v1425
        %v1590 = vunpack.c.h.b16 %v1425
        %v1591 = vunpack.c.l.b16 %v1426
        %v1592 = vunpack.c.h.b16 %v1426
        %v1593 = vunpack.c.l.b16 %v1427
        %v1594 = vunpack.c.h.b16 %v1427
        %v1595 = vunpack.c.l.b16 %v1428
        %v1596 = vunpack.c.h.b16 %v1428
        %v1597 = vunpack.c.l.b16 %v1429
        %v1598 = vunpack.c.h.b16 %v1429
        %v1599 = vunpack.c.l.b16 %v1430
        %v1600 = vunpack.c.h.b16 %v1430
        %v1601 = vunpack.c.l.b16 %v1431
        %v1602 = vunpack.c.h.b16 %v1431
        %v1603 = vunpack.c.l.b16 %v1432
        %v1604 = vunpack.c.h.b16 %v1432
        %v1605 = vunpack.c.l.b16 %v1433
        %v1606 = vunpack.c.h.b16 %v1433
        %v1607 = vunpack.c.l.b16 %v1434
        %v1608 = vunpack.c.h.b16 %v1434
        %v1609 = vunpack.c.l.b16 %v1435
        %v1610 = vunpack.c.h.b16 %v1435
        %v1611 = vunpack.c.l.b16 %v1436
        %v1612 = vunpack.c.h.b16 %v1436
        %v1613 = vunpack.c.l.b16 %v1437
        %v1614 = vunpack.c.h.b16 %v1437
        %v1615 = vunpack.c.l.b16 %v1438
        %v1616 = vunpack.c.h.b16 %v1438
        %v1617 = vunpack.c.l.b16 %v1439
        %v1618 = vunpack.c.h.b16 %v1439
        %v1619 = vunpack.c.l.b16 %v1440
        %v1620 = vunpack.c.h.b16 %v1440
        %v1621 = vunpack.c.l.b16 %v1441
        %v1622 = vunpack.c.h.b16 %v1441
        %v1623 = vunpack.c.l.b16 %v1442
        %v1624 = vunpack.c.h.b16 %v1442
        %v1625 = vunpack.c.l.b16 %v1443
        %v1626 = vunpack.c.h.b16 %v1443
        %v1627 = vunpack.c.l.b16 %v1444
        %v1628 = vunpack.c.h.b16 %v1444
        %v1629 = vunpack.c.l.b16 %v1445
        %v1630 = vunpack.c.h.b16 %v1445
        %v1631 = vunpack.c.l.b16 %v1446
        %v1632 = vunpack.c.h.b16 %v1446
        %v1633 = vunpack.c.l.b16 %v1447
        %v1634 = vunpack.c.h.b16 %v1447
        %v1635 = vunpack.c.l.b16 %v1448
        %v1636 = vunpack.c.h.b16 %v1448
        %v1637 = vunpack.c.l.b16 %v1449
        %v1638 = vunpack.c.h.b16 %v1449
        %v1639 = vunpack.c.l.b16 %v1450
        %v1640 = vunpack.c.h.b16 %v1450
        %v1641 = vunpack.c.l.b16 %v1451
        %v1642 = vunpack.c.h.b16 %v1451
        %v1643 = vunpack.c.l.b16 %v1452
        %v1644 = vunpack.c.h.b16 %v1452
        %v1645 = vunpack.c.l.b16 %v1453
        %v1646 = vunpack.c.h.b16 %v1453
        %v1647 = vunpack.c.l.b16 %v1454
        %v1648 = vunpack.c.h.b16 %v1454
        %v1649 = vunpack.c.l.b16 %v1455
        %v1650 = vunpack.c.h.b16 %v1455
        %v1651 = vunpack.c.l.b16 %v1456
        %v1652 = vunpack.c.h.b16 %v1456
        %v1653 = vunpack.c.l.b16 %v1457
        %v1654 = vunpack.c.h.b16 %v1457
        %v1655 = vunpack.c.l.b16 %v1458
        %v1656 = vunpack.c.h.b16 %v1458
        %v1657 = vunpack.c.l.b16 %v1459
        %v1658 = vunpack.c.h.b16 %v1459
        %v1659 = vunpack.c.l.b16 %v1460
        %v1660 = vunpack.c.h.b16 %v1460
        %v1661 = vunpack.c.l.b16 %v1461
        %v1662 = vunpack.c.h.b16 %v1461
        %v1663 = vunpack.c.l.b16 %v1462
        %v1664 = vunpack.c.h.b16 %v1462
        %v1665 = vunpack.c.l.b16 %v1463
        %v1666 = vunpack.c.h.b16 %v1463
        %v1667 = vunpack.c.l.b16 %v1464
        %v1668 = vunpack.c.h.b16 %v1464
        %v1669 = vunpack.c.l.b16 %v1465
        %v1670 = vunpack.c.h.b16 %v1465
        %v1671 = vunpack.c.l.b16 %v1466
        %v1672 = vunpack.c.h.b16 %v1466
        %v1673 = vunpack.c.l.b16 %v1467
        %v1674 = vunpack.c.h.b16 %v1467
        %v1675 = vunpack.c.l.b16 %v1468
        %v1676 = vunpack.c.h.b16 %v1468
        %v1677 = vunpack.c.l.b16 %v1469
        %v1678 = vunpack.c.h.b16 %v1469
        %v1679 = vunpack.c.l.b16 %v1470
        %v1680 = vunpack.c.h.b16 %v1470
        %v1681 = vunpack.c.l.b16 %v1471
        %v1682 = vunpack.c.h.b16 %v1471
        %v1683 = vunpack.c.l.b16 %v1472
        %v1684 = vunpack.c.h.b16 %v1472
        %v1685 = vunpack.c.l.b16 %v1473
        %v1686 = vunpack.c.h.b16 %v1473
        %v1687 = vunpack.c.l.b16 %v1474
        %v1688 = vunpack.c.h.b16 %v1474
        %v1689 = vunpack.c.l.b16 %v1475
        %v1690 = vunpack.c.h.b16 %v1475
        %v1691 = vunpack.c.l.b16 %v1476
        %v1692 = vunpack.c.h.b16 %v1476
        %v1693 = vpack.c.b16 %v1551, %v1549
        %v1694 = vpack.c.b16 %v1552, %v1550
        %v1695 = vpack.c.b16 %v1555, %v1553
        %v1696 = vpack.c.b16 %v1556, %v1554
        %v1697 = vpack.c.b16 %v1559, %v1557
        %v1698 = vpack.c.b16 %v1560, %v1558
        %v1699 = vpack.c.b16 %v1563, %v1561
        %v1700 = vpack.c.b16 %v1564, %v1562
        %v1701 = vpack.c.b16 %v1567, %v1565
        %v1702 = vpack.c.b16 %v1568, %v1566
        %v1703 = vpack.c.b16 %v1571, %v1569
        %v1704 = vpack.c.b16 %v1572, %v1570
        %v1705 = vpack.c.b16 %v1575, %v1573
        %v1706 = vpack.c.b16 %v1576, %v1574
        %v1707 = vpack.c.b16 %v1579, %v1577
        %v1708 = vpack.c.b16 %v1580, %v1578
        %v1709 = vpack.c.b16 %v1583, %v1581
        %v1710 = vpack.c.b16 %v1584, %v1582
        %v1711 = vpack.c.b16 %v1587, %v1585
        %v1712 = vpack.c.b16 %v1588, %v1586
        %v1713 = vpack.c.b16 %v1591, %v1589
        %v1714 = vpack.c.b16 %v1592, %v1590
        %v1715 = vpack.c.b16 %v1595, %v1593
        %v1716 = vpack.c.b16 %v1596, %v1594
        %v1717 = vpack.c.b16 %v1599, %v1597
        %v1718 = vpack.c.b16 %v1600, %v1598
        %v1719 = vpack.c.b16 %v1603, %v1601
        %v1720 = vpack.c.b16 %v1604, %v1602
        %v1721 = vpack.c.b16 %v1607, %v1605
        %v1722 = vpack.c.b16 %v1608, %v1606
        %v1723 = vpack.c.b16 %v1611, %v1609
        %v1724 = vpack.c.b16 %v1612, %v1610
        %v1725 = vpack.c.b16 %v1615, %v1613
        %v1726 = vpack.c.b16 %v1616, %v1614
        %v1727 = vpack.c.b16 %v1619, %v1617
        %v1728 = vpack.c.b16 %v1620, %v1618
        %v1729 = vpack.c.b16 %v1623, %v1621
        %v1730 = vpack.c.b16 %v1624, %v1622
        %v1731 = vpack.c.b16 %v1627, %v1625
        %v1732 = vpack.c.b16 %v1628, %v1626
        %v1733 = vpack.c.b16 %v1631, %v1629
        %v1734 = vpack.c.b16 %v1632, %v1630
        %v1735 = vpack.c.b16 %v1635, %v1633
        %v1736 = vpack.c.b16 %v1636, %v1634
        %v1737 = vpack.c.b16 %v1639, %v1637
        %v1738 = vpack.c.b16 %v1640, %v1638
        %v1739 = vpack.c.b16 %v1643, %v1641
        %v1740 = vpack.c.b16 %v1644, %v1642
        %v1741 = vpack.c.b16 %v1647, %v1645
        %v1742 = vpack.c.b16 %v1648, %v1646
        %v1743 = vpack.c.b16 %v1651, %v1649
        %v1744 = vpack.c.b16 %v1652, %v1650
        %v1745 = vpack.c.b16 %v1655, %v1653
        %v1746 = vpack.c.b16 %v1656, %v1654
        %v1747 = vpack.c.b16 %v1659, %v1657
        %v1748 = vpack.c.b16 %v1660, %v1658
        %v1749 = vpack.c.b16 %v1663, %v1661
        %v1750 = vpack.c.b16 %v1664, %v1662
        %v1751 = vpack.c.b16 %v1667, %v1665
        %v1752 = vpack.c.b16 %v1668, %v1666
        %v1753 = vpack.c.b16 %v1671, %v1669
        %v1754 = vpack.c.b16 %v1672, %v1670
        %v1755 = vpack.c.b16 %v1675, %v1673
        %v1756 = vpack.c.b16 %v1676, %v1674
        %v1757 = vpack.c.b16 %v1679, %v1677
        %v1758 = vpack.c.b16 %v1680, %v1678
        %v1759 = vpack.c.b16 %v1683, %v1681
        %v1760 = vpack.c.b16 %v1684, %v1682
        %v1761 = vpack.c.b16 %v1687, %v1685
        %v1762 = vpack.c.b16 %v1688, %v1686
        %v1763 = vpack.c.b16 %v1691, %v1689
        %v1764 = vpack.c.b16 %v1692, %v1690
        %1837 = vmatprep.subr.bf16.mxu0 0
        %1838 = vmatpush1.bf16.msra.mxu0 %v1389
        %1839 = vmatprep.subr.bf16.mxu0 0
        %1840 = vmatpush1.bf16.msra.mxu0 %v1390
        %1841 = vmatprep.subr.bf16.mxu0 0
        %1842 = vmatpush1.bf16.msra.mxu0 %v1391
        %1843 = vmatprep.subr.bf16.mxu0 0
        %1844 = vmatpush1.bf16.msra.mxu0 %v1392
        %1845 = vmatprep.subr.bf16.mxu0 0
        %1846 = vmatpush1.bf16.msra.mxu0 %v1393
        %1847 = vmatprep.subr.bf16.mxu0 0
        %1848 = vmatpush1.bf16.msra.mxu0 %v1394
        %1849 = vmatprep.subr.bf16.mxu0 0
        %1850 = vmatpush1.bf16.msra.mxu0 %v1395
        %1851 = vmatprep.subr.bf16.mxu0 0
        %1852 = vmatpush1.bf16.msra.mxu0 %v1396
        %1853 = vmatprep.subr.bf16.mxu0 0
        %1854 = vmatpush1.bf16.msra.mxu0 %v1397
        %1855 = vmatprep.subr.bf16.mxu0 0
        %1856 = vmatpush1.bf16.msra.mxu0 %v1398
        %1857 = vmatprep.subr.bf16.mxu0 0
        %1858 = vmatpush1.bf16.msra.mxu0 %v1399
        %1859 = vmatprep.subr.bf16.mxu0 0
        %1860 = vmatpush1.bf16.msra.mxu0 %v1400
        %1861 = vmatprep.subr.bf16.mxu0 0
        %1862 = vmatpush1.bf16.msra.mxu0 %v1401
        %1863 = vmatprep.subr.bf16.mxu0 0
        %1864 = vmatpush1.bf16.msra.mxu0 %v1402
        %1865 = vmatprep.subr.bf16.mxu0 0
        %1866 = vmatpush1.bf16.msra.mxu0 %v1403
        %1867 = vmatprep.subr.bf16.mxu0 0
        %1868 = vmatpush1.bf16.msra.mxu0 %v1404
        %1869 = vmatprep.mubr.bf16.mxu0 %v1694
        %1870 = vmatmul.mubr.bf16.gmra.mrb[0].mxu0 %v1693
        %v1871 = vpop.f32.mrb[0].mxu0
        %v1872 = vadd.f32 0.0, %v1871
        %v1873 = vpop.f32.mrb[0].mxu0
        %v1874 = vpop.f32.mrb[0].mxu0
        %v1875 = vadd.f32 0.0, %v1874
        %v1876 = vpop.f32.mrb[0].mxu0
        %1877 = vmatprep.mubr.bf16.mxu0 %v1696
        %1878 = vmatmul.mubr.bf16.gmra.mrb[0].mxu0 %v1695
        %v1879 = vpop.f32.mrb[0].mxu0
        %v1880 = vadd.f32 0.0, %v1879
        %v1881 = vpop.f32.mrb[0].mxu0
        %v1882 = vpop.f32.mrb[0].mxu0
        %v1883 = vadd.f32 0.0, %v1882
        %v1884 = vpop.f32.mrb[0].mxu0
        %1885 = vmatprep.mubr.bf16.mxu0 %v1698
        %1886 = vmatmul.mubr.bf16.gmra.mrb[0].mxu0 %v1697
        %v1887 = vpop.f32.mrb[0].mxu0
        %v1888 = vadd.f32 0.0, %v1887
        %v1889 = vpop.f32.mrb[0].mxu0
        %v1890 = vpop.f32.mrb[0].mxu0
        %v1891 = vadd.f32 0.0, %v1890
        %v1892 = vpop.f32.mrb[0].mxu0
        %1893 = vmatprep.mubr.bf16.mxu0 %v1700
        %1894 = vmatmul.mubr.bf16.gmra.mrb[0].mxu0 %v1699
        %v1895 = vpop.f32.mrb[0].mxu0
        %v1896 = vadd.f32 0.0, %v1895
        %v1897 = vpop.f32.mrb[0].mxu0
        %v1898 = vpop.f32.mrb[0].mxu0
        %v1899 = vadd.f32 0.0, %v1898
        %v1900 = vpop.f32.mrb[0].mxu0
        %1901 = vmatprep.mubr.bf16.mxu0 %v1702
        %1902 = vmatmul.mubr.bf16.gmra.mrb[0].mxu0 %v1701
        %v1903 = vpop.f32.mrb[0].mxu0
        %v1904 = vadd.f32 0.0, %v1903
        %v1905 = vpop.f32.mrb[0].mxu0
        %v1906 = vpop.f32.mrb[0].mxu0
        %v1907 = vadd.f32 0.0, %v1906
        %v1908 = vpop.f32.mrb[0].mxu0
        %1909 = vmatprep.mubr.bf16.mxu0 %v1704
        %1910 = vmatmul.mubr.bf16.gmra.mrb[0].mxu0 %v1703
        %v1911 = vpop.f32.mrb[0].mxu0
        %v1912 = vadd.f32 0.0, %v1911
        %v1913 = vpop.f32.mrb[0].mxu0
        %v1914 = vpop.f32.mrb[0].mxu0
        %v1915 = vadd.f32 0.0, %v1914
        %v1916 = vpop.f32.mrb[0].mxu0
        %1917 = vmatprep.mubr.bf16.mxu0 %v1706
        %1918 = vmatmul.mubr.bf16.gmra.mrb[0].mxu0 %v1705
        %v1919 = vpop.f32.mrb[0].mxu0
        %v1920 = vadd.f32 0.0, %v1919
        %v1921 = vpop.f32.mrb[0].mxu0
        %v1922 = vpop.f32.mrb[0].mxu0
        %v1923 = vadd.f32 0.0, %v1922
        %v1924 = vpop.f32.mrb[0].mxu0
        %1925 = vmatprep.mubr.bf16.mxu0 %v1708
        %1926 = vmatmul.mubr.bf16.gmra.mrb[0].mxu0 %v1707
        %v1927 = vpop.f32.mrb[0].mxu0
        %v1928 = vadd.f32 0.0, %v1927
        %v1929 = vpop.f32.mrb[0].mxu0
        %v1930 = vpop.f32.mrb[0].mxu0
        %v1931 = vadd.f32 0.0, %v1930
        %v1932 = vpop.f32.mrb[0].mxu0
        %1933 = vmatprep.mubr.bf16.mxu0 %v1710
        %1934 = vmatmul.mubr.bf16.gmra.mrb[0].mxu0 %v1709
        %v1935 = vpop.f32.mrb[0].mxu0
        %v1936 = vadd.f32 0.0, %v1935
        %v1937 = vpop.f32.mrb[0].mxu0
        %v1938 = vpop.f32.mrb[0].mxu0
        %v1939 = vadd.f32 0.0, %v1938
        %v1940 = vpop.f32.mrb[0].mxu0
        %1941 = vmatprep.mubr.bf16.mxu0 %v1712
        %1942 = vmatmul.mubr.bf16.gmra.mrb[0].mxu0 %v1711
        %v1943 = vpop.f32.mrb[0].mxu0
        %v1944 = vadd.f32 0.0, %v1943
        %v1945 = vpop.f32.mrb[0].mxu0
        %v1946 = vpop.f32.mrb[0].mxu0
        %v1947 = vadd.f32 0.0, %v1946
        %v1948 = vpop.f32.mrb[0].mxu0
        %1949 = vmatprep.mubr.bf16.mxu0 %v1714
        %1950 = vmatmul.mubr.bf16.gmra.mrb[0].mxu0 %v1713
        %v1951 = vpop.f32.mrb[0].mxu0
        %v1952 = vadd.f32 0.0, %v1951
        %v1953 = vpop.f32.mrb[0].mxu0
        %v1954 = vpop.f32.mrb[0].mxu0
        %v1955 = vadd.f32 0.0, %v1954
        %v1956 = vpop.f32.mrb[0].mxu0
        %1957 = vmatprep.mubr.bf16.mxu0 %v1716
        %1958 = vmatmul.mubr.bf16.gmra.mrb[0].mxu0 %v1715
        %v1959 = vpop.f32.mrb[0].mxu0
        %v1960 = vadd.f32 0.0, %v1959
        %v1961 = vpop.f32.mrb[0].mxu0
        %v1962 = vpop.f32.mrb[0].mxu0
        %v1963 = vadd.f32 0.0, %v1962
        %v1964 = vpop.f32.mrb[0].mxu0
        %1965 = vmatprep.mubr.bf16.mxu0 %v1718
        %1966 = vmatmul.mubr.bf16.gmra.mrb[0].mxu0 %v1717
        %v1967 = vpop.f32.mrb[0].mxu0
        %v1968 = vadd.f32 0.0, %v1967
        %v1969 = vpop.f32.mrb[0].mxu0
        %v1970 = vpop.f32.mrb[0].mxu0
        %v1971 = vadd.f32 0.0, %v1970
        %v1972 = vpop.f32.mrb[0].mxu0
        %1973 = vmatprep.mubr.bf16.mxu0 %v1720
        %1974 = vmatmul.mubr.bf16.gmra.mrb[0].mxu0 %v1719
        %v1975 = vpop.f32.mrb[0].mxu0
        %v1976 = vadd.f32 0.0, %v1975
        %v1977 = vpop.f32.mrb[0].mxu0
        %v1978 = vpop.f32.mrb[0].mxu0
        %v1979 = vadd.f32 0.0, %v1978
        %v1980 = vpop.f32.mrb[0].mxu0
        %1981 = vmatprep.mubr.bf16.mxu0 %v1722
        %1982 = vmatmul.mubr.bf16.gmra.mrb[0].mxu0 %v1721
        %v1983 = vpop.f32.mrb[0].mxu0
        %v1984 = vadd.f32 0.0, %v1983
        %v1985 = vpop.f32.mrb[0].mxu0
        %v1986 = vpop.f32.mrb[0].mxu0
        %v1987 = vadd.f32 0.0, %v1986
        %v1988 = vpop.f32.mrb[0].mxu0
        %1989 = vmatprep.mubr.bf16.mxu0 %v1724
        %1990 = vmatmul.mubr.bf16.gmra.mrb[0].mxu0 %v1723
        %v1991 = vpop.f32.mrb[0].mxu0
        %v1992 = vadd.f32 0.0, %v1991
        %v1993 = vpop.f32.mrb[0].mxu0
        %v1994 = vpop.f32.mrb[0].mxu0
        %v1995 = vadd.f32 0.0, %v1994
        %v1996 = vpop.f32.mrb[0].mxu0
        %1997 = vmatprep.mubr.bf16.mxu0 %v1726
        %1998 = vmatmul.mubr.bf16.gmra.mrb[0].mxu0 %v1725
        %v1999 = vpop.f32.mrb[0].mxu0
        %v2000 = vadd.f32 0.0, %v1999
        %v2001 = vpop.f32.mrb[0].mxu0
        %v2002 = vpop.f32.mrb[0].mxu0
        %v2003 = vadd.f32 0.0, %v2002
        %v2004 = vpop.f32.mrb[0].mxu0
        %2005 = vmatprep.mubr.bf16.mxu0 %v1728
        %2006 = vmatmul.mubr.bf16.gmra.mrb[0].mxu0 %v1727
        %v2007 = vpop.f32.mrb[0].mxu0
        %v2008 = vadd.f32 0.0, %v2007
        %v2009 = vpop.f32.mrb[0].mxu0
        %v2010 = vpop.f32.mrb[0].mxu0
        %v2011 = vadd.f32 0.0, %v2010
        %v2012 = vpop.f32.mrb[0].mxu0
        %2013 = vmatprep.mubr.bf16.mxu0 %v1730
        %2014 = vmatmul.mubr.bf16.gmra.mrb[0].mxu0 %v1729
        %v2015 = vpop.f32.mrb[0].mxu0
        %v2016 = vadd.f32 0.0, %v2015
        %v2017 = vpop.f32.mrb[0].mxu0
        %v2018 = vpop.f32.mrb[0].mxu0
        %v2019 = vadd.f32 0.0, %v2018
        %v2020 = vpop.f32.mrb[0].mxu0
        %2021 = vmatprep.mubr.bf16.mxu0 %v1732
        %2022 = vmatmul.mubr.bf16.gmra.mrb[0].mxu0 %v1731
        %v2023 = vpop.f32.mrb[0].mxu0
        %v2024 = vadd.f32 0.0, %v2023
        %v2025 = vpop.f32.mrb[0].mxu0
        %v2026 = vpop.f32.mrb[0].mxu0
        %v2027 = vadd.f32 0.0, %v2026
        %v2028 = vpop.f32.mrb[0].mxu0
        %2029 = vmatprep.mubr.bf16.mxu0 %v1734
        %2030 = vmatmul.mubr.bf16.gmra.mrb[0].mxu0 %v1733
        %v2031 = vpop.f32.mrb[0].mxu0
        %v2032 = vadd.f32 0.0, %v2031
        %v2033 = vpop.f32.mrb[0].mxu0
        %v2034 = vpop.f32.mrb[0].mxu0
        %v2035 = vadd.f32 0.0, %v2034
        %v2036 = vpop.f32.mrb[0].mxu0
        %2037 = vmatprep.mubr.bf16.mxu0 %v1736
        %2038 = vmatmul.mubr.bf16.gmra.mrb[0].mxu0 %v1735
        %v2039 = vpop.f32.mrb[0].mxu0
        %v2040 = vadd.f32 0.0, %v2039
        %v2041 = vpop.f32.mrb[0].mxu0
        %v2042 = vpop.f32.mrb[0].mxu0
        %v2043 = vadd.f32 0.0, %v2042
        %v2044 = vpop.f32.mrb[0].mxu0
        %2045 = vmatprep.mubr.bf16.mxu0 %v1738
        %2046 = vmatmul.mubr.bf16.gmra.mrb[0].mxu0 %v1737
        %v2047 = vpop.f32.mrb[0].mxu0
        %v2048 = vadd.f32 0.0, %v2047
        %v2049 = vpop.f32.mrb[0].mxu0
        %v2050 = vpop.f32.mrb[0].mxu0
        %v2051 = vadd.f32 0.0, %v2050
        %v2052 = vpop.f32.mrb[0].mxu0
        %2053 = vmatprep.mubr.bf16.mxu0 %v1740
        %2054 = vmatmul.mubr.bf16.gmra.mrb[0].mxu0 %v1739
        %v2055 = vpop.f32.mrb[0].mxu0
        %v2056 = vadd.f32 0.0, %v2055
        %v2057 = vpop.f32.mrb[0].mxu0
        %v2058 = vpop.f32.mrb[0].mxu0
        %v2059 = vadd.f32 0.0, %v2058
        %v2060 = vpop.f32.mrb[0].mxu0
        %2061 = vmatprep.mubr.bf16.mxu0 %v1742
        %2062 = vmatmul.mubr.bf16.gmra.mrb[0].mxu0 %v1741
        %v2063 = vpop.f32.mrb[0].mxu0
        %v2064 = vadd.f32 0.0, %v2063
        %v2065 = vpop.f32.mrb[0].mxu0
        %v2066 = vpop.f32.mrb[0].mxu0
        %v2067 = vadd.f32 0.0, %v2066
        %v2068 = vpop.f32.mrb[0].mxu0
        %2069 = vmatprep.mubr.bf16.mxu0 %v1744
        %2070 = vmatmul.mubr.bf16.gmra.mrb[0].mxu0 %v1743
        %v2071 = vpop.f32.mrb[0].mxu0
        %v2072 = vadd.f32 0.0, %v2071
        %v2073 = vpop.f32.mrb[0].mxu0
        %v2074 = vpop.f32.mrb[0].mxu0
        %v2075 = vadd.f32 0.0, %v2074
        %v2076 = vpop.f32.mrb[0].mxu0
        %2077 = vmatprep.mubr.bf16.mxu0 %v1746
        %2078 = vmatmul.mubr.bf16.gmra.mrb[0].mxu0 %v1745
        %v2079 = vpop.f32.mrb[0].mxu0
        %v2080 = vadd.f32 0.0, %v2079
        %v2081 = vpop.f32.mrb[0].mxu0
        %v2082 = vpop.f32.mrb[0].mxu0
        %v2083 = vadd.f32 0.0, %v2082
        %v2084 = vpop.f32.mrb[0].mxu0
        %2085 = vmatprep.mubr.bf16.mxu0 %v1748
        %2086 = vmatmul.mubr.bf16.gmra.mrb[0].mxu0 %v1747
        %v2087 = vpop.f32.mrb[0].mxu0
        %v2088 = vadd.f32 0.0, %v2087
        %v2089 = vpop.f32.mrb[0].mxu0
        %v2090 = vpop.f32.mrb[0].mxu0
        %v2091 = vadd.f32 0.0, %v2090
        %v2092 = vpop.f32.mrb[0].mxu0
        %2093 = vmatprep.mubr.bf16.mxu0 %v1750
        %2094 = vmatmul.mubr.bf16.gmra.mrb[0].mxu0 %v1749
        %v2095 = vpop.f32.mrb[0].mxu0
        %v2096 = vadd.f32 0.0, %v2095
        %v2097 = vpop.f32.mrb[0].mxu0
        %v2098 = vpop.f32.mrb[0].mxu0
        %v2099 = vadd.f32 0.0, %v2098
        %v2100 = vpop.f32.mrb[0].mxu0
        %2101 = vmatprep.mubr.bf16.mxu0 %v1752
        %2102 = vmatmul.mubr.bf16.gmra.mrb[0].mxu0 %v1751
        %v2103 = vpop.f32.mrb[0].mxu0
        %v2104 = vadd.f32 0.0, %v2103
        %v2105 = vpop.f32.mrb[0].mxu0
        %v2106 = vpop.f32.mrb[0].mxu0
        %v2107 = vadd.f32 0.0, %v2106
        %v2108 = vpop.f32.mrb[0].mxu0
        %2109 = vmatprep.mubr.bf16.mxu0 %v1754
        %2110 = vmatmul.mubr.bf16.gmra.mrb[0].mxu0 %v1753
        %v2111 = vpop.f32.mrb[0].mxu0
        %v2112 = vadd.f32 0.0, %v2111
        %v2113 = vpop.f32.mrb[0].mxu0
        %v2114 = vpop.f32.mrb[0].mxu0
        %v2115 = vadd.f32 0.0, %v2114
        %v2116 = vpop.f32.mrb[0].mxu0
        %2117 = vmatprep.mubr.bf16.mxu0 %v1756
        %2118 = vmatmul.mubr.bf16.gmra.mrb[0].mxu0 %v1755
        %v2119 = vpop.f32.mrb[0].mxu0
        %v2120 = vadd.f32 0.0, %v2119
        %v2121 = vpop.f32.mrb[0].mxu0
        %v2122 = vpop.f32.mrb[0].mxu0
        %v2123 = vadd.f32 0.0, %v2122
        %v2124 = vpop.f32.mrb[0].mxu0
        %2125 = vmatprep.mubr.bf16.mxu0 %v1758
        %2126 = vmatmul.mubr.bf16.gmra.mrb[0].mxu0 %v1757
        %v2127 = vpop.f32.mrb[0].mxu0
        %v2128 = vadd.f32 0.0, %v2127
        %v2129 = vpop.f32.mrb[0].mxu0
        %v2130 = vpop.f32.mrb[0].mxu0
        %v2131 = vadd.f32 0.0, %v2130
        %v2132 = vpop.f32.mrb[0].mxu0
        %2133 = vmatprep.mubr.bf16.mxu0 %v1760
        %2134 = vmatmul.mubr.bf16.gmra.mrb[0].mxu0 %v1759
        %v2135 = vpop.f32.mrb[0].mxu0
        %v2136 = vadd.f32 0.0, %v2135
        %v2137 = vpop.f32.mrb[0].mxu0
        %v2138 = vpop.f32.mrb[0].mxu0
        %v2139 = vadd.f32 0.0, %v2138
        %v2140 = vpop.f32.mrb[0].mxu0
        %2141 = vmatprep.mubr.bf16.mxu0 %v1762
        %2142 = vmatmul.mubr.bf16.gmra.mrb[0].mxu0 %v1761
        %v2143 = vpop.f32.mrb[0].mxu0
        %v2144 = vadd.f32 0.0, %v2143
        %v2145 = vpop.f32.mrb[0].mxu0
        %v2146 = vpop.f32.mrb[0].mxu0
        %v2147 = vadd.f32 0.0, %v2146
        %v2148 = vpop.f32.mrb[0].mxu0
        %2149 = vmatprep.mubr.bf16.mxu0 %v1764
        %2150 = vmatmul.mubr.bf16.gmra.mrb[0].mxu0 %v1763
        %v2151 = vpop.f32.mrb[0].mxu0
        %v2152 = vadd.f32 0.0, %v2151
        %v2153 = vpop.f32.mrb[0].mxu0
        %v2154 = vpop.f32.mrb[0].mxu0
        %v2155 = vadd.f32 0.0, %v2154
        %v2156 = vpop.f32.mrb[0].mxu0
        %2157 = vdwg.mxu0
        %v2160 = vcombine.high %v223, %v223
        %v2162 = vunpack.c.l.s4 1966171168
        %v2163 = vunpack.c.0.s8 %v2162
        %v2164 = vlaneseq
        %v2165 = vshrl.u32 %v2164, 7
        %v2166 = vsub.s32 %v2163, %v2165
        %v2167 = vrot.slane %v223, %v2166
        %v2169 = vunpack.c.l.s4 1966171168
        %v2170 = vunpack.c.0.s8 %v2169
        %v2171 = vlaneseq
        %v2172 = vshrl.u32 %v2171, 7
        %v2173 = vsub.s32 %v2170, %v2172
        %v2174 = vrot.slane %v2160, %v2173
        %v2175 = vcombine.high %v2167, %v2167
        %v2176 = vcombine.high %v2174, %v2174
        %v2178 = vunpack.c.l.s4 1966171168
        %v2179 = vunpack.c.0.s8 %v2178
        %v2180 = vlaneseq
        %v2181 = vshrl.u32 %v2180, 7
        %v2182 = vsub.s32 %v2179, %v2181
        %v2183 = vrot.slane %v2167, %v2182
        %v2185 = vunpack.c.l.s4 1966171168
        %v2186 = vunpack.c.0.s8 %v2185
        %v2187 = vlaneseq
        %v2188 = vshrl.u32 %v2187, 7
        %v2189 = vsub.s32 %v2186, %v2188
        %v2190 = vrot.slane %v2174, %v2189
        %v2192 = vunpack.c.l.s4 1966171168
        %v2193 = vunpack.c.0.s8 %v2192
        %v2194 = vlaneseq
        %v2195 = vshrl.u32 %v2194, 7
        %v2196 = vsub.s32 %v2193, %v2195
        %v2197 = vrot.slane %v2175, %v2196
        %v2199 = vunpack.c.l.s4 1966171168
        %v2200 = vunpack.c.0.s8 %v2199
        %v2201 = vlaneseq
        %v2202 = vshrl.u32 %v2201, 7
        %v2203 = vsub.s32 %v2200, %v2202
        %v2204 = vrot.slane %v2176, %v2203
        %v2205 = vcombine.high %v2183, %v2183
        %v2206 = vcombine.high %v2190, %v2190
        %v2207 = vcombine.high %v2197, %v2197
        %v2208 = vcombine.high %v2204, %v2204
        %v2210 = vunpack.c.l.s4 1966171168
        %v2211 = vunpack.c.0.s8 %v2210
        %v2212 = vlaneseq
        %v2213 = vshrl.u32 %v2212, 7
        %v2214 = vsub.s32 %v2211, %v2213
        %v2215 = vrot.slane %v224, %v2214
        %v2217 = vunpack.c.l.s4 1966171168
        %v2218 = vunpack.c.0.s8 %v2217
        %v2219 = vlaneseq
        %v2220 = vshrl.u32 %v2219, 7
        %v2221 = vsub.s32 %v2218, %v2220
        %v2222 = vrot.slane %v2215, %v2221
        %v2223 = vlaneseq
        %v2224 = vshrl.u32 %v2223, 7
        %v2225 = vsub.s32 0, %v2224
        %v2226 = vrot.slane %v2183, %v2225
        %v2227 = vlaneseq
        %v2228 = vshrl.u32 %v2227, 7
        %v2229 = vsub.s32 0, %v2228
        %v2230 = vrot.slane %v2197, %v2229
        %v2231 = vlaneseq
        %v2232 = vshrl.u32 %v2231, 7
        %v2233 = vsub.s32 0, %v2232
        %v2234 = vrot.slane %v2205, %v2233
        %v2235 = vlaneseq
        %v2236 = vshrl.u32 %v2235, 7
        %v2237 = vsub.s32 0, %v2236
        %v2238 = vrot.slane %v2207, %v2237
        %v2239 = vlaneseq
        %v2240 = vshrl.u32 %v2239, 7
        %v2241 = vsub.s32 0, %v2240
        %v2242 = vrot.slane %v2190, %v2241
        %v2243 = vlaneseq
        %v2244 = vshrl.u32 %v2243, 7
        %v2245 = vsub.s32 0, %v2244
        %v2246 = vrot.slane %v2204, %v2245
        %v2247 = vlaneseq
        %v2248 = vshrl.u32 %v2247, 7
        %v2249 = vsub.s32 0, %v2248
        %v2250 = vrot.slane %v2206, %v2249
        %v2251 = vlaneseq
        %v2252 = vshrl.u32 %v2251, 7
        %v2253 = vsub.s32 0, %v2252
        %v2254 = vrot.slane %v2208, %v2253
        %v2255 = vlaneseq
        %v2256 = vshrl.u32 %v2255, 7
        %v2257 = vsub.s32 0, %v2256
        %v2258 = vrot.slane %v2222, %v2257
        %v2268 = vmul.f32 %v1872, %v2226
        %v2269 = vmul.f32 %v1875, %v2226
        %v2270 = vmul.f32 %v1880, %v2226
        %v2271 = vmul.f32 %v1883, %v2226
        %v2272 = vmul.f32 %v1888, %v2226
        %v2273 = vmul.f32 %v1891, %v2226
        %v2274 = vmul.f32 %v1896, %v2226
        %v2275 = vmul.f32 %v1899, %v2226
        %v2276 = vmul.f32 %v1904, %v2230
        %v2277 = vmul.f32 %v1907, %v2230
        %v2278 = vmul.f32 %v1912, %v2230
        %v2279 = vmul.f32 %v1915, %v2230
        %v2280 = vmul.f32 %v1920, %v2230
        %v2281 = vmul.f32 %v1923, %v2230
        %v2282 = vmul.f32 %v1928, %v2230
        %v2283 = vmul.f32 %v1931, %v2230
        %v2284 = vmul.f32 %v1936, %v2234
        %v2285 = vmul.f32 %v1939, %v2234
        %v2286 = vmul.f32 %v1944, %v2234
        %v2287 = vmul.f32 %v1947, %v2234
        %v2288 = vmul.f32 %v1952, %v2234
        %v2289 = vmul.f32 %v1955, %v2234
        %v2290 = vmul.f32 %v1960, %v2234
        %v2291 = vmul.f32 %v1963, %v2234
        %v2292 = vmul.f32 %v1968, %v2238
        %v2293 = vmul.f32 %v1971, %v2238
        %v2294 = vmul.f32 %v1976, %v2238
        %v2295 = vmul.f32 %v1979, %v2238
        %v2296 = vmul.f32 %v1984, %v2238
        %v2297 = vmul.f32 %v1987, %v2238
        %v2298 = vmul.f32 %v1992, %v2238
        %v2299 = vmul.f32 %v1995, %v2238
        %v2300 = vmul.f32 %v2000, %v2242
        %v2301 = vmul.f32 %v2003, %v2242
        %v2302 = vmul.f32 %v2008, %v2242
        %v2303 = vmul.f32 %v2011, %v2242
        %v2304 = vmul.f32 %v2016, %v2242
        %v2305 = vmul.f32 %v2019, %v2242
        %v2306 = vmul.f32 %v2024, %v2242
        %v2307 = vmul.f32 %v2027, %v2242
        %v2308 = vmul.f32 %v2032, %v2246
        %v2309 = vmul.f32 %v2035, %v2246
        %v2310 = vmul.f32 %v2040, %v2246
        %v2311 = vmul.f32 %v2043, %v2246
        %v2312 = vmul.f32 %v2048, %v2246
        %v2313 = vmul.f32 %v2051, %v2246
        %v2314 = vmul.f32 %v2056, %v2246
        %v2315 = vmul.f32 %v2059, %v2246
        %v2316 = vmul.f32 %v2064, %v2250
        %v2317 = vmul.f32 %v2067, %v2250
        %v2318 = vmul.f32 %v2072, %v2250
        %v2319 = vmul.f32 %v2075, %v2250
        %v2320 = vmul.f32 %v2080, %v2250
        %v2321 = vmul.f32 %v2083, %v2250
        %v2322 = vmul.f32 %v2088, %v2250
        %v2323 = vmul.f32 %v2091, %v2250
        %v2324 = vmul.f32 %v2096, %v2254
        %v2325 = vmul.f32 %v2099, %v2254
        %v2326 = vmul.f32 %v2104, %v2254
        %v2327 = vmul.f32 %v2107, %v2254
        %v2328 = vmul.f32 %v2112, %v2254
        %v2329 = vmul.f32 %v2115, %v2254
        %v2330 = vmul.f32 %v2120, %v2254
        %v2331 = vmul.f32 %v2123, %v2254
        %v2332 = vmul.f32 %v2128, %v2258
        %v2333 = vmul.f32 %v2131, %v2258
        %v2334 = vmul.f32 %v2136, %v2258
        %v2335 = vmul.f32 %v2139, %v2258
        %v2336 = vmul.f32 %v2144, %v2258
        %v2337 = vmul.f32 %v2147, %v2258
        %v2338 = vmul.f32 %v2152, %v2258
        %v2339 = vmul.f32 %v2155, %v2258
        %v2340 = vadd.f32 %v2268, %v2276
        %v2341 = vadd.f32 %v2340, %v2284
        %v2342 = vadd.f32 %v2341, %v2292
        %v2343 = vadd.f32 %v2342, %v2300
        %v2344 = vadd.f32 %v2343, %v2308
        %v2345 = vadd.f32 %v2344, %v2316
        %v2346 = vadd.f32 %v2345, %v2324
        %v2347 = vadd.f32 %v2346, %v2332
        %v2348 = vadd.f32 %v2269, %v2277
        %v2349 = vadd.f32 %v2348, %v2285
        %v2350 = vadd.f32 %v2349, %v2293
        %v2351 = vadd.f32 %v2350, %v2301
        %v2352 = vadd.f32 %v2351, %v2309
        %v2353 = vadd.f32 %v2352, %v2317
        %v2354 = vadd.f32 %v2353, %v2325
        %v2355 = vadd.f32 %v2354, %v2333
        %v2356 = vadd.f32 %v2270, %v2278
        %v2357 = vadd.f32 %v2356, %v2286
        %v2358 = vadd.f32 %v2357, %v2294
        %v2359 = vadd.f32 %v2358, %v2302
        %v2360 = vadd.f32 %v2359, %v2310
        %v2361 = vadd.f32 %v2360, %v2318
        %v2362 = vadd.f32 %v2361, %v2326
        %v2363 = vadd.f32 %v2362, %v2334
        %v2364 = vadd.f32 %v2271, %v2279
        %v2365 = vadd.f32 %v2364, %v2287
        %v2366 = vadd.f32 %v2365, %v2295
        %v2367 = vadd.f32 %v2366, %v2303
        %v2368 = vadd.f32 %v2367, %v2311
        %v2369 = vadd.f32 %v2368, %v2319
        %v2370 = vadd.f32 %v2369, %v2327
        %v2371 = vadd.f32 %v2370, %v2335
        %v2372 = vadd.f32 %v2272, %v2280
        %v2373 = vadd.f32 %v2372, %v2288
        %v2374 = vadd.f32 %v2373, %v2296
        %v2375 = vadd.f32 %v2374, %v2304
        %v2376 = vadd.f32 %v2375, %v2312
        %v2377 = vadd.f32 %v2376, %v2320
        %v2378 = vadd.f32 %v2377, %v2328
        %v2379 = vadd.f32 %v2378, %v2336
        %v2380 = vadd.f32 %v2273, %v2281
        %v2381 = vadd.f32 %v2380, %v2289
        %v2382 = vadd.f32 %v2381, %v2297
        %v2383 = vadd.f32 %v2382, %v2305
        %v2384 = vadd.f32 %v2383, %v2313
        %v2385 = vadd.f32 %v2384, %v2321
        %v2386 = vadd.f32 %v2385, %v2329
        %v2387 = vadd.f32 %v2386, %v2337
        %v2388 = vadd.f32 %v2274, %v2282
        %v2389 = vadd.f32 %v2388, %v2290
        %v2390 = vadd.f32 %v2389, %v2298
        %v2391 = vadd.f32 %v2390, %v2306
        %v2392 = vadd.f32 %v2391, %v2314
        %v2393 = vadd.f32 %v2392, %v2322
        %v2394 = vadd.f32 %v2393, %v2330
        %v2395 = vadd.f32 %v2394, %v2338
        %v2396 = vadd.f32 %v2275, %v2283
        %v2397 = vadd.f32 %v2396, %v2291
        %v2398 = vadd.f32 %v2397, %v2299
        %v2399 = vadd.f32 %v2398, %v2307
        %v2400 = vadd.f32 %v2399, %v2315
        %v2401 = vadd.f32 %v2400, %v2323
        %v2402 = vadd.f32 %v2401, %v2331
        %v2403 = vadd.f32 %v2402, %v2339
        %v2404 = vlaneseq
        %v2405 = vshrl.u32 %v2404, 7
        %v2406 = vsub.s32 3, %v2405
        %v2407 = vrot.slane %v224, %v2406
        %v2408 = vadd.f32 %v2347, %v2407
        %v2409 = vadd.f32 %v2355, %v2407
        %v2410 = vadd.f32 %v2363, %v2407
        %v2411 = vadd.f32 %v2371, %v2407
        %v2412 = vadd.f32 %v2379, %v2407
        %v2413 = vadd.f32 %v2387, %v2407
        %v2414 = vadd.f32 %v2395, %v2407
        %v2415 = vadd.f32 %v2403, %v2407
        %v2416 = vmul.f32 %v2408, %v2408
        %v2417 = vmul.f32 %v2409, %v2409
        %v2418 = vmul.f32 %v2410, %v2410
        %v2419 = vmul.f32 %v2411, %v2411
        %v2420 = vmul.f32 %v2412, %v2412
        %v2421 = vmul.f32 %v2413, %v2413
        %v2422 = vmul.f32 %v2414, %v2414
        %v2423 = vmul.f32 %v2415, %v2415
        %v2424 = vmul.f32 %v2408, %v2416
        %v2425 = vmul.f32 %v2409, %v2417
        %v2426 = vmul.f32 %v2410, %v2418
        %v2427 = vmul.f32 %v2411, %v2419
        %v2428 = vmul.f32 %v2412, %v2420
        %v2429 = vmul.f32 %v2413, %v2421
        %v2430 = vmul.f32 %v2414, %v2422
        %v2431 = vmul.f32 %v2415, %v2423
        %v2432 = vmul.f32 %v2424, 0.044715
        %v2433 = vmul.f32 %v2425, 0.044715
        %v2434 = vmul.f32 %v2426, 0.044715
        %v2435 = vmul.f32 %v2427, 0.044715
        %v2436 = vmul.f32 %v2428, 0.044715
        %v2437 = vmul.f32 %v2429, 0.044715
        %v2438 = vmul.f32 %v2430, 0.044715
        %v2439 = vmul.f32 %v2431, 0.044715
        %v2440 = vadd.f32 %v2408, %v2432
        %v2441 = vadd.f32 %v2409, %v2433
        %v2442 = vadd.f32 %v2410, %v2434
        %v2443 = vadd.f32 %v2411, %v2435
        %v2444 = vadd.f32 %v2412, %v2436
        %v2445 = vadd.f32 %v2413, %v2437
        %v2446 = vadd.f32 %v2414, %v2438
        %v2447 = vadd.f32 %v2415, %v2439
        %v2448 = vmul.f32 %v2440, 0.7978846
        %v2449 = vmul.f32 %v2441, 0.7978846
        %v2450 = vmul.f32 %v2442, 0.7978846
        %v2451 = vmul.f32 %v2443, 0.7978846
        %v2452 = vmul.f32 %v2444, 0.7978846
        %v2453 = vmul.f32 %v2445, 0.7978846
        %v2454 = vmul.f32 %v2446, 0.7978846
        %v2455 = vmul.f32 %v2447, 0.7978846
        %v2456 = vtanh.pop %v2448
        %v2457 = vtanh.pop %v2449
        %v2458 = vtanh.pop %v2450
        %v2459 = vtanh.pop %v2451
        %v2460 = vtanh.pop %v2452
        %v2461 = vtanh.pop %v2453
        %v2462 = vtanh.pop %v2454
        %v2463 = vtanh.pop %v2455
        %v2464 = vadd.f32 %v2456, 1.0
        %v2465 = vadd.f32 %v2457, 1.0
        %v2466 = vadd.f32 %v2458, 1.0
        %v2467 = vadd.f32 %v2459, 1.0
        %v2468 = vadd.f32 %v2460, 1.0
        %v2469 = vadd.f32 %v2461, 1.0
        %v2470 = vadd.f32 %v2462, 1.0
        %v2471 = vadd.f32 %v2463, 1.0
        %v2472 = vmul.f32 %v2464, 0.5
        %v2473 = vmul.f32 %v2465, 0.5
        %v2474 = vmul.f32 %v2466, 0.5
        %v2475 = vmul.f32 %v2467, 0.5
        %v2476 = vmul.f32 %v2468, 0.5
        %v2477 = vmul.f32 %v2469, 0.5
        %v2478 = vmul.f32 %v2470, 0.5
        %v2479 = vmul.f32 %v2471, 0.5
        %v2480 = vmul.f32 %v2408, %v2472
        %v2481 = vmul.f32 %v2409, %v2473
        %v2482 = vmul.f32 %v2410, %v2474
        %v2483 = vmul.f32 %v2411, %v2475
        %v2484 = vmul.f32 %v2412, %v2476
        %v2485 = vmul.f32 %v2413, %v2477
        %v2486 = vmul.f32 %v2414, %v2478
        %v2487 = vmul.f32 %v2415, %v2479
        %v2488 = vpack.c.bf16 %v2481, %v2480
        %v2489 = vpack.c.bf16 %v2483, %v2482
        %v2490 = vpack.c.bf16 %v2485, %v2484
        %v2491 = vpack.c.bf16 %v2487, %v2486
        %v2492 = vld [vmem:[%s2 + $0x80] sm:$0xf]
        %v2493 = vld [vmem:[%s2 + $0x84] sm:$0xf]
        %v2494 = vld [vmem:[%s2 + $0x88] sm:$0xf]
        %v2495 = vld [vmem:[%s2 + $0x8c] sm:$0xf]
        %v2496 = vld [vmem:[%s2 + $0x90] sm:$0xf]
        %v2497 = vld [vmem:[%s2 + $0x94] sm:$0xf]
        %v2498 = vld [vmem:[%s2 + $0x98] sm:$0xf]
        %v2499 = vld [vmem:[%s2 + $0x9c] sm:$0xf]
        %v2500 = vld [vmem:[%s2 + $0xa0] sm:$0xf]
        %v2501 = vld [vmem:[%s2 + $0xa4] sm:$0xf]
        %v2502 = vld [vmem:[%s2 + $0xa8] sm:$0xf]
        %v2503 = vld [vmem:[%s2 + $0xac] sm:$0xf]
        %v2504 = vld [vmem:[%s2 + $0xb0] sm:$0xf]
        %v2505 = vld [vmem:[%s2 + $0xb4] sm:$0xf]
        %v2506 = vld [vmem:[%s2 + $0xb8] sm:$0xf]
        %v2507 = vld [vmem:[%s2 + $0xbc] sm:$0xf]
        %v2508 = vlaneseq
        %v2509 = vshrl.u32 %v2508, 7
        %v2510 = vsub.s32 4, %v2509
        %v2511 = vrot.slane %v224, %v2510
        %v2528 = vunpack.c.l.b16 %v2492
        %v2529 = vunpack.c.l.b16 %v2493
        %v2530 = vunpack.c.l.b16 %v2494
        %v2531 = vunpack.c.l.b16 %v2495
        %v2532 = vunpack.c.l.b16 %v2496
        %v2533 = vunpack.c.l.b16 %v2497
        %v2534 = vunpack.c.l.b16 %v2498
        %v2535 = vunpack.c.l.b16 %v2499
        %v2536 = vunpack.c.l.b16 %v2500
        %v2537 = vunpack.c.l.b16 %v2501
        %v2538 = vunpack.c.l.b16 %v2502
        %v2539 = vunpack.c.l.b16 %v2503
        %v2540 = vunpack.c.l.b16 %v2504
        %v2541 = vunpack.c.l.b16 %v2505
        %v2542 = vunpack.c.l.b16 %v2506
        %v2543 = vunpack.c.l.b16 %v2507
        %v2544 = vpack.c.b16 %v2529, %v2528
        %v2545 = vpack.c.b16 %v2531, %v2530
        %v2546 = vpack.c.b16 %v2533, %v2532
        %v2547 = vpack.c.b16 %v2535, %v2534
        %v2548 = vpack.c.b16 %v2537, %v2536
        %v2549 = vpack.c.b16 %v2539, %v2538
        %v2550 = vpack.c.b16 %v2541, %v2540
        %v2551 = vpack.c.b16 %v2543, %v2542
        %2560 = vmatprep.subr.bf16.mxu0 0
        %2561 = vmatpush1.bf16.msra.mxu0 %v2544
        %2562 = vmatprep.subr.bf16.mxu0 0
        %2563 = vmatpush1.bf16.msra.mxu0 %v2545
        %2564 = vmatprep.subr.bf16.mxu0 0
        %2565 = vmatpush1.bf16.msra.mxu0 %v2546
        %2566 = vmatprep.subr.bf16.mxu0 0
        %2567 = vmatpush1.bf16.msra.mxu0 %v2547
        %2568 = vmatprep.subr.bf16.mxu0 0
        %2569 = vmatpush1.bf16.msra.mxu0 %v2548
        %2570 = vmatprep.subr.bf16.mxu0 0
        %2571 = vmatpush1.bf16.msra.mxu0 %v2549
        %2572 = vmatprep.subr.bf16.mxu0 0
        %2573 = vmatpush1.bf16.msra.mxu0 %v2550
        %2574 = vmatprep.subr.bf16.mxu0 0
        %2575 = vmatpush1.bf16.msra.mxu0 %v2551
        %2576 = vmatprep.subr.bf16.mxu0 0
        %2577 = vmatpush1.bf16.msra.mxu0 0
        %2578 = vmatprep.subr.bf16.mxu0 0
        %2579 = vmatpush1.bf16.msra.mxu0 0
        %2580 = vmatprep.subr.bf16.mxu0 0
        %2581 = vmatpush1.bf16.msra.mxu0 0
        %2582 = vmatprep.subr.bf16.mxu0 0
        %2583 = vmatpush1.bf16.msra.mxu0 0
        %2584 = vmatprep.subr.bf16.mxu0 0
        %2585 = vmatpush1.bf16.msra.mxu0 0
        %2586 = vmatprep.subr.bf16.mxu0 0
        %2587 = vmatpush1.bf16.msra.mxu0 0
        %2588 = vmatprep.subr.bf16.mxu0 0
        %2589 = vmatpush1.bf16.msra.mxu0 0
        %2590 = vmatprep.subr.bf16.mxu0 0
        %2591 = vmatpush1.bf16.msra.mxu0 0
        %2592 = vmatprep.mubr.bf16.mxu0 0
        %2593 = vmatmul.mubr.bf16.gmra.mrb[0].mxu0 %v2488
        %v2594 = vpop.f32.mrb[0].mxu0
        %v2595 = vadd.f32 %v2511, %v2594
        %v2596 = vpop.f32.mrb[0].mxu0
        %v2597 = vpop.f32.mrb[0].mxu0
        %v2598 = vadd.f32 %v2511, %v2597
        %v2599 = vpop.f32.mrb[0].mxu0
        %2600 = vmatprep.mubr.bf16.mxu0 0
        %2601 = vmatmul.mubr.bf16.gmra.mrb[0].mxu0 %v2489
        %v2602 = vpop.f32.mrb[0].mxu0
        %v2603 = vadd.f32 %v2511, %v2602
        %v2604 = vpop.f32.mrb[0].mxu0
        %v2605 = vpop.f32.mrb[0].mxu0
        %v2606 = vadd.f32 %v2511, %v2605
        %v2607 = vpop.f32.mrb[0].mxu0
        %2608 = vmatprep.mubr.bf16.mxu0 0
        %2609 = vmatmul.mubr.bf16.gmra.mrb[0].mxu0 %v2490
        %v2610 = vpop.f32.mrb[0].mxu0
        %v2611 = vadd.f32 %v2511, %v2610
        %v2612 = vpop.f32.mrb[0].mxu0
        %v2613 = vpop.f32.mrb[0].mxu0
        %v2614 = vadd.f32 %v2511, %v2613
        %v2615 = vpop.f32.mrb[0].mxu0
        %2616 = vmatprep.mubr.bf16.mxu0 0
        %2617 = vmatmul.mubr.bf16.gmra.mrb[0].mxu0 %v2491
        %v2618 = vpop.f32.mrb[0].mxu0
        %v2619 = vadd.f32 %v2511, %v2618
        %v2620 = vpop.f32.mrb[0].mxu0
        %v2621 = vpop.f32.mrb[0].mxu0
        %v2622 = vadd.f32 %v2511, %v2621
        %v2623 = vpop.f32.mrb[0].mxu0
        %2624 = vdwg.mxu0
        %2625 = vadd.xlane.f32.xlu0 %v2595
        %v2626 = vpop.xlane.xlu0 %2625
        %2627 = vadd.xlane.f32.xlu0 %v2598
        %v2628 = vpop.xlane.xlu0 %2627
        %2629 = vadd.xlane.f32.xlu0 %v2603
        %v2630 = vpop.xlane.xlu0 %2629
        %2631 = vadd.xlane.f32.xlu0 %v2606
        %v2632 = vpop.xlane.xlu0 %2631
        %2633 = vadd.xlane.f32.xlu0 %v2611
        %v2634 = vpop.xlane.xlu0 %2633
        %2635 = vadd.xlane.f32.xlu0 %v2614
        %v2636 = vpop.xlane.xlu0 %2635
        %2637 = vadd.xlane.f32.xlu0 %v2619
        %v2638 = vpop.xlane.xlu0 %2637
        %2639 = vadd.xlane.f32.xlu0 %v2622
        %v2640 = vpop.xlane.xlu0 %2639
        %v2641 = vmul.f32 %v2626, 0.03125
        %v2642 = vmul.f32 %v2628, 0.03125
        %v2643 = vmul.f32 %v2630, 0.03125
        %v2644 = vmul.f32 %v2632, 0.03125
        %v2645 = vmul.f32 %v2634, 0.03125
        %v2646 = vmul.f32 %v2636, 0.03125
        %v2647 = vmul.f32 %v2638, 0.03125
        %v2648 = vmul.f32 %v2640, 0.03125
        %v2649 = vsub.f32 %v2595, %v2641
        %v2650 = vsub.f32 %v2598, %v2642
        %v2651 = vsub.f32 %v2603, %v2643
        %v2652 = vsub.f32 %v2606, %v2644
        %v2653 = vsub.f32 %v2611, %v2645
        %v2654 = vsub.f32 %v2614, %v2646
        %v2655 = vsub.f32 %v2619, %v2647
        %v2656 = vsub.f32 %v2622, %v2648
        %v2657 = vlaneseq
        %v2658 = vshrl.u32 %v2657, 7
        %v2659 = vsub.s32 1, %v2658
        %v2660 = vrot.slane %v225, %v2659
        %v2661 = vmul.f32 %v2649, %v2660
        %v2662 = vmul.f32 %v2650, %v2660
        %v2663 = vmul.f32 %v2651, %v2660
        %v2664 = vmul.f32 %v2652, %v2660
        %v2665 = vmul.f32 %v2653, %v2660
        %v2666 = vmul.f32 %v2654, %v2660
        %v2667 = vmul.f32 %v2655, %v2660
        %v2668 = vmul.f32 %v2656, %v2660
        %v2669 = vmul.f32 %v2661, %v2661
        %v2670 = vmul.f32 %v2662, %v2662
        %v2671 = vmul.f32 %v2663, %v2663
        %v2672 = vmul.f32 %v2664, %v2664
        %v2673 = vmul.f32 %v2665, %v2665
        %v2674 = vmul.f32 %v2666, %v2666
        %v2675 = vmul.f32 %v2667, %v2667
        %v2676 = vmul.f32 %v2668, %v2668
        %2677 = vadd.xlane.f32.xlu0 %v2669
        %v2678 = vpop.xlane.xlu0 %2677
        %2679 = vadd.xlane.f32.xlu0 %v2670
        %v2680 = vpop.xlane.xlu0 %2679
        %2681 = vadd.xlane.f32.xlu0 %v2671
        %v2682 = vpop.xlane.xlu0 %2681
        %2683 = vadd.xlane.f32.xlu0 %v2672
        %v2684 = vpop.xlane.xlu0 %2683
        %2685 = vadd.xlane.f32.xlu0 %v2673
        %v2686 = vpop.xlane.xlu0 %2685
        %2687 = vadd.xlane.f32.xlu0 %v2674
        %v2688 = vpop.xlane.xlu0 %2687
        %2689 = vadd.xlane.f32.xlu0 %v2675
        %v2690 = vpop.xlane.xlu0 %2689
        %2691 = vadd.xlane.f32.xlu0 %v2676
        %v2692 = vpop.xlane.xlu0 %2691
        %v2693 = vmul.f32 %v2678, 0.03125
        %v2694 = vmul.f32 %v2680, 0.03125
        %v2695 = vmul.f32 %v2682, 0.03125
        %v2696 = vmul.f32 %v2684, 0.03125
        %v2697 = vmul.f32 %v2686, 0.03125
        %v2698 = vmul.f32 %v2688, 0.03125
        %v2699 = vmul.f32 %v2690, 0.03125
        %v2700 = vmul.f32 %v2692, 0.03125
        %v2701 = vadd.f32 %v2693, 1e-05
        %v2702 = vadd.f32 %v2694, 1e-05
        %v2703 = vadd.f32 %v2695, 1e-05
        %v2704 = vadd.f32 %v2696, 1e-05
        %v2705 = vadd.f32 %v2697, 1e-05
        %v2706 = vadd.f32 %v2698, 1e-05
        %v2707 = vadd.f32 %v2699, 1e-05
        %v2708 = vadd.f32 %v2700, 1e-05
        %v2709 = vrsqrt.pop %v2701
        %v2710 = vrsqrt.pop %v2702
        %v2711 = vrsqrt.pop %v2703
        %v2712 = vrsqrt.pop %v2704
        %v2713 = vrsqrt.pop %v2705
        %v2714 = vrsqrt.pop %v2706
        %v2715 = vrsqrt.pop %v2707
        %v2716 = vrsqrt.pop %v2708
        %v2717 = vmul.f32 %v2661, %v2709
        %v2718 = vmul.f32 %v2662, %v2710
        %v2719 = vmul.f32 %v2663, %v2711
        %v2720 = vmul.f32 %v2664, %v2712
        %v2721 = vmul.f32 %v2665, %v2713
        %v2722 = vmul.f32 %v2666, %v2714
        %v2723 = vmul.f32 %v2667, %v2715
        %v2724 = vmul.f32 %v2668, %v2716
        %v2725 = vpack.c.bf16 %v2718, %v2717
        %v2726 = vpack.c.bf16 %v2720, %v2719
        %v2727 = vpack.c.bf16 %v2722, %v2721
        %v2728 = vpack.c.bf16 %v2724, %v2723
        %v2729 = vld [vmem:[%s3] sm:$0xff]
        %v2730 = vld [vmem:[%s3 + $0x8] sm:$0xf]
        %v2731 = vld [vmem:[%s3 + $0xc] sm:$0xff]
        %v2732 = vld [vmem:[%s3 + $0x14] sm:$0xf]
        %v2733 = vld [vmem:[%s3 + $0x18] sm:$0xff]
        %v2734 = vld [vmem:[%s3 + $0x20] sm:$0xf]
        %v2735 = vld [vmem:[%s3 + $0x24] sm:$0xff]
        %v2736 = vld [vmem:[%s3 + $0x2c] sm:$0xf]
        %v2737 = vld [vmem:[%s3 + $0x30] sm:$0xff]
        %v2738 = vld [vmem:[%s3 + $0x38] sm:$0xf]
        %v2739 = vld [vmem:[%s3 + $0x3c] sm:$0xff]
        %v2740 = vld [vmem:[%s3 + $0x44] sm:$0xf]
        %v2741 = vld [vmem:[%s3 + $0x48] sm:$0xff]
        %v2742 = vld [vmem:[%s3 + $0x50] sm:$0xf]
        %v2743 = vld [vmem:[%s3 + $0x54] sm:$0xff]
        %v2744 = vld [vmem:[%s3 + $0x5c] sm:$0xf]
        %v2745 = vld [vmem:[%s3 + $0x60] sm:$0xff]
        %v2746 = vld [vmem:[%s3 + $0x68] sm:$0xf]
        %v2747 = vld [vmem:[%s3 + $0x6c] sm:$0xff]
        %v2748 = vld [vmem:[%s3 + $0x74] sm:$0xf]
        %v2749 = vld [vmem:[%s3 + $0x78] sm:$0xff]
        %v2750 = vld [vmem:[%s3 + $0x80] sm:$0xf]
        %v2751 = vld [vmem:[%s3 + $0x84] sm:$0xff]
        %v2752 = vld [vmem:[%s3 + $0x8c] sm:$0xf]
        %v2753 = vld [vmem:[%s3 + $0x90] sm:$0xff]
        %v2754 = vld [vmem:[%s3 + $0x98] sm:$0xf]
        %v2755 = vld [vmem:[%s3 + $0x9c] sm:$0xff]
        %v2756 = vld [vmem:[%s3 + $0xa4] sm:$0xf]
        %v2757 = vld [vmem:[%s3 + $0xa8] sm:$0xff]
        %v2758 = vld [vmem:[%s3 + $0xb0] sm:$0xf]
        %v2759 = vld [vmem:[%s3 + $0xb4] sm:$0xff]
        %v2760 = vld [vmem:[%s3 + $0xbc] sm:$0xf]
        %v2793 = vunpack.c.l.b16 %v2729
        %v2794 = vunpack.c.h.b16 %v2729
        %v2795 = vunpack.c.l.b16 %v2730
        %v2796 = vunpack.c.l.b16 %v2731
        %v2797 = vunpack.c.h.b16 %v2731
        %v2798 = vunpack.c.l.b16 %v2732
        %v2799 = vunpack.c.l.b16 %v2733
        %v2800 = vunpack.c.h.b16 %v2733
        %v2801 = vunpack.c.l.b16 %v2734
        %v2802 = vunpack.c.l.b16 %v2735
        %v2803 = vunpack.c.h.b16 %v2735
        %v2804 = vunpack.c.l.b16 %v2736
        %v2805 = vunpack.c.l.b16 %v2737
        %v2806 = vunpack.c.h.b16 %v2737
        %v2807 = vunpack.c.l.b16 %v2738
        %v2808 = vunpack.c.l.b16 %v2739
        %v2809 = vunpack.c.h.b16 %v2739
        %v2810 = vunpack.c.l.b16 %v2740
        %v2811 = vunpack.c.l.b16 %v2741
        %v2812 = vunpack.c.h.b16 %v2741
        %v2813 = vunpack.c.l.b16 %v2742
        %v2814 = vunpack.c.l.b16 %v2743
        %v2815 = vunpack.c.h.b16 %v2743
        %v2816 = vunpack.c.l.b16 %v2744
        %v2817 = vunpack.c.l.b16 %v2745
        %v2818 = vunpack.c.h.b16 %v2745
        %v2819 = vunpack.c.l.b16 %v2746
        %v2820 = vunpack.c.l.b16 %v2747
        %v2821 = vunpack.c.h.b16 %v2747
        %v2822 = vunpack.c.l.b16 %v2748
        %v2823 = vunpack.c.l.b16 %v2749
        %v2824 = vunpack.c.h.b16 %v2749
        %v2825 = vunpack.c.l.b16 %v2750
        %v2826 = vunpack.c.l.b16 %v2751
        %v2827 = vunpack.c.h.b16 %v2751
        %v2828 = vunpack.c.l.b16 %v2752
        %v2829 = vunpack.c.l.b16 %v2753
        %v2830 = vunpack.c.h.b16 %v2753
        %v2831 = vunpack.c.l.b16 %v2754
        %v2832 = vunpack.c.l.b16 %v2755
        %v2833 = vunpack.c.h.b16 %v2755
        %v2834 = vunpack.c.l.b16 %v2756
        %v2835 = vunpack.c.l.b16 %v2757
        %v2836 = vunpack.c.h.b16 %v2757
        %v2837 = vunpack.c.l.b16 %v2758
        %v2838 = vunpack.c.l.b16 %v2759
        %v2839 = vunpack.c.h.b16 %v2759
        %v2840 = vunpack.c.l.b16 %v2760
        %v2841 = vpack.c.b16 %v2796, %v2793
        %v2842 = vpack.c.b16 %v2797, %v2794
        %v2843 = vpack.c.b16 %v2798, %v2795
        %v2844 = vpack.c.b16 %v2802, %v2799
        %v2845 = vpack.c.b16 %v2803, %v2800
        %v2846 = vpack.c.b16 %v2804, %v2801
        %v2847 = vpack.c.b16 %v2808, %v2805
        %v2848 = vpack.c.b16 %v2809, %v2806
        %v2849 = vpack.c.b16 %v2810, %v2807
        %v2850 = vpack.c.b16 %v2814, %v2811
        %v2851 = vpack.c.b16 %v2815, %v2812
        %v2852 = vpack.c.b16 %v2816, %v2813
        %v2853 = vpack.c.b16 %v2820, %v2817
        %v2854 = vpack.c.b16 %v2821, %v2818
        %v2855 = vpack.c.b16 %v2822, %v2819
        %v2856 = vpack.c.b16 %v2826, %v2823
        %v2857 = vpack.c.b16 %v2827, %v2824
        %v2858 = vpack.c.b16 %v2828, %v2825
        %v2859 = vpack.c.b16 %v2832, %v2829
        %v2860 = vpack.c.b16 %v2833, %v2830
        %v2861 = vpack.c.b16 %v2834, %v2831
        %v2862 = vpack.c.b16 %v2838, %v2835
        %v2863 = vpack.c.b16 %v2839, %v2836
        %v2864 = vpack.c.b16 %v2840, %v2837
        %2889 = vmatprep.subr.bf16.mxu0 %v2842
        %2890 = vmatpush1.bf16.msra.mxu0 %v2841
        %2891 = vmatprep.subr.bf16.mxu0 %v2845
        %2892 = vmatpush1.bf16.msra.mxu0 %v2844
        %2893 = vmatprep.subr.bf16.mxu0 %v2848
        %2894 = vmatpush1.bf16.msra.mxu0 %v2847
        %2895 = vmatprep.subr.bf16.mxu0 %v2851
        %2896 = vmatpush1.bf16.msra.mxu0 %v2850
        %2897 = vmatprep.subr.bf16.mxu0 %v2854
        %2898 = vmatpush1.bf16.msra.mxu0 %v2853
        %2899 = vmatprep.subr.bf16.mxu0 %v2857
        %2900 = vmatpush1.bf16.msra.mxu0 %v2856
        %2901 = vmatprep.subr.bf16.mxu0 %v2860
        %2902 = vmatpush1.bf16.msra.mxu0 %v2859
        %2903 = vmatprep.subr.bf16.mxu0 %v2863
        %2904 = vmatpush1.bf16.msra.mxu0 %v2862
        %2905 = vmatprep.subr.bf16.mxu0 0
        %2906 = vmatpush1.bf16.msra.mxu0 0
        %2907 = vmatprep.subr.bf16.mxu0 0
        %2908 = vmatpush1.bf16.msra.mxu0 0
        %2909 = vmatprep.subr.bf16.mxu0 0
        %2910 = vmatpush1.bf16.msra.mxu0 0
        %2911 = vmatprep.subr.bf16.mxu0 0
        %2912 = vmatpush1.bf16.msra.mxu0 0
        %2913 = vmatprep.subr.bf16.mxu0 0
        %2914 = vmatpush1.bf16.msra.mxu0 0
        %2915 = vmatprep.subr.bf16.mxu0 0
        %2916 = vmatpush1.bf16.msra.mxu0 0
        %2917 = vmatprep.subr.bf16.mxu0 0
        %2918 = vmatpush1.bf16.msra.mxu0 0
        %2919 = vmatprep.subr.bf16.mxu0 0
        %2920 = vmatpush1.bf16.msra.mxu0 0
        %2921 = vmatprep.mubr.bf16.mxu0 0
        %2922 = vmatmul.mubr.bf16.gmra.mrb[0].mxu0 %v2725
        %v2923 = vpop.f32.mrb[0].mxu0
        %v2924 = vadd.f32 0.0, %v2923
        %v2925 = vpop.f32.mrb[0].mxu0
        %v2926 = vadd.f32 0.0, %v2925
        %v2927 = vpop.f32.mrb[0].mxu0
        %v2928 = vadd.f32 0.0, %v2927
        %v2929 = vpop.f32.mrb[0].mxu0
        %v2930 = vadd.f32 0.0, %v2929
        %2931 = vmatprep.mubr.bf16.mxu0 0
        %2932 = vmatmul.mubr.bf16.gmra.mrb[0].mxu0 %v2726
        %v2933 = vpop.f32.mrb[0].mxu0
        %v2934 = vadd.f32 0.0, %v2933
        %v2935 = vpop.f32.mrb[0].mxu0
        %v2936 = vadd.f32 0.0, %v2935
        %v2937 = vpop.f32.mrb[0].mxu0
        %v2938 = vadd.f32 0.0, %v2937
        %v2939 = vpop.f32.mrb[0].mxu0
        %v2940 = vadd.f32 0.0, %v2939
        %2941 = vmatprep.mubr.bf16.mxu0 0
        %2942 = vmatmul.mubr.bf16.gmra.mrb[0].mxu0 %v2727
        %v2943 = vpop.f32.mrb[0].mxu0
        %v2944 = vadd.f32 0.0, %v2943
        %v2945 = vpop.f32.mrb[0].mxu0
        %v2946 = vadd.f32 0.0, %v2945
        %v2947 = vpop.f32.mrb[0].mxu0
        %v2948 = vadd.f32 0.0, %v2947
        %v2949 = vpop.f32.mrb[0].mxu0
        %v2950 = vadd.f32 0.0, %v2949
        %2951 = vmatprep.mubr.bf16.mxu0 0
        %2952 = vmatmul.mubr.bf16.gmra.mrb[0].mxu0 %v2728
        %v2953 = vpop.f32.mrb[0].mxu0
        %v2954 = vadd.f32 0.0, %v2953
        %v2955 = vpop.f32.mrb[0].mxu0
        %v2956 = vadd.f32 0.0, %v2955
        %v2957 = vpop.f32.mrb[0].mxu0
        %v2958 = vadd.f32 0.0, %v2957
        %v2959 = vpop.f32.mrb[0].mxu0
        %v2960 = vadd.f32 0.0, %v2959
        %2961 = vdwg.mxu0
        %2962 = vmatprep.subr.bf16.mxu0 0
        %2963 = vmatpush1.bf16.msra.mxu0 %v2843
        %2964 = vmatprep.subr.bf16.mxu0 0
        %2965 = vmatpush1.bf16.msra.mxu0 %v2846
        %2966 = vmatprep.subr.bf16.mxu0 0
        %2967 = vmatpush1.bf16.msra.mxu0 %v2849
        %2968 = vmatprep.subr.bf16.mxu0 0
        %2969 = vmatpush1.bf16.msra.mxu0 %v2852
        %2970 = vmatprep.subr.bf16.mxu0 0
        %2971 = vmatpush1.bf16.msra.mxu0 %v2855
        %2972 = vmatprep.subr.bf16.mxu0 0
        %2973 = vmatpush1.bf16.msra.mxu0 %v2858
        %2974 = vmatprep.subr.bf16.mxu0 0
        %2975 = vmatpush1.bf16.msra.mxu0 %v2861
        %2976 = vmatprep.subr.bf16.mxu0 0
        %2977 = vmatpush1.bf16.msra.mxu0 %v2864
        %2978 = vmatprep.subr.bf16.mxu0 0
        %2979 = vmatpush1.bf16.msra.mxu0 0
        %2980 = vmatprep.subr.bf16.mxu0 0
        %2981 = vmatpush1.bf16.msra.mxu0 0
        %2982 = vmatprep.subr.bf16.mxu0 0
        %2983 = vmatpush1.bf16.msra.mxu0 0
        %2984 = vmatprep.subr.bf16.mxu0 0
        %2985 = vmatpush1.bf16.msra.mxu0 0
        %2986 = vmatprep.subr.bf16.mxu0 0
        %2987 = vmatpush1.bf16.msra.mxu0 0
        %2988 = vmatprep.subr.bf16.mxu0 0
        %2989 = vmatpush1.bf16.msra.mxu0 0
        %2990 = vmatprep.subr.bf16.mxu0 0
        %2991 = vmatpush1.bf16.msra.mxu0 0
        %2992 = vmatprep.subr.bf16.mxu0 0
        %2993 = vmatpush1.bf16.msra.mxu0 0
        %2994 = vmatprep.mubr.bf16.mxu0 0
        %2995 = vmatmul.mubr.bf16.gmra.mrb[0].mxu0 %v2725
        %v2996 = vpop.f32.mrb[0].mxu0
        %v2997 = vadd.f32 0.0, %v2996
        %v2998 = vpop.f32.mrb[0].mxu0
        %v2999 = vpop.f32.mrb[0].mxu0
        %v3000 = vadd.f32 0.0, %v2999
        %v3001 = vpop.f32.mrb[0].mxu0
        %3002 = vmatprep.mubr.bf16.mxu0 0
        %3003 = vmatmul.mubr.bf16.gmra.mrb[0].mxu0 %v2726
        %v3004 = vpop.f32.mrb[0].mxu0
        %v3005 = vadd.f32 0.0, %v3004
        %v3006 = vpop.f32.mrb[0].mxu0
        %v3007 = vpop.f32.mrb[0].mxu0
        %v3008 = vadd.f32 0.0, %v3007
        %v3009 = vpop.f32.mrb[0].mxu0
        %3010 = vmatprep.mubr.bf16.mxu0 0
        %3011 = vmatmul.mubr.bf16.gmra.mrb[0].mxu0 %v2727
        %v3012 = vpop.f32.mrb[0].mxu0
        %v3013 = vadd.f32 0.0, %v3012
        %v3014 = vpop.f32.mrb[0].mxu0
        %v3015 = vpop.f32.mrb[0].mxu0
        %v3016 = vadd.f32 0.0, %v3015
        %v3017 = vpop.f32.mrb[0].mxu0
        %3018 = vmatprep.mubr.bf16.mxu0 0
        %3019 = vmatmul.mubr.bf16.gmra.mrb[0].mxu0 %v2728
        %v3020 = vpop.f32.mrb[0].mxu0
        %v3021 = vadd.f32 0.0, %v3020
        %v3022 = vpop.f32.mrb[0].mxu0
        %v3023 = vpop.f32.mrb[0].mxu0
        %v3024 = vadd.f32 0.0, %v3023
        %v3025 = vpop.f32.mrb[0].mxu0
        %3026 = vdwg.mxu0
        %v3027 = vpack.c.bf16 %v2928, %v2924
        %v3028 = vpack.c.bf16 %v2938, %v2934
        %v3029 = vpack.c.bf16 %v2948, %v2944
        %v3030 = vpack.c.bf16 %v2958, %v2954
        %v3031 = vpack.c.bf16 %v2930, %v2926
        %v3032 = vpack.c.bf16 %v2940, %v2936
        %v3033 = vpack.c.bf16 %v2950, %v2946
        %v3034 = vpack.c.bf16 %v2960, %v2956
        %3035 = vmatprep.subr.bf16.mxu0 0
        %3036 = vmatpush1.bf16.xpose.msra.mxu0 %v3031
        %3037 = vmatprep.subr.bf16.mxu0 0
        %3038 = vmatpush1.bf16.xpose.msra.mxu0 %v3032
        %3039 = vmatprep.subr.bf16.mxu0 0
        %3040 = vmatpush1.bf16.xpose.msra.mxu0 %v3033
        %3041 = vmatprep.subr.bf16.mxu0 0
        %3042 = vmatpush1.bf16.xpose.msra.mxu0 %v3034
        %3043 = vmatprep.subr.bf16.mxu0 0
        %3044 = vmatpush1.bf16.xpose.msra.mxu0 0
        %3045 = vmatprep.subr.bf16.mxu0 0
        %3046 = vmatpush1.bf16.xpose.msra.mxu0 0
        %3047 = vmatprep.subr.bf16.mxu0 0
        %3048 = vmatpush1.bf16.xpose.msra.mxu0 0
        %3049 = vmatprep.subr.bf16.mxu0 0
        %3050 = vmatpush1.bf16.xpose.msra.mxu0 0
        %3051 = vmatprep.subr.bf16.mxu0 0
        %3052 = vmatpush1.bf16.xpose.msra.mxu0 0
        %3053 = vmatprep.subr.bf16.mxu0 0
        %3054 = vmatpush1.bf16.xpose.msra.mxu0 0
        %3055 = vmatprep.subr.bf16.mxu0 0
        %3056 = vmatpush1.bf16.xpose.msra.mxu0 0
        %3057 = vmatprep.subr.bf16.mxu0 0
        %3058 = vmatpush1.bf16.xpose.msra.mxu0 0
        %3059 = vmatprep.subr.bf16.mxu0 0
        %3060 = vmatpush1.bf16.xpose.msra.mxu0 0
        %3061 = vmatprep.subr.bf16.mxu0 0
        %3062 = vmatpush1.bf16.xpose.msra.mxu0 0
        %3063 = vmatprep.subr.bf16.mxu0 0
        %3064 = vmatpush1.bf16.xpose.msra.mxu0 0
        %3065 = vmatprep.subr.bf16.mxu0 0
        %3066 = vmatpush1.bf16.xpose.msra.mxu0 0
        %3067 = vmatprep.mubr.bf16.mxu0 0
        %3068 = vmatmul.mubr.bf16.gmra.mrb[0].mxu0 %v3027
        %v3069 = vpop.f32.mrb[0].mxu0
        %v3070 = vadd.f32 0.0, %v3069
        %v3071 = vpop.f32.mrb[0].mxu0
        %v3072 = vpop.f32.mrb[0].mxu0
        %v3073 = vadd.f32 0.0, %v3072
        %v3074 = vpop.f32.mrb[0].mxu0
        %3075 = vmatprep.mubr.bf16.mxu0 0
        %3076 = vmatmul.mubr.bf16.gmra.mrb[0].mxu0 %v3028
        %v3077 = vpop.f32.mrb[0].mxu0
        %v3078 = vadd.f32 0.0, %v3077
        %v3079 = vpop.f32.mrb[0].mxu0
        %v3080 = vpop.f32.mrb[0].mxu0
        %v3081 = vadd.f32 0.0, %v3080
        %v3082 = vpop.f32.mrb[0].mxu0
        %3083 = vmatprep.mubr.bf16.mxu0 0
        %3084 = vmatmul.mubr.bf16.gmra.mrb[0].mxu0 %v3029
        %v3085 = vpop.f32.mrb[0].mxu0
        %v3086 = vadd.f32 0.0, %v3085
        %v3087 = vpop.f32.mrb[0].mxu0
        %v3088 = vpop.f32.mrb[0].mxu0
        %v3089 = vadd.f32 0.0, %v3088
        %v3090 = vpop.f32.mrb[0].mxu0
        %3091 = vmatprep.mubr.bf16.mxu0 0
        %3092 = vmatmul.mubr.bf16.gmra.mrb[0].mxu0 %v3030
        %v3093 = vpop.f32.mrb[0].mxu0
        %v3094 = vadd.f32 0.0, %v3093
        %v3095 = vpop.f32.mrb[0].mxu0
        %v3096 = vpop.f32.mrb[0].mxu0
        %v3097 = vadd.f32 0.0, %v3096
        %v3098 = vpop.f32.mrb[0].mxu0
        %3099 = vdwg.mxu0
        %v3100 = vmul.f32 %v3070, 0.17677669
        %v3101 = vmul.f32 %v3073, 0.17677669
        %v3102 = vmul.f32 %v3078, 0.17677669
        %v3103 = vmul.f32 %v3081, 0.17677669
        %v3104 = vmul.f32 %v3086, 0.17677669
        %v3105 = vmul.f32 %v3089, 0.17677669
        %v3106 = vmul.f32 %v3094, 0.17677669
        %v3107 = vmul.f32 %v3097, 0.17677669
        %vm3108 = vcmask 523264
        %v3109 = vsel %vm3108, %v3100, -inf
        %3110 = vmax.xlane.f32.xlu0 %v3109
        %v3111 = vpop.xlane.xlu0 %3110
        %v3112 = vsel %vm3108, %v3101, -inf
        %3113 = vmax.xlane.f32.xlu0 %v3112
        %v3114 = vpop.xlane.xlu0 %3113
        %v3115 = vsel %vm3108, %v3102, -inf
        %3116 = vmax.xlane.f32.xlu0 %v3115
        %v3117 = vpop.xlane.xlu0 %3116
        %v3118 = vsel %vm3108, %v3103, -inf
        %3119 = vmax.xlane.f32.xlu0 %v3118
        %v3120 = vpop.xlane.xlu0 %3119
        %v3121 = vsel %vm3108, %v3104, -inf
        %3122 = vmax.xlane.f32.xlu0 %v3121
        %v3123 = vpop.xlane.xlu0 %3122
        %v3124 = vsel %vm3108, %v3105, -inf
        %3125 = vmax.xlane.f32.xlu0 %v3124
        %v3126 = vpop.xlane.xlu0 %3125
        %v3127 = vsel %vm3108, %v3106, -inf
        %3128 = vmax.xlane.f32.xlu0 %v3127
        %v3129 = vpop.xlane.xlu0 %3128
        %v3130 = vsel %vm3108, %v3107, -inf
        %3131 = vmax.xlane.f32.xlu0 %v3130
        %v3132 = vpop.xlane.xlu0 %3131
        %v3133 = vsub.f32 %v3100, %v3111
        %v3134 = vsub.f32 %v3101, %v3114
        %v3135 = vsub.f32 %v3102, %v3117
        %v3136 = vsub.f32 %v3103, %v3120
        %v3137 = vsub.f32 %v3104, %v3123
        %v3138 = vsub.f32 %v3105, %v3126
        %v3139 = vsub.f32 %v3106, %v3129
        %v3140 = vsub.f32 %v3107, %v3132
        %v3141 = vmul.f32 %v3133, 1.442695
        %v3142 = vpow.pop %v3141
        %v3143 = vmul.f32 %v3134, 1.442695
        %v3144 = vpow.pop %v3143
        %v3145 = vmul.f32 %v3135, 1.442695
        %v3146 = vpow.pop %v3145
        %v3147 = vmul.f32 %v3136, 1.442695
        %v3148 = vpow.pop %v3147
        %v3149 = vmul.f32 %v3137, 1.442695
        %v3150 = vpow.pop %v3149
        %v3151 = vmul.f32 %v3138, 1.442695
        %v3152 = vpow.pop %v3151
        %v3153 = vmul.f32 %v3139, 1.442695
        %v3154 = vpow.pop %v3153
        %v3155 = vmul.f32 %v3140, 1.442695
        %v3156 = vpow.pop %v3155
        %v3157 = vsel %vm3108, %v3142, 0.0
        %3158 = vadd.xlane.f32.xlu0 %v3157
        %v3159 = vpop.xlane.xlu0 %3158
        %v3160 = vsel %vm3108, %v3144, 0.0
        %3161 = vadd.xlane.f32.xlu0 %v3160
        %v3162 = vpop.xlane.xlu0 %3161
        %v3163 = vsel %vm3108, %v3146, 0.0
        %3164 = vadd.xlane.f32.xlu0 %v3163
        %v3165 = vpop.xlane.xlu0 %3164
        %v3166 = vsel %vm3108, %v3148, 0.0
        %3167 = vadd.xlane.f32.xlu0 %v3166
        %v3168 = vpop.xlane.xlu0 %3167
        %v3169 = vsel %vm3108, %v3150, 0.0
        %3170 = vadd.xlane.f32.xlu0 %v3169
        %v3171 = vpop.xlane.xlu0 %3170
        %v3172 = vsel %vm3108, %v3152, 0.0
        %3173 = vadd.xlane.f32.xlu0 %v3172
        %v3174 = vpop.xlane.xlu0 %3173
        %v3175 = vsel %vm3108, %v3154, 0.0
        %3176 = vadd.xlane.f32.xlu0 %v3175
        %v3177 = vpop.xlane.xlu0 %3176
        %v3178 = vsel %vm3108, %v3156, 0.0
        %3179 = vadd.xlane.f32.xlu0 %v3178
        %v3180 = vpop.xlane.xlu0 %3179
        %v3181 = vrcp.pop %v3159
        %v3182 = vrcp.pop %v3162
        %v3183 = vrcp.pop %v3165
        %v3184 = vrcp.pop %v3168
        %v3185 = vrcp.pop %v3171
        %v3186 = vrcp.pop %v3174
        %v3187 = vrcp.pop %v3177
        %v3188 = vrcp.pop %v3180
        %v3189 = vmul.f32 %v3142, %v3181
        %v3190 = vmul.f32 %v3144, %v3182
        %v3191 = vmul.f32 %v3146, %v3183
        %v3192 = vmul.f32 %v3148, %v3184
        %v3193 = vmul.f32 %v3150, %v3185
        %v3194 = vmul.f32 %v3152, %v3186
        %v3195 = vmul.f32 %v3154, %v3187
        %v3196 = vmul.f32 %v3156, %v3188
        %v3197 = vpack.c.bf16 %v3190, %v3189
        %v3198 = vpack.c.bf16 %v3192, %v3191
        %v3199 = vpack.c.bf16 %v3194, %v3193
        %v3200 = vpack.c.bf16 %v3196, %v3195
        %v3201 = vpack.c.bf16 %v3000, %v2997
        %v3202 = vpack.c.bf16 %v3008, %v3005
        %v3203 = vpack.c.bf16 %v3016, %v3013
        %v3204 = vpack.c.bf16 %v3024, %v3021
        %v3205 = vlaneseq
        %v3206 = vshrl.u32 %v3205, 7
        %v3207 = vsub.s32 5, %v3206
        %v3208 = vrot.slane %v224, %v3207
        %v3210 = vsel %vm3108, %v3197, 0
        %v3213 = vsel %vm3108, %v3198, 0
        %v3216 = vsel %vm3108, %v3199, 0
        %v3219 = vsel %vm3108, %v3200, 0
        %3221 = vmatprep.subr.bf16.mxu0 0
        %3222 = vmatpush1.bf16.msra.mxu0 %v3201
        %3223 = vmatprep.subr.bf16.mxu0 0
        %3224 = vmatpush1.bf16.msra.mxu0 %v3202
        %3225 = vmatprep.subr.bf16.mxu0 0
        %3226 = vmatpush1.bf16.msra.mxu0 %v3203
        %3227 = vmatprep.subr.bf16.mxu0 0
        %3228 = vmatpush1.bf16.msra.mxu0 %v3204
        %3229 = vmatprep.subr.bf16.mxu0 0
        %3230 = vmatpush1.bf16.msra.mxu0 0
        %3231 = vmatprep.subr.bf16.mxu0 0
        %3232 = vmatpush1.bf16.msra.mxu0 0
        %3233 = vmatprep.subr.bf16.mxu0 0
        %3234 = vmatpush1.bf16.msra.mxu0 0
        %3235 = vmatprep.subr.bf16.mxu0 0
        %3236 = vmatpush1.bf16.msra.mxu0 0
        %3237 = vmatprep.subr.bf16.mxu0 0
        %3238 = vmatpush1.bf16.msra.mxu0 0
        %3239 = vmatprep.subr.bf16.mxu0 0
        %3240 = vmatpush1.bf16.msra.mxu0 0
        %3241 = vmatprep.subr.bf16.mxu0 0
        %3242 = vmatpush1.bf16.msra.mxu0 0
        %3243 = vmatprep.subr.bf16.mxu0 0
        %3244 = vmatpush1.bf16.msra.mxu0 0
        %3245 = vmatprep.subr.bf16.mxu0 0
        %3246 = vmatpush1.bf16.msra.mxu0 0
        %3247 = vmatprep.subr.bf16.mxu0 0
        %3248 = vmatpush1.bf16.msra.mxu0 0
        %3249 = vmatprep.subr.bf16.mxu0 0
        %3250 = vmatpush1.bf16.msra.mxu0 0
        %3251 = vmatprep.subr.bf16.mxu0 0
        %3252 = vmatpush1.bf16.msra.mxu0 0
        %3253 = vmatprep.mubr.bf16.mxu0 0
        %3254 = vmatmul.mubr.bf16.gmra.mrb[0].mxu0 %v3210
        %v3255 = vpop.f32.mrb[0].mxu0
        %v3256 = vadd.f32 %v3208, %v3255
        %v3257 = vpop.f32.mrb[0].mxu0
        %v3258 = vpop.f32.mrb[0].mxu0
        %v3259 = vadd.f32 %v3208, %v3258
        %v3260 = vpop.f32.mrb[0].mxu0
        %3261 = vmatprep.mubr.bf16.mxu0 0
        %3262 = vmatmul.mubr.bf16.gmra.mrb[0].mxu0 %v3213
        %v3263 = vpop.f32.mrb[0].mxu0
        %v3264 = vadd.f32 %v3208, %v3263
        %v3265 = vpop.f32.mrb[0].mxu0
        %v3266 = vpop.f32.mrb[0].mxu0
        %v3267 = vadd.f32 %v3208, %v3266
        %v3268 = vpop.f32.mrb[0].mxu0
        %3269 = vmatprep.mubr.bf16.mxu0 0
        %3270 = vmatmul.mubr.bf16.gmra.mrb[0].mxu0 %v3216
        %v3271 = vpop.f32.mrb[0].mxu0
        %v3272 = vadd.f32 %v3208, %v3271
        %v3273 = vpop.f32.mrb[0].mxu0
        %v3274 = vpop.f32.mrb[0].mxu0
        %v3275 = vadd.f32 %v3208, %v3274
        %v3276 = vpop.f32.mrb[0].mxu0
        %3277 = vmatprep.mubr.bf16.mxu0 0
        %3278 = vmatmul.mubr.bf16.gmra.mrb[0].mxu0 %v3219
        %v3279 = vpop.f32.mrb[0].mxu0
        %v3280 = vadd.f32 %v3208, %v3279
        %v3281 = vpop.f32.mrb[0].mxu0
        %v3282 = vpop.f32.mrb[0].mxu0
        %v3283 = vadd.f32 %v3208, %v3282
        %v3284 = vpop.f32.mrb[0].mxu0
        %3285 = vdwg.mxu0
        %v3286 = vadd.f32 %v2595, %v3256
        %v3287 = vadd.f32 %v2598, %v3259
        %v3288 = vadd.f32 %v2603, %v3264
        %v3289 = vadd.f32 %v2606, %v3267
        %v3290 = vadd.f32 %v2611, %v3272
        %v3291 = vadd.f32 %v2614, %v3275
        %v3292 = vadd.f32 %v2619, %v3280
        %v3293 = vadd.f32 %v2622, %v3283
        %3294 = vadd.xlane.f32.xlu0 %v3286
        %v3295 = vpop.xlane.xlu0 %3294
        %3296 = vadd.xlane.f32.xlu0 %v3287
        %v3297 = vpop.xlane.xlu0 %3296
        %3298 = vadd.xlane.f32.xlu0 %v3288
        %v3299 = vpop.xlane.xlu0 %3298
        %3300 = vadd.xlane.f32.xlu0 %v3289
        %v3301 = vpop.xlane.xlu0 %3300
        %3302 = vadd.xlane.f32.xlu0 %v3290
        %v3303 = vpop.xlane.xlu0 %3302
        %3304 = vadd.xlane.f32.xlu0 %v3291
        %v3305 = vpop.xlane.xlu0 %3304
        %3306 = vadd.xlane.f32.xlu0 %v3292
        %v3307 = vpop.xlane.xlu0 %3306
        %3308 = vadd.xlane.f32.xlu0 %v3293
        %v3309 = vpop.xlane.xlu0 %3308
        %v3310 = vmul.f32 %v3295, 0.03125
        %v3311 = vmul.f32 %v3297, 0.03125
        %v3312 = vmul.f32 %v3299, 0.03125
        %v3313 = vmul.f32 %v3301, 0.03125
        %v3314 = vmul.f32 %v3303, 0.03125
        %v3315 = vmul.f32 %v3305, 0.03125
        %v3316 = vmul.f32 %v3307, 0.03125
        %v3317 = vmul.f32 %v3309, 0.03125
        %v3318 = vsub.f32 %v3286, %v3310
        %v3319 = vsub.f32 %v3287, %v3311
        %v3320 = vsub.f32 %v3288, %v3312
        %v3321 = vsub.f32 %v3289, %v3313
        %v3322 = vsub.f32 %v3290, %v3314
        %v3323 = vsub.f32 %v3291, %v3315
        %v3324 = vsub.f32 %v3292, %v3316
        %v3325 = vsub.f32 %v3293, %v3317
        %v3326 = vmul.f32 %v3318, %v2660
        %v3327 = vmul.f32 %v3319, %v2660
        %v3328 = vmul.f32 %v3320, %v2660
        %v3329 = vmul.f32 %v3321, %v2660
        %v3330 = vmul.f32 %v3322, %v2660
        %v3331 = vmul.f32 %v3323, %v2660
        %v3332 = vmul.f32 %v3324, %v2660
        %v3333 = vmul.f32 %v3325, %v2660
        %v3334 = vmul.f32 %v3326, %v3326
        %v3335 = vmul.f32 %v3327, %v3327
        %v3336 = vmul.f32 %v3328, %v3328
        %v3337 = vmul.f32 %v3329, %v3329
        %v3338 = vmul.f32 %v3330, %v3330
        %v3339 = vmul.f32 %v3331, %v3331
        %v3340 = vmul.f32 %v3332, %v3332
        %v3341 = vmul.f32 %v3333, %v3333
        %3342 = vadd.xlane.f32.xlu0 %v3334
        %v3343 = vpop.xlane.xlu0 %3342
        %3344 = vadd.xlane.f32.xlu0 %v3335
        %v3345 = vpop.xlane.xlu0 %3344
        %3346 = vadd.xlane.f32.xlu0 %v3336
        %v3347 = vpop.xlane.xlu0 %3346
        %3348 = vadd.xlane.f32.xlu0 %v3337
        %v3349 = vpop.xlane.xlu0 %3348
        %3350 = vadd.xlane.f32.xlu0 %v3338
        %v3351 = vpop.xlane.xlu0 %3350
        %3352 = vadd.xlane.f32.xlu0 %v3339
        %v3353 = vpop.xlane.xlu0 %3352
        %3354 = vadd.xlane.f32.xlu0 %v3340
        %v3355 = vpop.xlane.xlu0 %3354
        %3356 = vadd.xlane.f32.xlu0 %v3341
        %v3357 = vpop.xlane.xlu0 %3356
        %v3358 = vmul.f32 %v3343, 0.03125
        %v3359 = vmul.f32 %v3345, 0.03125
        %v3360 = vmul.f32 %v3347, 0.03125
        %v3361 = vmul.f32 %v3349, 0.03125
        %v3362 = vmul.f32 %v3351, 0.03125
        %v3363 = vmul.f32 %v3353, 0.03125
        %v3364 = vmul.f32 %v3355, 0.03125
        %v3365 = vmul.f32 %v3357, 0.03125
        %v3366 = vadd.f32 %v3358, 1e-05
        %v3367 = vadd.f32 %v3359, 1e-05
        %v3368 = vadd.f32 %v3360, 1e-05
        %v3369 = vadd.f32 %v3361, 1e-05
        %v3370 = vadd.f32 %v3362, 1e-05
        %v3371 = vadd.f32 %v3363, 1e-05
        %v3372 = vadd.f32 %v3364, 1e-05
        %v3373 = vadd.f32 %v3365, 1e-05
        %v3374 = vrsqrt.pop %v3366
        %v3375 = vrsqrt.pop %v3367
        %v3376 = vrsqrt.pop %v3368
        %v3377 = vrsqrt.pop %v3369
        %v3378 = vrsqrt.pop %v3370
        %v3379 = vrsqrt.pop %v3371
        %v3380 = vrsqrt.pop %v3372
        %v3381 = vrsqrt.pop %v3373
        %v3382 = vmul.f32 %v3326, %v3374
        %v3383 = vmul.f32 %v3327, %v3375
        %v3384 = vmul.f32 %v3328, %v3376
        %v3385 = vmul.f32 %v3329, %v3377
        %v3386 = vmul.f32 %v3330, %v3378
        %v3387 = vmul.f32 %v3331, %v3379
        %v3388 = vmul.f32 %v3332, %v3380
        %v3389 = vmul.f32 %v3333, %v3381
        %v3390 = vpack.c.bf16 %v3383, %v3382
        %v3391 = vpack.c.bf16 %v3385, %v3384
        %v3392 = vpack.c.bf16 %v3387, %v3386
        %v3393 = vpack.c.bf16 %v3389, %v3388
        %v3394 = vld [vmem:[%s2 + $0xc0] sm:$0xf]
        %v3395 = vld [vmem:[%s2 + $0xc4] sm:$0xf]
        %v3396 = vld [vmem:[%s2 + $0xc8] sm:$0xf]
        %v3397 = vld [vmem:[%s2 + $0xcc] sm:$0xf]
        %v3398 = vld [vmem:[%s2 + $0xd0] sm:$0xf]
        %v3399 = vld [vmem:[%s2 + $0xd4] sm:$0xf]
        %v3400 = vld [vmem:[%s2 + $0xd8] sm:$0xf]
        %v3401 = vld [vmem:[%s2 + $0xdc] sm:$0xf]
        %v3402 = vld [vmem:[%s2 + $0xe0] sm:$0xf]
        %v3403 = vld [vmem:[%s2 + $0xe4] sm:$0xf]
        %v3404 = vld [vmem:[%s2 + $0xe8] sm:$0xf]
        %v3405 = vld [vmem:[%s2 + $0xec] sm:$0xf]
        %v3406 = vld [vmem:[%s2 + $0xf0] sm:$0xf]
        %v3407 = vld [vmem:[%s2 + $0xf4] sm:$0xf]
        %v3408 = vld [vmem:[%s2 + $0xf8] sm:$0xf]
        %v3409 = vld [vmem:[%s2 + $0xfc] sm:$0xf]
        %v3410 = vlaneseq
        %v3411 = vshrl.u32 %v3410, 7
        %v3412 = vsub.s32 6, %v3411
        %v3413 = vrot.slane %v224, %v3412
        %v3430 = vunpack.c.l.b16 %v3394
        %v3431 = vunpack.c.l.b16 %v3395
        %v3432 = vunpack.c.l.b16 %v3396
        %v3433 = vunpack.c.l.b16 %v3397
        %v3434 = vunpack.c.l.b16 %v3398
        %v3435 = vunpack.c.l.b16 %v3399
        %v3436 = vunpack.c.l.b16 %v3400
        %v3437 = vunpack.c.l.b16 %v3401
        %v3438 = vunpack.c.l.b16 %v3402
        %v3439 = vunpack.c.l.b16 %v3403
        %v3440 = vunpack.c.l.b16 %v3404
        %v3441 = vunpack.c.l.b16 %v3405
        %v3442 = vunpack.c.l.b16 %v3406
        %v3443 = vunpack.c.l.b16 %v3407
        %v3444 = vunpack.c.l.b16 %v3408
        %v3445 = vunpack.c.l.b16 %v3409
        %v3446 = vpack.c.b16 %v3431, %v3430
        %v3447 = vpack.c.b16 %v3433, %v3432
        %v3448 = vpack.c.b16 %v3435, %v3434
        %v3449 = vpack.c.b16 %v3437, %v3436
        %v3450 = vpack.c.b16 %v3439, %v3438
        %v3451 = vpack.c.b16 %v3441, %v3440
        %v3452 = vpack.c.b16 %v3443, %v3442
        %v3453 = vpack.c.b16 %v3445, %v3444
        %3462 = vmatprep.subr.bf16.mxu0 0
        %3463 = vmatpush1.bf16.msra.mxu0 %v3446
        %3464 = vmatprep.subr.bf16.mxu0 0
        %3465 = vmatpush1.bf16.msra.mxu0 %v3447
        %3466 = vmatprep.subr.bf16.mxu0 0
        %3467 = vmatpush1.bf16.msra.mxu0 %v3448
        %3468 = vmatprep.subr.bf16.mxu0 0
        %3469 = vmatpush1.bf16.msra.mxu0 %v3449
        %3470 = vmatprep.subr.bf16.mxu0 0
        %3471 = vmatpush1.bf16.msra.mxu0 %v3450
        %3472 = vmatprep.subr.bf16.mxu0 0
        %3473 = vmatpush1.bf16.msra.mxu0 %v3451
        %3474 = vmatprep.subr.bf16.mxu0 0
        %3475 = vmatpush1.bf16.msra.mxu0 %v3452
        %3476 = vmatprep.subr.bf16.mxu0 0
        %3477 = vmatpush1.bf16.msra.mxu0 %v3453
        %3478 = vmatprep.subr.bf16.mxu0 0
        %3479 = vmatpush1.bf16.msra.mxu0 0
        %3480 = vmatprep.subr.bf16.mxu0 0
        %3481 = vmatpush1.bf16.msra.mxu0 0
        %3482 = vmatprep.subr.bf16.mxu0 0
        %3483 = vmatpush1.bf16.msra.mxu0 0
        %3484 = vmatprep.subr.bf16.mxu0 0
        %3485 = vmatpush1.bf16.msra.mxu0 0
        %3486 = vmatprep.subr.bf16.mxu0 0
        %3487 = vmatpush1.bf16.msra.mxu0 0
        %3488 = vmatprep.subr.bf16.mxu0 0
        %3489 = vmatpush1.bf16.msra.mxu0 0
        %3490 = vmatprep.subr.bf16.mxu0 0
        %3491 = vmatpush1.bf16.msra.mxu0 0
        %3492 = vmatprep.subr.bf16.mxu0 0
        %3493 = vmatpush1.bf16.msra.mxu0 0
        %3494 = vmatprep.mubr.bf16.mxu0 0
        %3495 = vmatmul.mubr.bf16.gmra.mrb[0].mxu0 %v3390
        %v3496 = vpop.f32.mrb[0].mxu0
        %v3497 = vadd.f32 %v3413, %v3496
        %v3498 = vpop.f32.mrb[0].mxu0
        %v3499 = vpop.f32.mrb[0].mxu0
        %v3500 = vadd.f32 %v3413, %v3499
        %v3501 = vpop.f32.mrb[0].mxu0
        %3502 = vmatprep.mubr.bf16.mxu0 0
        %3503 = vmatmul.mubr.bf16.gmra.mrb[0].mxu0 %v3391
        %v3504 = vpop.f32.mrb[0].mxu0
        %v3505 = vadd.f32 %v3413, %v3504
        %v3506 = vpop.f32.mrb[0].mxu0
        %v3507 = vpop.f32.mrb[0].mxu0
        %v3508 = vadd.f32 %v3413, %v3507
        %v3509 = vpop.f32.mrb[0].mxu0
        %3510 = vmatprep.mubr.bf16.mxu0 0
        %3511 = vmatmul.mubr.bf16.gmra.mrb[0].mxu0 %v3392
        %v3512 = vpop.f32.mrb[0].mxu0
        %v3513 = vadd.f32 %v3413, %v3512
        %v3514 = vpop.f32.mrb[0].mxu0
        %v3515 = vpop.f32.mrb[0].mxu0
        %v3516 = vadd.f32 %v3413, %v3515
        %v3517 = vpop.f32.mrb[0].mxu0
        %3518 = vmatprep.mubr.bf16.mxu0 0
        %3519 = vmatmul.mubr.bf16.gmra.mrb[0].mxu0 %v3393
        %v3520 = vpop.f32.mrb[0].mxu0
        %v3521 = vadd.f32 %v3413, %v3520
        %v3522 = vpop.f32.mrb[0].mxu0
        %v3523 = vpop.f32.mrb[0].mxu0
        %v3524 = vadd.f32 %v3413, %v3523
        %v3525 = vpop.f32.mrb[0].mxu0
        %3526 = vdwg.mxu0
        %v3527 = vmul.f32 %v3497, %v3497
        %v3528 = vmul.f32 %v3500, %v3500
        %v3529 = vmul.f32 %v3505, %v3505
        %v3530 = vmul.f32 %v3508, %v3508
        %v3531 = vmul.f32 %v3513, %v3513
        %v3532 = vmul.f32 %v3516, %v3516
        %v3533 = vmul.f32 %v3521, %v3521
        %v3534 = vmul.f32 %v3524, %v3524
        %v3535 = vmul.f32 %v3497, %v3527
        %v3536 = vmul.f32 %v3500, %v3528
        %v3537 = vmul.f32 %v3505, %v3529
        %v3538 = vmul.f32 %v3508, %v3530
        %v3539 = vmul.f32 %v3513, %v3531
        %v3540 = vmul.f32 %v3516, %v3532
        %v3541 = vmul.f32 %v3521, %v3533
        %v3542 = vmul.f32 %v3524, %v3534
        %v3543 = vmul.f32 %v3535, 0.044715
        %v3544 = vmul.f32 %v3536, 0.044715
        %v3545 = vmul.f32 %v3537, 0.044715
        %v3546 = vmul.f32 %v3538, 0.044715
        %v3547 = vmul.f32 %v3539, 0.044715
        %v3548 = vmul.f32 %v3540, 0.044715
        %v3549 = vmul.f32 %v3541, 0.044715
        %v3550 = vmul.f32 %v3542, 0.044715
        %v3551 = vadd.f32 %v3497, %v3543
        %v3552 = vadd.f32 %v3500, %v3544
        %v3553 = vadd.f32 %v3505, %v3545
        %v3554 = vadd.f32 %v3508, %v3546
        %v3555 = vadd.f32 %v3513, %v3547
        %v3556 = vadd.f32 %v3516, %v3548
        %v3557 = vadd.f32 %v3521, %v3549
        %v3558 = vadd.f32 %v3524, %v3550
        %v3559 = vmul.f32 %v3551, 0.7978846
        %v3560 = vmul.f32 %v3552, 0.7978846
        %v3561 = vmul.f32 %v3553, 0.7978846
        %v3562 = vmul.f32 %v3554, 0.7978846
        %v3563 = vmul.f32 %v3555, 0.7978846
        %v3564 = vmul.f32 %v3556, 0.7978846
        %v3565 = vmul.f32 %v3557, 0.7978846
        %v3566 = vmul.f32 %v3558, 0.7978846
        %v3567 = vtanh.pop %v3559
        %v3568 = vtanh.pop %v3560
        %v3569 = vtanh.pop %v3561
        %v3570 = vtanh.pop %v3562
        %v3571 = vtanh.pop %v3563
        %v3572 = vtanh.pop %v3564
        %v3573 = vtanh.pop %v3565
        %v3574 = vtanh.pop %v3566
        %v3575 = vadd.f32 %v3567, 1.0
        %v3576 = vadd.f32 %v3568, 1.0
        %v3577 = vadd.f32 %v3569, 1.0
        %v3578 = vadd.f32 %v3570, 1.0
        %v3579 = vadd.f32 %v3571, 1.0
        %v3580 = vadd.f32 %v3572, 1.0
        %v3581 = vadd.f32 %v3573, 1.0
        %v3582 = vadd.f32 %v3574, 1.0
        %v3583 = vmul.f32 %v3575, 0.5
        %v3584 = vmul.f32 %v3576, 0.5
        %v3585 = vmul.f32 %v3577, 0.5
        %v3586 = vmul.f32 %v3578, 0.5
        %v3587 = vmul.f32 %v3579, 0.5
        %v3588 = vmul.f32 %v3580, 0.5
        %v3589 = vmul.f32 %v3581, 0.5
        %v3590 = vmul.f32 %v3582, 0.5
        %v3591 = vmul.f32 %v3497, %v3583
        %v3592 = vmul.f32 %v3500, %v3584
        %v3593 = vmul.f32 %v3505, %v3585
        %v3594 = vmul.f32 %v3508, %v3586
        %v3595 = vmul.f32 %v3513, %v3587
        %v3596 = vmul.f32 %v3516, %v3588
        %v3597 = vmul.f32 %v3521, %v3589
        %v3598 = vmul.f32 %v3524, %v3590
        %v3599 = vpack.c.bf16 %v3592, %v3591
        %v3600 = vpack.c.bf16 %v3594, %v3593
        %v3601 = vpack.c.bf16 %v3596, %v3595
        %v3602 = vpack.c.bf16 %v3598, %v3597
        %v3603 = vld [vmem:[%s2 + $0x100] sm:$0xf]
        %v3604 = vld [vmem:[%s2 + $0x104] sm:$0xf]
        %v3605 = vld [vmem:[%s2 + $0x108] sm:$0xf]
        %v3606 = vld [vmem:[%s2 + $0x10c] sm:$0xf]
        %v3607 = vld [vmem:[%s2 + $0x110] sm:$0xf]
        %v3608 = vld [vmem:[%s2 + $0x114] sm:$0xf]
        %v3609 = vld [vmem:[%s2 + $0x118] sm:$0xf]
        %v3610 = vld [vmem:[%s2 + $0x11c] sm:$0xf]
        %v3611 = vld [vmem:[%s2 + $0x120] sm:$0xf]
        %v3612 = vld [vmem:[%s2 + $0x124] sm:$0xf]
        %v3613 = vld [vmem:[%s2 + $0x128] sm:$0xf]
        %v3614 = vld [vmem:[%s2 + $0x12c] sm:$0xf]
        %v3615 = vld [vmem:[%s2 + $0x130] sm:$0xf]
        %v3616 = vld [vmem:[%s2 + $0x134] sm:$0xf]
        %v3617 = vld [vmem:[%s2 + $0x138] sm:$0xf]
        %v3618 = vld [vmem:[%s2 + $0x13c] sm:$0xf]
        %v3635 = vunpack.c.l.b16 %v3603
        %v3636 = vunpack.c.l.b16 %v3604
        %v3637 = vunpack.c.l.b16 %v3605
        %v3638 = vunpack.c.l.b16 %v3606
        %v3639 = vunpack.c.l.b16 %v3607
        %v3640 = vunpack.c.l.b16 %v3608
        %v3641 = vunpack.c.l.b16 %v3609
        %v3642 = vunpack.c.l.b16 %v3610
        %v3643 = vunpack.c.l.b16 %v3611
        %v3644 = vunpack.c.l.b16 %v3612
        %v3645 = vunpack.c.l.b16 %v3613
        %v3646 = vunpack.c.l.b16 %v3614
        %v3647 = vunpack.c.l.b16 %v3615
        %v3648 = vunpack.c.l.b16 %v3616
        %v3649 = vunpack.c.l.b16 %v3617
        %v3650 = vunpack.c.l.b16 %v3618
        %v3651 = vpack.c.b16 %v3636, %v3635
        %v3652 = vpack.c.b16 %v3638, %v3637
        %v3653 = vpack.c.b16 %v3640, %v3639
        %v3654 = vpack.c.b16 %v3642, %v3641
        %v3655 = vpack.c.b16 %v3644, %v3643
        %v3656 = vpack.c.b16 %v3646, %v3645
        %v3657 = vpack.c.b16 %v3648, %v3647
        %v3658 = vpack.c.b16 %v3650, %v3649
        %3667 = vmatprep.subr.bf16.mxu0 0
        %3668 = vmatpush1.bf16.msra.mxu0 %v3651
        %3669 = vmatprep.subr.bf16.mxu0 0
        %3670 = vmatpush1.bf16.msra.mxu0 %v3652
        %3671 = vmatprep.subr.bf16.mxu0 0
        %3672 = vmatpush1.bf16.msra.mxu0 %v3653
        %3673 = vmatprep.subr.bf16.mxu0 0
        %3674 = vmatpush1.bf16.msra.mxu0 %v3654
        %3675 = vmatprep.subr.bf16.mxu0 0
        %3676 = vmatpush1.bf16.msra.mxu0 %v3655
        %3677 = vmatprep.subr.bf16.mxu0 0
        %3678 = vmatpush1.bf16.msra.mxu0 %v3656
        %3679 = vmatprep.subr.bf16.mxu0 0
        %3680 = vmatpush1.bf16.msra.mxu0 %v3657
        %3681 = vmatprep.subr.bf16.mxu0 0
        %3682 = vmatpush1.bf16.msra.mxu0 %v3658
        %3683 = vmatprep.subr.bf16.mxu0 0
        %3684 = vmatpush1.bf16.msra.mxu0 0
        %3685 = vmatprep.subr.bf16.mxu0 0
        %3686 = vmatpush1.bf16.msra.mxu0 0
        %3687 = vmatprep.subr.bf16.mxu0 0
        %3688 = vmatpush1.bf16.msra.mxu0 0
        %3689 = vmatprep.subr.bf16.mxu0 0
        %3690 = vmatpush1.bf16.msra.mxu0 0
        %3691 = vmatprep.subr.bf16.mxu0 0
        %3692 = vmatpush1.bf16.msra.mxu0 0
        %3693 = vmatprep.subr.bf16.mxu0 0
        %3694 = vmatpush1.bf16.msra.mxu0 0
        %3695 = vmatprep.subr.bf16.mxu0 0
        %3696 = vmatpush1.bf16.msra.mxu0 0
        %3697 = vmatprep.subr.bf16.mxu0 0
        %3698 = vmatpush1.bf16.msra.mxu0 0
        %3699 = vmatprep.mubr.bf16.mxu0 0
        %3700 = vmatmul.mubr.bf16.gmra.mrb[0].mxu0 %v3599
        %v3701 = vpop.f32.mrb[0].mxu0
        %v3702 = vadd.f32 0.0, %v3701
        %v3703 = vpop.f32.mrb[0].mxu0
        %v3704 = vpop.f32.mrb[0].mxu0
        %v3705 = vadd.f32 0.0, %v3704
        %v3706 = vpop.f32.mrb[0].mxu0
        %3707 = vmatprep.mubr.bf16.mxu0 0
        %3708 = vmatmul.mubr.bf16.gmra.mrb[0].mxu0 %v3600
        %v3709 = vpop.f32.mrb[0].mxu0
        %v3710 = vadd.f32 0.0, %v3709
        %v3711 = vpop.f32.mrb[0].mxu0
        %v3712 = vpop.f32.mrb[0].mxu0
        %v3713 = vadd.f32 0.0, %v3712
        %v3714 = vpop.f32.mrb[0].mxu0
        %3715 = vmatprep.mubr.bf16.mxu0 0
        %3716 = vmatmul.mubr.bf16.gmra.mrb[0].mxu0 %v3601
        %v3717 = vpop.f32.mrb[0].mxu0
        %v3718 = vadd.f32 0.0, %v3717
        %v3719 = vpop.f32.mrb[0].mxu0
        %v3720 = vpop.f32.mrb[0].mxu0
        %v3721 = vadd.f32 0.0, %v3720
        %v3722 = vpop.f32.mrb[0].mxu0
        %3723 = vmatprep.mubr.bf16.mxu0 0
        %3724 = vmatmul.mubr.bf16.gmra.mrb[0].mxu0 %v3602
        %v3725 = vpop.f32.mrb[0].mxu0
        %v3726 = vadd.f32 0.0, %v3725
        %v3727 = vpop.f32.mrb[0].mxu0
        %v3728 = vpop.f32.mrb[0].mxu0
        %v3729 = vadd.f32 0.0, %v3728
        %v3730 = vpop.f32.mrb[0].mxu0
        %3731 = vdwg.mxu0
        %v3732 = vadd.f32 %v3286, %v3702
        %v3733 = vadd.f32 %v3287, %v3705
        %v3734 = vadd.f32 %v3288, %v3710
        %v3735 = vadd.f32 %v3289, %v3713
        %v3736 = vadd.f32 %v3290, %v3718
        %v3737 = vadd.f32 %v3291, %v3721
        %v3738 = vadd.f32 %v3292, %v3726
        %v3739 = vadd.f32 %v3293, %v3729
        %v3740 = vlaneseq
        %v3741 = vshrl.u32 %v3740, 7
        %v3742 = vsub.s32 7, %v3741
        %v3743 = vrot.slane %v224, %v3742
        %v3744 = vadd.f32 %v3732, %v3743
        %v3745 = vadd.f32 %v3733, %v3743
        %v3746 = vadd.f32 %v3734, %v3743
        %v3747 = vadd.f32 %v3735, %v3743
        %v3748 = vadd.f32 %v3736, %v3743
        %v3749 = vadd.f32 %v3737, %v3743
        %v3750 = vadd.f32 %v3738, %v3743
        %v3751 = vadd.f32 %v3739, %v3743
        %v3752 = vadd.f32 %v3744, %v3745
        %v3753 = vadd.f32 %v3752, %v3746
        %v3754 = vadd.f32 %v3753, %v3747
        %v3755 = vadd.f32 %v3754, %v3748
        %v3756 = vadd.f32 %v3755, %v3749
        %v3757 = vadd.f32 %v3756, %v3750
        %v3758 = vadd.f32 %v3757, %v3751
        %v3759 = vrot.slane %v3758, 4
        %v3760 = vadd.f32 %v3758, %v3759
        %v3761 = vrot.slane %v3760, 2
        %v3762 = vadd.f32 %v3760, %v3761
        %v3763 = vrot.slane %v3762, 1
        %v3764 = vadd.f32 %v3762, %v3763
        %v3765 = vrcp.pop 64.0
        %v3766 = vmul.f32 %v3764, %v3765
        %v3767 = vpack.c.bf16 %v3766, %v3766
        %v3768 = vld [vmem:[%s2 + $0x140] sm:$0xf]
        %v3769 = vld [vmem:[%s2 + $0x144] sm:$0xf]
        %v3770 = vld [vmem:[%s2 + $0x148] sm:$0xf]
        %v3771 = vld [vmem:[%s2 + $0x14c] sm:$0xf]
        %v3772 = vld [vmem:[%s2 + $0x150] sm:$0xf]
        %v3773 = vld [vmem:[%s2 + $0x154] sm:$0xf]
        %v3774 = vld [vmem:[%s2 + $0x158] sm:$0xf]
        %v3775 = vld [vmem:[%s2 + $0x15c] sm:$0xf]
        %v3776 = vld [vmem:[%s2 + $0x160] sm:$0xf]
        %v3777 = vld [vmem:[%s2 + $0x164] sm:$0xf]
        %v3778 = vld [vmem:[%s2 + $0x168] sm:$0xf]
        %v3779 = vld [vmem:[%s2 + $0x16c] sm:$0xf]
        %v3780 = vld [vmem:[%s2 + $0x170] sm:$0xf]
        %v3781 = vld [vmem:[%s2 + $0x174] sm:$0xf]
        %v3782 = vld [vmem:[%s2 + $0x178] sm:$0xf]
        %v3783 = vld [vmem:[%s2 + $0x17c] sm:$0xf]
        %v3800 = vunpack.c.l.b16 %v3768
        %v3801 = vunpack.c.l.b16 %v3769
        %v3802 = vunpack.c.l.b16 %v3770
        %v3803 = vunpack.c.l.b16 %v3771
        %v3804 = vunpack.c.l.b16 %v3772
        %v3805 = vunpack.c.l.b16 %v3773
        %v3806 = vunpack.c.l.b16 %v3774
        %v3807 = vunpack.c.l.b16 %v3775
        %v3808 = vunpack.c.l.b16 %v3776
        %v3809 = vunpack.c.l.b16 %v3777
        %v3810 = vunpack.c.l.b16 %v3778
        %v3811 = vunpack.c.l.b16 %v3779
        %v3812 = vunpack.c.l.b16 %v3780
        %v3813 = vunpack.c.l.b16 %v3781
        %v3814 = vunpack.c.l.b16 %v3782
        %v3815 = vunpack.c.l.b16 %v3783
        %v3816 = vpack.c.b16 %v3801, %v3800
        %v3817 = vpack.c.b16 %v3803, %v3802
        %v3818 = vpack.c.b16 %v3805, %v3804
        %v3819 = vpack.c.b16 %v3807, %v3806
        %v3820 = vpack.c.b16 %v3809, %v3808
        %v3821 = vpack.c.b16 %v3811, %v3810
        %v3822 = vpack.c.b16 %v3813, %v3812
        %v3823 = vpack.c.b16 %v3815, %v3814
        %3832 = vmatprep.subr.bf16.mxu0 0
        %3833 = vmatpush1.bf16.msra.mxu0 %v3816
        %3834 = vmatprep.subr.bf16.mxu0 0
        %3835 = vmatpush1.bf16.msra.mxu0 %v3817
        %3836 = vmatprep.subr.bf16.mxu0 0
        %3837 = vmatpush1.bf16.msra.mxu0 %v3818
        %3838 = vmatprep.subr.bf16.mxu0 0
        %3839 = vmatpush1.bf16.msra.mxu0 %v3819
        %3840 = vmatprep.subr.bf16.mxu0 0
        %3841 = vmatpush1.bf16.msra.mxu0 %v3820
        %3842 = vmatprep.subr.bf16.mxu0 0
        %3843 = vmatpush1.bf16.msra.mxu0 %v3821
        %3844 = vmatprep.subr.bf16.mxu0 0
        %3845 = vmatpush1.bf16.msra.mxu0 %v3822
        %3846 = vmatprep.subr.bf16.mxu0 0
        %3847 = vmatpush1.bf16.msra.mxu0 %v3823
        %3848 = vmatprep.subr.bf16.mxu0 0
        %3849 = vmatpush1.bf16.msra.mxu0 0
        %3850 = vmatprep.subr.bf16.mxu0 0
        %3851 = vmatpush1.bf16.msra.mxu0 0
        %3852 = vmatprep.subr.bf16.mxu0 0
        %3853 = vmatpush1.bf16.msra.mxu0 0
        %3854 = vmatprep.subr.bf16.mxu0 0
        %3855 = vmatpush1.bf16.msra.mxu0 0
        %3856 = vmatprep.subr.bf16.mxu0 0
        %3857 = vmatpush1.bf16.msra.mxu0 0
        %3858 = vmatprep.subr.bf16.mxu0 0
        %3859 = vmatpush1.bf16.msra.mxu0 0
        %3860 = vmatprep.subr.bf16.mxu0 0
        %3861 = vmatpush1.bf16.msra.mxu0 0
        %3862 = vmatprep.subr.bf16.mxu0 0
        %3863 = vmatpush1.bf16.msra.mxu0 0
        %3864 = vmatprep.mubr.bf16.mxu0 0
        %3865 = vmatmul.mubr.bf16.gmra.mrb[0].mxu0 %v3767
        %v3866 = vpop.f32.mrb[0].mxu0
        %v3867 = vadd.f32 %v225, %v3866
        %v3868 = vpop.f32.mrb[0].mxu0
        %v3869 = vpop.f32.mrb[0].mxu0
        %v3870 = vpop.f32.mrb[0].mxu0
        %3871 = vdwg.mxu0
        %3872 = vst [vmem:[%s216] sm:$0x1] %v3867
        %s3873 = sand.u32 %s137, 1
        %s3874 = scalar_lea.sflag [#allocation3], %s3873
        %s3875 = sand.u32 %s137, 1
        %s3876 = scalar_lea.vmem [#allocation2], %s3875
        // Predicated region
        $region41: #{coatnet_forward.1} parent=39 // pred_check
          %p3877 = pneg %p147
        $region42: #{coatnet_forward.1} parent=39 // pred_check_branch
          %3879 = sbr.rel (%p3877) target = $region44
        $region43: #{coatnet_forward.1} parent=39 // pred_region
          %s3881 = ssub.s32 16, 16
          %3882 = vsyncadd %s3874, %s3881
          %s3883 = smul.addr %s19, 16
          %s3884 = scalar_lea.hbm %s5, %s3883
          %s3886 = sshll.u32 %s3876, 4
          %s3887 = int_to_ptr.vmem [resolvable:$true] %s3886
          %3889 = dma.vmem_to_hbm [thread:$0]  %s3887, 16, %s3884, %s3874
        $region44: #{coatnet_forward.1} parent=39 // pred_fallthru
          _
      $region40: #{coatnet_forward.1} parent=5 // pred_fallthru
        _
      %p3890 = scmp.le.s32.totalorder 2, %s14
      // Predicated region
      $region45: #{coatnet_forward.1} parent=5 // pred_check
        %p3891 = pneg %p3890
      $region46: #{coatnet_forward.1} parent=5 // pred_check_branch
        %3893 = sbr.rel (%p3891) target = $region48
      $region47: #{coatnet_forward.1} parent=5 // pred_region
        %s3894 = ssub.s32 %s14, 2
        // Predicated region
        $region49: #{coatnet_forward.1} parent=47 // pred_check
          %p3895 = pneg %p153
        $region50: #{coatnet_forward.1} parent=47 // pred_check_branch
          %3897 = sbr.rel (%p3895) target = $region52
        $region51: #{coatnet_forward.1} parent=47 // pred_region
          %s3898 = sand.u32 %s138, 1
          %s3899 = scalar_lea.sflag [#allocation3], %s3898
          %s3900 = sand.u32 %s138, 1
          %s3901 = scalar_lea.vmem [#allocation2], %s3900
          %3902 = dma.done %s3899, 16
        $region52: #{coatnet_forward.1} parent=47 // pred_fallthru
          _
      $region48: #{coatnet_forward.1} parent=5 // pred_fallthru
        _
    $region6: #{coatnet_forward.1} parent=1 // loop_footer
      %s18 = sadd.s32 1, %s14
    $region7: #{coatnet_forward.1} parent=1 // loop_footer_branch
      %13 = sbr.rel target = $region3
    $region8: #{coatnet_forward.1} parent=1 // loop_exit
      _
    %3903 = vsyncpa [#allocation3], 1
    %s3904 = scalar_lea.sflag [#allocation3], 1
    %3905 = vsyncpa %s3904, 1

</llo_original>
